<compile_context>
chip_gen: v5e
topology: v5e:2x2
jax: 0.10.0
libtpu: 0.0.40
codegen_flags: <defaults>
</compile_context>

<pallas_src>
import functools

import jax
import jax.numpy as jnp
from jax.experimental import pallas as pl
from jax.experimental.pallas import tpu as pltpu


# ---------------------------------------------------------------------------
# Kernel A: fused QKV projection + QK LayerNorm + RoPE + head split
# ---------------------------------------------------------------------------
def _esm3_qkv_proj_kernel(x_ref, wqkv_ref, gq_ref, gk_ref, cos_ref, sin_ref,
                          q_ref, k_ref, v_ref, *, num_heads, eps):
    E = x_ref.shape[-1]
    D = cos_ref.shape[-1]
    H = num_heads

    # bf16 operands, f32 accumulation: one (ts, E) x (E, 3E) matmul -> full MXU
    # width, x streamed through VMEM once.
    xb = x_ref[0].astype(jnp.bfloat16)
    qkv = jnp.dot(xb, wqkv_ref[...], preferred_element_type=jnp.float32)

    q = qkv[:, :E]
    k = qkv[:, E:2 * E]
    v = qkv[:, 2 * E:]

    def layernorm(t, g):
        # single-pass variance E[x^2] - mu^2, f32 statistics
        mu = jnp.mean(t, axis=-1, keepdims=True)
        var = jnp.mean(t * t, axis=-1, keepdims=True) - mu * mu
        return (t - mu) * jax.lax.rsqrt(var + eps) * g

    # The 1/head_dim attention scale is pre-folded into gq on the host.
    q = layernorm(q, gq_ref[...])
    k = layernorm(k, gk_ref[...])

    cos = cos_ref[...]                  # (ts, D) f32
    sin = sin_ref[...]                  # rotate_half sign pre-folded (first half negated)
    half = D // 2

    def rope(t):
        # rotate_half with the sign folded into sin (pure jnp: portable to
        # interpret mode; pltpu.roll(t, D//2, axis=1) is the XLU alternative).
        rot = jnp.concatenate([t[:, half:], t[:, :half]], axis=-1)
        return t * cos + rot * sin

    # 'b s (h d) -> b h s d' as per-head lane-aligned slice writes (static
    # unrolled loop) instead of reshape + jnp.transpose relayouts.
    for h in range(H):
        lo = h * D
        q_ref[0, h] = rope(q[:, lo:lo + D]).astype(q_ref.dtype)
        k_ref[0, h] = rope(k[:, lo:lo + D]).astype(k_ref.dtype)
        v_ref[0, h] = v[:, lo:lo + D].astype(v_ref.dtype)


# ---------------------------------------------------------------------------
# Kernel B: flash attention (online softmax over KV tiles) + output projection
# ---------------------------------------------------------------------------
def _esm3_flash_attn_kernel(q_ref, k_ref, v_ref, wo_ref, o_ref,
                            m_sc, l_sc, acc_sc, ctx_sc, *,
                            seq_len, kv_tile, need_kv_mask):
    kv = pl.program_id(2)

    @pl.when(kv == 0)
    def _():
        m_sc[...] = jnp.full(m_sc.shape, -1e30, jnp.float32)
        l_sc[...] = jnp.zeros(l_sc.shape, jnp.float32)
        acc_sc[...] = jnp.zeros(acc_sc.shape, jnp.float32)

    q = q_ref[0]                        # (H, TQ, D) bf16 (attention scale pre-folded)
    k = k_ref[0]                        # (H, TK, D) bf16
    v = v_ref[0]                        # (H, TK, D) bf16

    # Head-batched bf16 matmul, f32 accumulation.
    s = jnp.einsum('hqd,hkd->hqk', q, k, preferred_element_type=jnp.float32)

    if need_kv_mask:
        # Mask padded key positions (sequence was padded up to a tile multiple).
        key_idx = kv * kv_tile + jax.lax.broadcasted_iota(
            jnp.int32, (1, 1, kv_tile), 2)
        s = jnp.where(key_idx < seq_len, s, -1e30)

    m_prev = m_sc[...]
    m_new = jnp.maximum(m_prev, jnp.max(s, axis=-1, keepdims=True))
    alpha = jnp.exp(m_prev - m_new)
    p = jnp.exp(s - m_new)
    l_sc[...] = alpha * l_sc[...] + jnp.sum(p, axis=-1, keepdims=True)
    acc_sc[...] = alpha * acc_sc[...] + jnp.einsum(
        'hqk,hkd->hqd', p.astype(jnp.bfloat16), v,
        preferred_element_type=jnp.float32)
    m_sc[...] = m_new

    @pl.when(kv == pl.num_programs(2) - 1)
    def _():
        H, _, D = acc_sc.shape
        inv_l = 1.0 / l_sc[...]          # exact divide, only H*TQ elements
        # 'h q d -> q (h d)' via per-head lane-offset writes into a (TQ, E)
        # bf16 scratch (no transpose relayout), then one full-width out-proj.
        for h in range(H):
            ctx_sc[:, h * D:(h + 1) * D] = (acc_sc[h] * inv_l[h]).astype(ctx_sc.dtype)
        o_ref[0] = jnp.dot(ctx_sc[...], wo_ref[...],
                           preferred_element_type=jnp.float32).astype(o_ref.dtype)


# ---------------------------------------------------------------------------
# Host-side helpers
# ---------------------------------------------------------------------------
def prepare_params(wq, wk, wv, wo, compute_dtype=jnp.bfloat16):
    """Convert PyTorch-layout (out,in) Linear weights into the fused, pre-transposed
    bf16 (in,out) layouts the kernels consume. Call ONCE at parameter-load time."""
    w_qkv = jnp.concatenate([wq.T, wk.T, wv.T], axis=1).astype(compute_dtype)
    w_out = wo.T.astype(compute_dtype)
    return w_qkv, w_out


def _round_up(v, m):
    return (v + m - 1) // m * m


def _plan_seq(S, proj_cap, q_cap, kv_cap):
    """Padded sequence length plus tiles that are multiples of 8 (128 for long
    sequences), divide S_pad, and respect the caps — keeps BlockSpecs on the
    (8, 128) grid and stores unmasked."""
    S_pad = _round_up(S, 8) if S <= 128 else _round_up(S, 128)

    def tile(cap):
        if S_pad <= cap:
            return S_pad
        quantum = 128 if S_pad % 128 == 0 else 8
        best = quantum
        d = quantum
        while d <= cap:
            if S_pad % d == 0:
                best = d
            d += quantum
        return best

    return S_pad, tile(proj_cap), tile(q_cap), tile(kv_cap)


def _vmem_limit(nbytes):
    # 2x headroom over the tile-math estimate, clamped to a sane range.
    return int(min(max(2 * nbytes, 32 * 1024 * 1024), 100 * 1024 * 1024))


def esm3_mha_self(x, w_qkv, w_out, gq, gk, cos_cached, sin_cached, *,
                  num_heads, layernorm_eps=1e-5,
                  proj_seq_tile=256, q_tile=512, kv_tile=512):
    """x: (B,S,E) f32. w_qkv (E,3E) / w_out (E,E) bf16 from prepare_params.
    gq/gk: (E,) LayerNorm weights. cos/sin: (>=S, head_dim) rotary caches.
    Tile defaults target v5e/v6e; shrink q_tile/kv_tile for v7x at large E."""
    B, S, E = x.shape
    H = num_heads
    D = E // H
    scale = 1.0 / D                      # self.scaling = 1 / head_dim

    S_pad, ts, tq, tk = _plan_seq(S, proj_seq_tile, q_tile, kv_tile)

    # Fold the rotate_half sign into the sin cache (first half negated).
    cos = cos_cached[:S].astype(jnp.float32)
    sin = sin_cached[:S].astype(jnp.float32)
    sin = jnp.concatenate([-sin[:, :D // 2], sin[:, D // 2:]], axis=-1)

    if S_pad != S:
        pad = S_pad - S
        x = jnp.pad(x, ((0, 0), (0, pad), (0, 0)))
        cos = jnp.pad(cos, ((0, pad), (0, 0)))
        sin = jnp.pad(sin, ((0, pad), (0, 0)))

    # Hoisted host-side folds: attention scale into the Q-LN gamma.
    gq_scaled = (gq.astype(jnp.float32) * scale).reshape(1, E)
    gk_f32 = gk.astype(jnp.float32).reshape(1, E)

    qkv_shape = jax.ShapeDtypeStruct((B, H, S_pad, D), jnp.bfloat16)

    # ---- Kernel A: fused QKV projection / LN / RoPE / head split ----
    bytes_a = 2 * (ts * E * 4 + E * 3 * E * 2 + 2 * E * 4 + 2 * ts * D * 4
                   + 3 * H * ts * D * 2)
    q, k, v = pl.pallas_call(
        functools.partial(_esm3_qkv_proj_kernel, num_heads=H, eps=layernorm_eps),
        out_shape=(qkv_shape, qkv_shape, qkv_shape),
        grid_spec=pltpu.PrefetchScalarGridSpec(
            num_scalar_prefetch=0,
            grid=(B, S_pad // ts),
            in_specs=[
                pl.BlockSpec((1, ts, E), lambda b, s: (b, s, 0)),     # x tile (f32)
                pl.BlockSpec((E, 3 * E), lambda b, s: (0, 0)),        # fused W_qkv^T bf16
                pl.BlockSpec((1, E), lambda b, s: (0, 0)),            # q LN weight * scale
                pl.BlockSpec((1, E), lambda b, s: (0, 0)),            # k LN weight
                pl.BlockSpec((ts, D), lambda b, s: (s, 0)),           # cos cache
                pl.BlockSpec((ts, D), lambda b, s: (s, 0)),           # signed sin cache
            ],
            out_specs=[
                pl.BlockSpec((1, H, ts, D), lambda b, s: (b, 0, s, 0)),
                pl.BlockSpec((1, H, ts, D), lambda b, s: (b, 0, s, 0)),
                pl.BlockSpec((1, H, ts, D), lambda b, s: (b, 0, s, 0)),
            ],
        ),
        compiler_params=pltpu.CompilerParams(
            dimension_semantics=("parallel", "parallel"),
            vmem_limit_bytes=_vmem_limit(bytes_a)),
    )(x, w_qkv, gq_scaled, gk_f32, cos, sin)

    # ---- Kernel B: flash attention + fused output projection ----
    bytes_b = (2 * (H * tq * D * 2 + 2 * H * tk * D * 2 + E * E * 2 + tq * E * 4)
               + 2 * H * tq * 4 + H * tq * D * 4 + tq * E * 2)
    out = pl.pallas_call(
        functools.partial(_esm3_flash_attn_kernel, seq_len=S, kv_tile=tk,
                          need_kv_mask=(S_pad != S)),
        out_shape=jax.ShapeDtypeStruct((B, S_pad, E), jnp.float32),
        grid_spec=pltpu.PrefetchScalarGridSpec(
            num_scalar_prefetch=0,
            grid=(B, S_pad // tq, S_pad // tk),
            in_specs=[
                pl.BlockSpec((1, H, tq, D), lambda b, i, j: (b, 0, i, 0)),  # q bf16
                pl.BlockSpec((1, H, tk, D), lambda b, i, j: (b, 0, j, 0)),  # k bf16
                pl.BlockSpec((1, H, tk, D), lambda b, i, j: (b, 0, j, 0)),  # v bf16
                pl.BlockSpec((E, E), lambda b, i, j: (0, 0)),               # W_out^T bf16
            ],
            out_specs=pl.BlockSpec((1, tq, E), lambda b, i, j: (b, i, 0)),
            scratch_shapes=[
                pltpu.VMEM((H, tq, 1), jnp.float32),     # running max
                pltpu.VMEM((H, tq, 1), jnp.float32),     # running sum
                pltpu.VMEM((H, tq, D), jnp.float32),     # f32 output accumulator
                pltpu.VMEM((tq, E), jnp.bfloat16),       # lane-dense context tile
            ],
        ),
        compiler_params=pltpu.CompilerParams(
            dimension_semantics=("parallel", "parallel", "arbitrary"),
            vmem_limit_bytes=_vmem_limit(bytes_b)),
    )(q, k, v, w_out)

    if S_pad != S:
        out = out[:, :S, :]
    return out


# ---------------------------------------------------------------------------
# Pure-JAX f32 reference (mirrors the PyTorch forward: torch SDPA path, no mask)
# ---------------------------------------------------------------------------
def _reference(x, wq, wk, wv, wo, gq, gk, cos, sin, num_heads, eps=1e-5):
    B, S, E = x.shape
    D = E // num_heads
    scale = 1.0 / D
    q, k, v = x @ wq.T, x @ wk.T, x @ wv.T

    def ln(t, g):
        mu = t.mean(-1, keepdims=True)
        var = ((t - mu) ** 2).mean(-1, keepdims=True)
        return (t - mu) / jnp.sqrt(var + eps) * g

    q, k = ln(q, gq), ln(k, gk)
    q = q.reshape(B, S, num_heads, D)
    k = k.reshape(B, S, num_heads, D)
    v = v.reshape(B, S, num_heads, D)

    def rope(t):
        c = cos[None, :, None, :]
        s = sin[None, :, None, :]
        t1, t2 = t[..., : D // 2], t[..., D // 2:]
        rot = jnp.concatenate([-t2, t1], axis=-1)
        return t * c + rot * s

    q, k = rope(q), rope(k)
    q, k, v = (t.transpose(0, 2, 1, 3) for t in (q, k, v))        # b h s d
    scores = jnp.einsum('bhsd,bhtd->bhst', q, k) * scale
    p = jax.nn.softmax(scores, axis=-1)
    ctx = jnp.einsum('bhst,bhtd->bhsd', p, v)
    ctx = ctx.transpose(0, 2, 1, 3).reshape(B, S, E)
    return ctx @ wo.T


def _make_rotary_cache(S, D, base=10000.0):
    inv_freq = 1.0 / (base ** (jnp.arange(0, D, 2, dtype=jnp.float32) / D))
    t = jnp.arange(S, dtype=jnp.float32)
    freqs = t[:, None] * inv_freq[None, :]
    emb = jnp.concatenate([freqs, freqs], axis=-1)
    return jnp.cos(emb), jnp.sin(emb)


if __name__ == "__main__":
    B, H, D = 2, 4, 128
    E = H * D

    key = jax.random.PRNGKey(0)
    ks = jax.random.split(key, 7)

    # Deterministic synthetic parameters (PyTorch Linear layout: (out, in)).
    init = 1.0 / jnp.sqrt(jnp.float32(E))
    wq = jax.random.normal(ks[1], (E, E), jnp.float32) * init
    wk = jax.random.normal(ks[2], (E, E), jnp.float32) * init
    wv = jax.random.normal(ks[3], (E, E), jnp.float32) * init
    wo = jax.random.normal(ks[4], (E, E), jnp.float32) * init
    gq = 1.0 + 0.1 * jax.random.normal(ks[5], (E,), jnp.float32)   # q_layernorm.weight
    gk = 1.0 + 0.1 * jax.random.normal(ks[6], (E,), jnp.float32)   # k_layernorm.weight

    # One-time parameter preparation (fused + pre-transposed + bf16 weights).
    w_qkv, w_out = prepare_params(wq, wk, wv, wo)

    # bf16-matmul precision tolerance vs. the f32 reference.
    tol = 6e-2

    # Case 1: tile-aligned sequence.
    S = 16
    x = jax.random.normal(ks[0], (B, S, E), jnp.float32)
    cos_c, sin_c = _make_rotary_cache(S, D)
    out = esm3_mha_self(x, w_qkv, w_out, gq, gk, cos_c, sin_c, num_heads=H)
    out = jax.block_until_ready(out)
    ref = _reference(x, wq, wk, wv, wo, gq, gk, cos_c, sin_c, H)
    assert out.shape == (B, S, E)
    err = float(jnp.max(jnp.abs(out - ref)))
    assert err < tol, err

    # Case 2: ragged sequence (exercises the padding + key-mask path).
    S2 = 12
    x2 = jax.random.normal(jax.random.PRNGKey(1), (B, S2, E), jnp.float32)
    cos2, sin2 = _make_rotary_cache(S2, D)
    out2 = esm3_mha_self(x2, w_qkv, w_out, gq, gk, cos2, sin2, num_heads=H)
    out2 = jax.block_until_ready(out2)
    ref2 = _reference(x2, wq, wk, wv, wo, gq, gk, cos2, sin2, H)
    assert out2.shape == (B, S2, E)
    err2 = float(jnp.max(jnp.abs(out2 - ref2)))
    assert err2 < tol, err2

    print("KERNEL_OK")
</pallas_src>

<mosaic_0001>
module attributes {stable_mosaic.version = 11 : i64} {
  func.func @_esm3_qkv_proj_kernel(%arg0: i32, %arg1: i32, %arg2: memref<1x16x512xf32, #tpu.memory_space<vmem>>, %arg3: memref<512x1536xbf16, #tpu.memory_space<vmem>>, %arg4: memref<1x512xf32, #tpu.memory_space<vmem>>, %arg5: memref<1x512xf32, #tpu.memory_space<vmem>>, %arg6: memref<16x128xf32, #tpu.memory_space<vmem>>, %arg7: memref<16x128xf32, #tpu.memory_space<vmem>>, %arg8: memref<1x4x16x128xbf16, #tpu.memory_space<vmem>>, %arg9: memref<1x4x16x128xbf16, #tpu.memory_space<vmem>>, %arg10: memref<1x4x16x128xbf16, #tpu.memory_space<vmem>>) attributes {dimension_semantics = [#tpu.dimension_semantics<parallel>, #tpu.dimension_semantics<parallel>], iteration_bounds = array<i64: 2, 1>, scalar_prefetch = 0 : i64, scratch_operands = 0 : i64, tpu.core_type = #tpu.core_type<tc>, window_params = [{transform_indices = @transform_0, window_bounds = array<i64: 1, 16, 512>}, {pipeline_mode = #tpu.pipeline_mode<synchronous>, transform_indices = @transform_1, window_bounds = array<i64: 512, 1536>}, {pipeline_mode = #tpu.pipeline_mode<synchronous>, transform_indices = @transform_2, window_bounds = array<i64: 1, 512>}, {pipeline_mode = #tpu.pipeline_mode<synchronous>, transform_indices = @transform_3, window_bounds = array<i64: 1, 512>}, {transform_indices = @transform_4, window_bounds = array<i64: 16, 128>}, {transform_indices = @transform_5, window_bounds = array<i64: 16, 128>}, {transform_indices = @transform_6, window_bounds = array<i64: 1, 4, 16, 128>}, {transform_indices = @transform_7, window_bounds = array<i64: 1, 4, 16, 128>}, {transform_indices = @transform_8, window_bounds = array<i64: 1, 4, 16, 128>}]} {
    %c0 = arith.constant 0 : index
    %c0_0 = arith.constant 0 : index
    %c0_1 = arith.constant 0 : index
    %0 = vector.load %arg2[%c0, %c0_0, %c0_1] : memref<1x16x512xf32, #tpu.memory_space<vmem>>, vector<1x16x512xf32>
    %1 = vector.shape_cast %0 : vector<1x16x512xf32> to vector<16x512xf32>
    %2 = arith.truncf %1 : vector<16x512xf32> to vector<16x512xbf16>
    %c0_2 = arith.constant 0 : index
    %c0_3 = arith.constant 0 : index
    %3 = vector.load %arg3[%c0_2, %c0_3] : memref<512x1536xbf16, #tpu.memory_space<vmem>>, vector<512x1536xbf16>
    %cst = arith.constant dense<0.000000e+00> : vector<16x1536xf32>
    %4 = tpu.matmul %2, %3, %cst {dimension_numbers = #tpu.dot_dimension_numbers<[1], [0], [0], [1], [0, 0, 1, 1], [], []>} : vector<16x512xbf16>, vector<512x1536xbf16>, vector<16x1536xf32> -> vector<16x1536xf32>
    %5 = vector.extract_strided_slice %4 {offsets = [0, 0], sizes = [16, 512], strides = [1, 1]} : vector<16x1536xf32> to vector<16x512xf32>
    %6 = vector.extract_strided_slice %4 {offsets = [0, 512], sizes = [16, 512], strides = [1, 1]} : vector<16x1536xf32> to vector<16x512xf32>
    %7 = vector.extract_strided_slice %4 {offsets = [0, 1024], sizes = [16, 512], strides = [1, 1]} : vector<16x1536xf32> to vector<16x512xf32>
    %c0_4 = arith.constant 0 : index
    %c0_5 = arith.constant 0 : index
    %8 = vector.load %arg4[%c0_4, %c0_5] : memref<1x512xf32, #tpu.memory_space<vmem>>, vector<1x512xf32>
    %cst_6 = arith.constant dense<0.000000e+00> : vector<16xf32>
    %9 = vector.multi_reduction <add>, %5, %cst_6 [1] : vector<16x512xf32> to vector<16xf32>
    %10 = vector.shape_cast %9 : vector<16xf32> to vector<16x1xf32>
    %cst_7 = arith.constant 5.120000e+02 : f32
    %11 = vector.broadcast %cst_7 : f32 to vector<16x1xf32>
    %12 = arith.divf %10, %11 : vector<16x1xf32>
    %13 = arith.mulf %5, %5 : vector<16x512xf32>
    %cst_8 = arith.constant dense<0.000000e+00> : vector<16xf32>
    %14 = vector.multi_reduction <add>, %13, %cst_8 [1] : vector<16x512xf32> to vector<16xf32>
    %15 = vector.shape_cast %14 : vector<16xf32> to vector<16x1xf32>
    %cst_9 = arith.constant 5.120000e+02 : f32
    %16 = vector.broadcast %cst_9 : f32 to vector<16x1xf32>
    %17 = arith.divf %15, %16 : vector<16x1xf32>
    %18 = arith.mulf %12, %12 : vector<16x1xf32>
    %19 = arith.subf %17, %18 : vector<16x1xf32>
    %20 = vector.broadcast %12 : vector<16x1xf32> to vector<16x512xf32>
    %21 = arith.subf %5, %20 : vector<16x512xf32>
    %cst_10 = arith.constant 9.99999974E-6 : f32
    %22 = vector.broadcast %cst_10 : f32 to vector<16x1xf32>
    %23 = arith.addf %19, %22 : vector<16x1xf32>
    %24 = math.rsqrt %23 : vector<16x1xf32>
    %25 = vector.broadcast %24 : vector<16x1xf32> to vector<16x512xf32>
    %26 = arith.mulf %21, %25 : vector<16x512xf32>
    %27 = vector.broadcast %8 : vector<1x512xf32> to vector<16x512xf32>
    %28 = arith.mulf %26, %27 : vector<16x512xf32>
    %c0_11 = arith.constant 0 : index
    %c0_12 = arith.constant 0 : index
    %29 = vector.load %arg5[%c0_11, %c0_12] : memref<1x512xf32, #tpu.memory_space<vmem>>, vector<1x512xf32>
    %cst_13 = arith.constant dense<0.000000e+00> : vector<16xf32>
    %30 = vector.multi_reduction <add>, %6, %cst_13 [1] : vector<16x512xf32> to vector<16xf32>
    %31 = vector.shape_cast %30 : vector<16xf32> to vector<16x1xf32>
    %cst_14 = arith.constant 5.120000e+02 : f32
    %32 = vector.broadcast %cst_14 : f32 to vector<16x1xf32>
    %33 = arith.divf %31, %32 : vector<16x1xf32>
    %34 = arith.mulf %6, %6 : vector<16x512xf32>
    %cst_15 = arith.constant dense<0.000000e+00> : vector<16xf32>
    %35 = vector.multi_reduction <add>, %34, %cst_15 [1] : vector<16x512xf32> to vector<16xf32>
    %36 = vector.shape_cast %35 : vector<16xf32> to vector<16x1xf32>
    %cst_16 = arith.constant 5.120000e+02 : f32
    %37 = vector.broadcast %cst_16 : f32 to vector<16x1xf32>
    %38 = arith.divf %36, %37 : vector<16x1xf32>
    %39 = arith.mulf %33, %33 : vector<16x1xf32>
    %40 = arith.subf %38, %39 : vector<16x1xf32>
    %41 = vector.broadcast %33 : vector<16x1xf32> to vector<16x512xf32>
    %42 = arith.subf %6, %41 : vector<16x512xf32>
    %cst_17 = arith.constant 9.99999974E-6 : f32
    %43 = vector.broadcast %cst_17 : f32 to vector<16x1xf32>
    %44 = arith.addf %40, %43 : vector<16x1xf32>
    %45 = math.rsqrt %44 : vector<16x1xf32>
    %46 = vector.broadcast %45 : vector<16x1xf32> to vector<16x512xf32>
    %47 = arith.mulf %42, %46 : vector<16x512xf32>
    %48 = vector.broadcast %29 : vector<1x512xf32> to vector<16x512xf32>
    %49 = arith.mulf %47, %48 : vector<16x512xf32>
    %c0_18 = arith.constant 0 : index
    %c0_19 = arith.constant 0 : index
    %50 = vector.load %arg6[%c0_18, %c0_19] : memref<16x128xf32, #tpu.memory_space<vmem>>, vector<16x128xf32>
    %c0_20 = arith.constant 0 : index
    %c0_21 = arith.constant 0 : index
    %51 = vector.load %arg7[%c0_20, %c0_21] : memref<16x128xf32, #tpu.memory_space<vmem>>, vector<16x128xf32>
    %52 = vector.extract_strided_slice %28 {offsets = [0, 0], sizes = [16, 128], strides = [1, 1]} : vector<16x512xf32> to vector<16x128xf32>
    %53 = vector.extract_strided_slice %52 {offsets = [0, 64], sizes = [16, 64], strides = [1, 1]} : vector<16x128xf32> to vector<16x64xf32>
    %54 = vector.extract_strided_slice %52 {offsets = [0, 0], sizes = [16, 64], strides = [1, 1]} : vector<16x128xf32> to vector<16x64xf32>
    %55 = tpu.concatenate %53, %54 in 1 : vector<16x64xf32>, vector<16x64xf32> -> vector<16x128xf32>
    %56 = arith.mulf %52, %50 : vector<16x128xf32>
    %57 = arith.mulf %55, %51 : vector<16x128xf32>
    %58 = arith.addf %56, %57 : vector<16x128xf32>
    %59 = arith.truncf %58 : vector<16x128xf32> to vector<16x128xbf16>
    %c0_22 = arith.constant 0 : index
    %c0_23 = arith.constant 0 : index
    %c0_24 = arith.constant 0 : index
    %c0_25 = arith.constant 0 : index
    %60 = vector.load %arg8[%c0_22, %c0_23, %c0_24, %c0_25] : memref<1x4x16x128xbf16, #tpu.memory_space<vmem>>, vector<1x1x16x128xbf16>
    %61 = vector.shape_cast %60 : vector<1x1x16x128xbf16> to vector<16x128xbf16>
    %62 = vector.shape_cast %59 : vector<16x128xbf16> to vector<1x1x16x128xbf16>
    tpu.vector_store %arg8[%c0_22, %c0_23, %c0_24, %c0_25], %62 {strides = array<i32>} : memref<1x4x16x128xbf16, #tpu.memory_space<vmem>>, vector<1x1x16x128xbf16>,
    %63 = vector.extract_strided_slice %49 {offsets = [0, 0], sizes = [16, 128], strides = [1, 1]} : vector<16x512xf32> to vector<16x128xf32>
    %64 = vector.extract_strided_slice %63 {offsets = [0, 64], sizes = [16, 64], strides = [1, 1]} : vector<16x128xf32> to vector<16x64xf32>
    %65 = vector.extract_strided_slice %63 {offsets = [0, 0], sizes = [16, 64], strides = [1, 1]} : vector<16x128xf32> to vector<16x64xf32>
    %66 = tpu.concatenate %64, %65 in 1 : vector<16x64xf32>, vector<16x64xf32> -> vector<16x128xf32>
    %67 = arith.mulf %63, %50 : vector<16x128xf32>
    %68 = arith.mulf %66, %51 : vector<16x128xf32>
    %69 = arith.addf %67, %68 : vector<16x128xf32>
    %70 = arith.truncf %69 : vector<16x128xf32> to vector<16x128xbf16>
    %c0_26 = arith.constant 0 : index
    %c0_27 = arith.constant 0 : index
    %c0_28 = arith.constant 0 : index
    %c0_29 = arith.constant 0 : index
    %71 = vector.load %arg9[%c0_26, %c0_27, %c0_28, %c0_29] : memref<1x4x16x128xbf16, #tpu.memory_space<vmem>>, vector<1x1x16x128xbf16>
    %72 = vector.shape_cast %71 : vector<1x1x16x128xbf16> to vector<16x128xbf16>
    %73 = vector.shape_cast %70 : vector<16x128xbf16> to vector<1x1x16x128xbf16>
    tpu.vector_store %arg9[%c0_26, %c0_27, %c0_28, %c0_29], %73 {strides = array<i32>} : memref<1x4x16x128xbf16, #tpu.memory_space<vmem>>, vector<1x1x16x128xbf16>,
    %74 = vector.extract_strided_slice %7 {offsets = [0, 0], sizes = [16, 128], strides = [1, 1]} : vector<16x512xf32> to vector<16x128xf32>
    %75 = arith.truncf %74 : vector<16x128xf32> to vector<16x128xbf16>
    %c0_30 = arith.constant 0 : index
    %c0_31 = arith.constant 0 : index
    %c0_32 = arith.constant 0 : index
    %c0_33 = arith.constant 0 : index
    %76 = vector.load %arg10[%c0_30, %c0_31, %c0_32, %c0_33] : memref<1x4x16x128xbf16, #tpu.memory_space<vmem>>, vector<1x1x16x128xbf16>
    %77 = vector.shape_cast %76 : vector<1x1x16x128xbf16> to vector<16x128xbf16>
    %78 = vector.shape_cast %75 : vector<16x128xbf16> to vector<1x1x16x128xbf16>
    tpu.vector_store %arg10[%c0_30, %c0_31, %c0_32, %c0_33], %78 {strides = array<i32>} : memref<1x4x16x128xbf16, #tpu.memory_space<vmem>>, vector<1x1x16x128xbf16>,
    %79 = vector.extract_strided_slice %28 {offsets = [0, 128], sizes = [16, 128], strides = [1, 1]} : vector<16x512xf32> to vector<16x128xf32>
    %80 = vector.extract_strided_slice %79 {offsets = [0, 64], sizes = [16, 64], strides = [1, 1]} : vector<16x128xf32> to vector<16x64xf32>
    %81 = vector.extract_strided_slice %79 {offsets = [0, 0], sizes = [16, 64], strides = [1, 1]} : vector<16x128xf32> to vector<16x64xf32>
    %82 = tpu.concatenate %80, %81 in 1 : vector<16x64xf32>, vector<16x64xf32> -> vector<16x128xf32>
    %83 = arith.mulf %79, %50 : vector<16x128xf32>
    %84 = arith.mulf %82, %51 : vector<16x128xf32>
    %85 = arith.addf %83, %84 : vector<16x128xf32>
    %86 = arith.truncf %85 : vector<16x128xf32> to vector<16x128xbf16>
    %c0_34 = arith.constant 0 : index
    %c1 = arith.constant 1 : index
    %c0_35 = arith.constant 0 : index
    %c0_36 = arith.constant 0 : index
    %87 = vector.load %arg8[%c0_34, %c1, %c0_35, %c0_36] : memref<1x4x16x128xbf16, #tpu.memory_space<vmem>>, vector<1x1x16x128xbf16>
    %88 = vector.shape_cast %87 : vector<1x1x16x128xbf16> to vector<16x128xbf16>
    %89 = vector.shape_cast %86 : vector<16x128xbf16> to vector<1x1x16x128xbf16>
    tpu.vector_store %arg8[%c0_34, %c1, %c0_35, %c0_36], %89 {strides = array<i32>} : memref<1x4x16x128xbf16, #tpu.memory_space<vmem>>, vector<1x1x16x128xbf16>,
    %90 = vector.extract_strided_slice %49 {offsets = [0, 128], sizes = [16, 128], strides = [1, 1]} : vector<16x512xf32> to vector<16x128xf32>
    %91 = vector.extract_strided_slice %90 {offsets = [0, 64], sizes = [16, 64], strides = [1, 1]} : vector<16x128xf32> to vector<16x64xf32>
    %92 = vector.extract_strided_slice %90 {offsets = [0, 0], sizes = [16, 64], strides = [1, 1]} : vector<16x128xf32> to vector<16x64xf32>
    %93 = tpu.concatenate %91, %92 in 1 : vector<16x64xf32>, vector<16x64xf32> -> vector<16x128xf32>
    %94 = arith.mulf %90, %50 : vector<16x128xf32>
    %95 = arith.mulf %93, %51 : vector<16x128xf32>
    %96 = arith.addf %94, %95 : vector<16x128xf32>
    %97 = arith.truncf %96 : vector<16x128xf32> to vector<16x128xbf16>
    %c0_37 = arith.constant 0 : index
    %c1_38 = arith.constant 1 : index
    %c0_39 = arith.constant 0 : index
    %c0_40 = arith.constant 0 : index
    %98 = vector.load %arg9[%c0_37, %c1_38, %c0_39, %c0_40] : memref<1x4x16x128xbf16, #tpu.memory_space<vmem>>, vector<1x1x16x128xbf16>
    %99 = vector.shape_cast %98 : vector<1x1x16x128xbf16> to vector<16x128xbf16>
    %100 = vector.shape_cast %97 : vector<16x128xbf16> to vector<1x1x16x128xbf16>
    tpu.vector_store %arg9[%c0_37, %c1_38, %c0_39, %c0_40], %100 {strides = array<i32>} : memref<1x4x16x128xbf16, #tpu.memory_space<vmem>>, vector<1x1x16x128xbf16>,
    %101 = vector.extract_strided_slice %7 {offsets = [0, 128], sizes = [16, 128], strides = [1, 1]} : vector<16x512xf32> to vector<16x128xf32>
    %102 = arith.truncf %101 : vector<16x128xf32> to vector<16x128xbf16>
    %c0_41 = arith.constant 0 : index
    %c1_42 = arith.constant 1 : index
    %c0_43 = arith.constant 0 : index
    %c0_44 = arith.constant 0 : index
    %103 = vector.load %arg10[%c0_41, %c1_42, %c0_43, %c0_44] : memref<1x4x16x128xbf16, #tpu.memory_space<vmem>>, vector<1x1x16x128xbf16>
    %104 = vector.shape_cast %103 : vector<1x1x16x128xbf16> to vector<16x128xbf16>
    %105 = vector.shape_cast %102 : vector<16x128xbf16> to vector<1x1x16x128xbf16>
    tpu.vector_store %arg10[%c0_41, %c1_42, %c0_43, %c0_44], %105 {strides = array<i32>} : memref<1x4x16x128xbf16, #tpu.memory_space<vmem>>, vector<1x1x16x128xbf16>,
    %106 = vector.extract_strided_slice %28 {offsets = [0, 256], sizes = [16, 128], strides = [1, 1]} : vector<16x512xf32> to vector<16x128xf32>
    %107 = vector.extract_strided_slice %106 {offsets = [0, 64], sizes = [16, 64], strides = [1, 1]} : vector<16x128xf32> to vector<16x64xf32>
    %108 = vector.extract_strided_slice %106 {offsets = [0, 0], sizes = [16, 64], strides = [1, 1]} : vector<16x128xf32> to vector<16x64xf32>
    %109 = tpu.concatenate %107, %108 in 1 : vector<16x64xf32>, vector<16x64xf32> -> vector<16x128xf32>
    %110 = arith.mulf %106, %50 : vector<16x128xf32>
    %111 = arith.mulf %109, %51 : vector<16x128xf32>
    %112 = arith.addf %110, %111 : vector<16x128xf32>
    %113 = arith.truncf %112 : vector<16x128xf32> to vector<16x128xbf16>
    %c0_45 = arith.constant 0 : index
    %c2 = arith.constant 2 : index
    %c0_46 = arith.constant 0 : index
    %c0_47 = arith.constant 0 : index
    %114 = vector.load %arg8[%c0_45, %c2, %c0_46, %c0_47] : memref<1x4x16x128xbf16, #tpu.memory_space<vmem>>, vector<1x1x16x128xbf16>
    %115 = vector.shape_cast %114 : vector<1x1x16x128xbf16> to vector<16x128xbf16>
    %116 = vector.shape_cast %113 : vector<16x128xbf16> to vector<1x1x16x128xbf16>
    tpu.vector_store %arg8[%c0_45, %c2, %c0_46, %c0_47], %116 {strides = array<i32>} : memref<1x4x16x128xbf16, #tpu.memory_space<vmem>>, vector<1x1x16x128xbf16>,
    %117 = vector.extract_strided_slice %49 {offsets = [0, 256], sizes = [16, 128], strides = [1, 1]} : vector<16x512xf32> to vector<16x128xf32>
    %118 = vector.extract_strided_slice %117 {offsets = [0, 64], sizes = [16, 64], strides = [1, 1]} : vector<16x128xf32> to vector<16x64xf32>
    %119 = vector.extract_strided_slice %117 {offsets = [0, 0], sizes = [16, 64], strides = [1, 1]} : vector<16x128xf32> to vector<16x64xf32>
    %120 = tpu.concatenate %118, %119 in 1 : vector<16x64xf32>, vector<16x64xf32> -> vector<16x128xf32>
    %121 = arith.mulf %117, %50 : vector<16x128xf32>
    %122 = arith.mulf %120, %51 : vector<16x128xf32>
    %123 = arith.addf %121, %122 : vector<16x128xf32>
    %124 = arith.truncf %123 : vector<16x128xf32> to vector<16x128xbf16>
    %c0_48 = arith.constant 0 : index
    %c2_49 = arith.constant 2 : index
    %c0_50 = arith.constant 0 : index
    %c0_51 = arith.constant 0 : index
    %125 = vector.load %arg9[%c0_48, %c2_49, %c0_50, %c0_51] : memref<1x4x16x128xbf16, #tpu.memory_space<vmem>>, vector<1x1x16x128xbf16>
    %126 = vector.shape_cast %125 : vector<1x1x16x128xbf16> to vector<16x128xbf16>
    %127 = vector.shape_cast %124 : vector<16x128xbf16> to vector<1x1x16x128xbf16>
    tpu.vector_store %arg9[%c0_48, %c2_49, %c0_50, %c0_51], %127 {strides = array<i32>} : memref<1x4x16x128xbf16, #tpu.memory_space<vmem>>, vector<1x1x16x128xbf16>,
    %128 = vector.extract_strided_slice %7 {offsets = [0, 256], sizes = [16, 128], strides = [1, 1]} : vector<16x512xf32> to vector<16x128xf32>
    %129 = arith.truncf %128 : vector<16x128xf32> to vector<16x128xbf16>
    %c0_52 = arith.constant 0 : index
    %c2_53 = arith.constant 2 : index
    %c0_54 = arith.constant 0 : index
    %c0_55 = arith.constant 0 : index
    %130 = vector.load %arg10[%c0_52, %c2_53, %c0_54, %c0_55] : memref<1x4x16x128xbf16, #tpu.memory_space<vmem>>, vector<1x1x16x128xbf16>
    %131 = vector.shape_cast %130 : vector<1x1x16x128xbf16> to vector<16x128xbf16>
    %132 = vector.shape_cast %129 : vector<16x128xbf16> to vector<1x1x16x128xbf16>
    tpu.vector_store %arg10[%c0_52, %c2_53, %c0_54, %c0_55], %132 {strides = array<i32>} : memref<1x4x16x128xbf16, #tpu.memory_space<vmem>>, vector<1x1x16x128xbf16>,
    %133 = vector.extract_strided_slice %28 {offsets = [0, 384], sizes = [16, 128], strides = [1, 1]} : vector<16x512xf32> to vector<16x128xf32>
    %134 = vector.extract_strided_slice %133 {offsets = [0, 64], sizes = [16, 64], strides = [1, 1]} : vector<16x128xf32> to vector<16x64xf32>
    %135 = vector.extract_strided_slice %133 {offsets = [0, 0], sizes = [16, 64], strides = [1, 1]} : vector<16x128xf32> to vector<16x64xf32>
    %136 = tpu.concatenate %134, %135 in 1 : vector<16x64xf32>, vector<16x64xf32> -> vector<16x128xf32>
    %137 = arith.mulf %133, %50 : vector<16x128xf32>
    %138 = arith.mulf %136, %51 : vector<16x128xf32>
    %139 = arith.addf %137, %138 : vector<16x128xf32>
    %140 = arith.truncf %139 : vector<16x128xf32> to vector<16x128xbf16>
    %c0_56 = arith.constant 0 : index
    %c3 = arith.constant 3 : index
    %c0_57 = arith.constant 0 : index
    %c0_58 = arith.constant 0 : index
    %141 = vector.load %arg8[%c0_56, %c3, %c0_57, %c0_58] : memref<1x4x16x128xbf16, #tpu.memory_space<vmem>>, vector<1x1x16x128xbf16>
    %142 = vector.shape_cast %141 : vector<1x1x16x128xbf16> to vector<16x128xbf16>
    %143 = vector.shape_cast %140 : vector<16x128xbf16> to vector<1x1x16x128xbf16>
    tpu.vector_store %arg8[%c0_56, %c3, %c0_57, %c0_58], %143 {strides = array<i32>} : memref<1x4x16x128xbf16, #tpu.memory_space<vmem>>, vector<1x1x16x128xbf16>,
    %144 = vector.extract_strided_slice %49 {offsets = [0, 384], sizes = [16, 128], strides = [1, 1]} : vector<16x512xf32> to vector<16x128xf32>
    %145 = vector.extract_strided_slice %144 {offsets = [0, 64], sizes = [16, 64], strides = [1, 1]} : vector<16x128xf32> to vector<16x64xf32>
    %146 = vector.extract_strided_slice %144 {offsets = [0, 0], sizes = [16, 64], strides = [1, 1]} : vector<16x128xf32> to vector<16x64xf32>
    %147 = tpu.concatenate %145, %146 in 1 : vector<16x64xf32>, vector<16x64xf32> -> vector<16x128xf32>
    %148 = arith.mulf %144, %50 : vector<16x128xf32>
    %149 = arith.mulf %147, %51 : vector<16x128xf32>
    %150 = arith.addf %148, %149 : vector<16x128xf32>
    %151 = arith.truncf %150 : vector<16x128xf32> to vector<16x128xbf16>
    %c0_59 = arith.constant 0 : index
    %c3_60 = arith.constant 3 : index
    %c0_61 = arith.constant 0 : index
    %c0_62 = arith.constant 0 : index
    %152 = vector.load %arg9[%c0_59, %c3_60, %c0_61, %c0_62] : memref<1x4x16x128xbf16, #tpu.memory_space<vmem>>, vector<1x1x16x128xbf16>
    %153 = vector.shape_cast %152 : vector<1x1x16x128xbf16> to vector<16x128xbf16>
    %154 = vector.shape_cast %151 : vector<16x128xbf16> to vector<1x1x16x128xbf16>
    tpu.vector_store %arg9[%c0_59, %c3_60, %c0_61, %c0_62], %154 {strides = array<i32>} : memref<1x4x16x128xbf16, #tpu.memory_space<vmem>>, vector<1x1x16x128xbf16>,
    %155 = vector.extract_strided_slice %7 {offsets = [0, 384], sizes = [16, 128], strides = [1, 1]} : vector<16x512xf32> to vector<16x128xf32>
    %156 = arith.truncf %155 : vector<16x128xf32> to vector<16x128xbf16>
    %c0_63 = arith.constant 0 : index
    %c3_64 = arith.constant 3 : index
    %c0_65 = arith.constant 0 : index
    %c0_66 = arith.constant 0 : index
    %157 = vector.load %arg10[%c0_63, %c3_64, %c0_65, %c0_66] : memref<1x4x16x128xbf16, #tpu.memory_space<vmem>>, vector<1x1x16x128xbf16>
    %158 = vector.shape_cast %157 : vector<1x1x16x128xbf16> to vector<16x128xbf16>
    %159 = vector.shape_cast %156 : vector<16x128xbf16> to vector<1x1x16x128xbf16>
    tpu.vector_store %arg10[%c0_63, %c3_64, %c0_65, %c0_66], %159 {strides = array<i32>} : memref<1x4x16x128xbf16, #tpu.memory_space<vmem>>, vector<1x1x16x128xbf16>,
    return
  }
  func.func @transform_0(%arg0: i32, %arg1: i32) -> (i32, i32, i32) {
    %c0_i32 = arith.constant 0 : i32
    %c0_i32_0 = arith.constant 0 : i32
    return %arg0, %arg1, %c0_i32 : i32, i32, i32
  }
  func.func @transform_1(%arg0: i32, %arg1: i32) -> (i32, i32) {
    %c0_i32 = arith.constant 0 : i32
    %c0_i32_0 = arith.constant 0 : i32
    %c0_i32_1 = arith.constant 0 : i32
    return %c0_i32, %c0_i32_0 : i32, i32
  }
  func.func @transform_2(%arg0: i32, %arg1: i32) -> (i32, i32) {
    %c0_i32 = arith.constant 0 : i32
    %c0_i32_0 = arith.constant 0 : i32
    %c0_i32_1 = arith.constant 0 : i32
    return %c0_i32, %c0_i32_0 : i32, i32
  }
  func.func @transform_3(%arg0: i32, %arg1: i32) -> (i32, i32) {
    %c0_i32 = arith.constant 0 : i32
    %c0_i32_0 = arith.constant 0 : i32
    %c0_i32_1 = arith.constant 0 : i32
    return %c0_i32, %c0_i32_0 : i32, i32
  }
  func.func @transform_4(%arg0: i32, %arg1: i32) -> (i32, i32) {
    %c0_i32 = arith.constant 0 : i32
    %c0_i32_0 = arith.constant 0 : i32
    return %arg1, %c0_i32 : i32, i32
  }
  func.func @transform_5(%arg0: i32, %arg1: i32) -> (i32, i32) {
    %c0_i32 = arith.constant 0 : i32
    %c0_i32_0 = arith.constant 0 : i32
    return %arg1, %c0_i32 : i32, i32
  }
  func.func @transform_6(%arg0: i32, %arg1: i32) -> (i32, i32, i32, i32) {
    %c0_i32 = arith.constant 0 : i32
    %c0_i32_0 = arith.constant 0 : i32
    %c0_i32_1 = arith.constant 0 : i32
    return %arg0, %c0_i32, %arg1, %c0_i32_0 : i32, i32, i32, i32
  }
  func.func @transform_7(%arg0: i32, %arg1: i32) -> (i32, i32, i32, i32) {
    %c0_i32 = arith.constant 0 : i32
    %c0_i32_0 = arith.constant 0 : i32
    %c0_i32_1 = arith.constant 0 : i32
    return %arg0, %c0_i32, %arg1, %c0_i32_0 : i32, i32, i32, i32
  }
  func.func @transform_8(%arg0: i32, %arg1: i32) -> (i32, i32, i32, i32) {
    %c0_i32 = arith.constant 0 : i32
    %c0_i32_0 = arith.constant 0 : i32
    %c0_i32_1 = arith.constant 0 : i32
    return %arg0, %c0_i32, %arg1, %c0_i32_0 : i32, i32, i32, i32
  }
}

</mosaic_0001>

<llo_original>
// kernel: tpu_custom_call.1
$region0: #{tpu_custom_call.1}
  #allocation0 [shape = 'u32[]', space=smem, size = 0x4, offset = 0x4, fixed_abs, tag = 'smem constant byte address 0x4 - core index']
  #allocation1 [shape = 'u32[72,128]{1,0:T(1,128)}', space=vmem, size = 0x9000, scoped, tag = 'internal scratch']
  %s0 = inlined_call_operand.hbm [shape: f32[2,16,512], index: 0, kind: input, shape index: {}]
  %s1 = inlined_call_operand.hbm [shape: bf16[512,1536], index: 1, kind: input, shape index: {}]
  %s2 = inlined_call_operand.hbm [shape: f32[1,512], index: 2, kind: input, shape index: {}]
  %s3 = inlined_call_operand.hbm [shape: f32[1,512], index: 3, kind: input, shape index: {}]
  %s4 = inlined_call_operand.hbm [shape: f32[16,128], index: 4, kind: input, shape index: {}]
  %s5 = inlined_call_operand.hbm [shape: f32[16,128], index: 5, kind: input, shape index: {}]
  %s6 = inlined_call_operand.hbm [shape: bf16[2,4,16,128], index: 6, kind: output, shape index: {0}]
  %s7 = inlined_call_operand.hbm [shape: bf16[2,4,16,128], index: 7, kind: output, shape index: {1}]
  %s8 = inlined_call_operand.hbm [shape: bf16[2,4,16,128], index: 8, kind: output, shape index: {2}]
  %9 = xla_tuple %s6, %s7, %s8
  %s10 = sld [smem:[#allocation0]]
  $region97: #{tpu_custom_call.1} parent=0
    _
  %s12 = ssub.s32 1, %s10
  %s13 = scalar_select 0, %s12, %s10
  $region1: #{tpu_custom_call.1} parent=0
    #allocation2 [shape = 'u8[65536]{0}', space=vmem, size = 0x10000, scoped, tag = 'input window, operand 0']
    #allocation3 [shape = 's32[2]{0}', space=sflag, size = 0x8, scoped, tag = 'scoped memory for tpu_custom_call.1']
    #allocation4 [shape = 's32[2]{0}', space=sflag, size = 0x8, scoped, tag = 'scoped memory for tpu_custom_call.1']
    #allocation5 [shape = 'u8[1572864]{0}', space=vmem, size = 0x180000, scoped, tag = 'input window, operand 1, single buffered']
    #allocation6 [shape = 's32[1]{0}', space=sflag, size = 0x4, scoped, tag = 'scoped memory for tpu_custom_call.1']
    #allocation7 [shape = 'u8[2048]{0}', space=vmem, size = 0x800, scoped, tag = 'input window, operand 2, single buffered']
    #allocation8 [shape = 'u8[2048]{0}', space=vmem, size = 0x800, scoped, tag = 'input window, operand 3, single buffered']
    #allocation9 [shape = 's32[1]{0}', space=sflag, size = 0x4, scoped, tag = 'scoped memory for tpu_custom_call.1']
    #allocation10 [shape = 'u8[8192]{0}', space=vmem, size = 0x2000, scoped, tag = 'input window, operand 4, single buffered']
    #allocation11 [shape = 'u8[8192]{0}', space=vmem, size = 0x2000, scoped, tag = 'input window, operand 5, single buffered']
    #allocation12 [shape = 's32[1]{0}', space=sflag, size = 0x4, scoped, tag = 'scoped memory for tpu_custom_call.1']
    #allocation13 [shape = 'u8[32768]{0}', space=vmem, size = 0x8000, scoped, tag = 'output window, operand 0']
    #allocation14 [shape = 'u8[32768]{0}', space=vmem, size = 0x8000, scoped, tag = 'output window, operand 1']
    #allocation15 [shape = 's32[2]{0}', space=sflag, size = 0x8, scoped, tag = 'scoped memory for tpu_custom_call.1']
    #allocation16 [shape = 'u8[32768]{0}', space=vmem, size = 0x8000, scoped, tag = 'output window, operand 2']
    %14 = vsyncpa [#allocation3], 0
    %s15 = scalar_lea.sflag [#allocation3], 1
    %16 = vsyncpa %s15, 0
    %17 = vsyncpa [#allocation6], 0
    %18 = vsyncpa [#allocation9], 0
    %19 = vsyncpa [#allocation12], 0
    %20 = vsyncpa [#allocation4], 0
    %s21 = scalar_lea.sflag [#allocation4], 1
    %22 = vsyncpa %s21, 0
    %23 = vsyncpa [#allocation15], 0
    %s24 = scalar_lea.sflag [#allocation15], 1
    %25 = vsyncpa %s24, 0
    loop: start=0, step=1, limit=4
    $region2: #{tpu_custom_call.1} parent=1 // loop_pre_header
      _
    $region3: #{tpu_custom_call.1} parent=1 // loop_header
      %s27 = sphi 0, %s31
      %p28 = scmp.ge.s32.totalorder %s27, 4
      %s34 = sphi 0, %s46
      %s35 = sphi 0, %s42
      %s36 = sphi 0, %s34
      %s37 = sphi 0, %s35
      %s38 = sphi 0, %s36
      %s39 = sphi 0, %s37
      %s51 = sphi 0, %s53
      %s54 = sphi 0, %s51
      %s55 = sphi 0, %s54
      %s71 = sphi 0, %s55
      %s75 = sphi 0, %s75
      %s77 = sphi 0, %s75
      %s78 = sphi 0, %s77
      %s92 = sphi 0, %s78
      %s96 = sphi 0, %s96
      %s98 = sphi 0, %s96
      %s99 = sphi 0, %s98
      %s113 = sphi 0, %s99
      %s117 = sphi 0, %s117
      %s119 = sphi 0, %s117
      %s120 = sphi 0, %s119
      %s134 = sphi 0, %s120
      %s140 = sphi 0, %s142
      %s143 = sphi 0, %s140
      %s144 = sphi 0, %s143
      %s160 = sphi 0, %s144
      %s166 = sphi 0, %s168
      %s169 = sphi 0, %s166
      %s170 = sphi 0, %s169
      %s186 = sphi 0, %s170
      %s194 = sphi 0, %s196
      %s197 = sphi 0, %s194
      %s198 = sphi 0, %s197
      %s214 = sphi 0, %s198
      %s222 = sphi 0, %s224
      %s225 = sphi 0, %s222
      %s226 = sphi 0, %s225
      %s242 = sphi 0, %s226
      %s250 = sphi 0, %s252
      %s253 = sphi 0, %s250
      %s254 = sphi 0, %s253
      %s270 = sphi 0, %s254
    $region4: #{tpu_custom_call.1} parent=1 // loop_header_branch
      %30 = sbr.rel (%p28) target = $region8
    $region5: #{tpu_custom_call.1} parent=1 // loop_body
      %s32 = ssub.s32 %s27, 1
      %s33 = ssub.s32 %s27, 2
      %s40 = sadd.s32 1, %s35
      %p41 = scmp.ge.s32.totalorder %s40, 1
      %s42 = scalar_select %p41, 0, %s40
      %s43 = sadd.s32 1, %s34
      %s44 = scalar_select %p41, %s43, %s34
      %p45 = scmp.ge.s32.totalorder %s44, 2
      %s46 = scalar_select %p45, 0, %s44
      %s47 = ssub.s32 %s34, %s46
      %s48 = ssub.s32 %s35, %s42
      %s49 = sor.u32 %s47, %s48
      %p50 = scmp.eq.s32.totalorder %s49, 0
      %s52 = sadd.s32 %s51, 1
      %s53 = scalar_select %p50, %s51, %s52
      %p56 = pneg %p50
      %p57 = scmp.eq.s32.totalorder %s27, 1
      %p58 = por %p56, %p57
      %p59 = scmp.ne.s32.totalorder %s51, %s54
      %p60 = scmp.eq.s32.totalorder %s27, 0
      %p61 = por %p59, %p60
      %p62 = scmp.ne.s32.totalorder %s51, %s54
      %p63 = scmp.eq.s32.totalorder %s32, 1
      %p64 = por %p62, %p63
      %p65 = scmp.ne.s32.totalorder %s54, %s55
      %p66 = scmp.eq.s32.totalorder %s32, 0
      %p67 = por %p65, %p66
      %p68 = scmp.ne.s32.totalorder %s54, %s55
      %p69 = scmp.eq.s32.totalorder %s33, 1
      %p70 = por %p68, %p69
      %p72 = scmp.ne.s32.totalorder %s55, %s71
      %p73 = scmp.eq.s32.totalorder %s33, 0
      %p74 = por %p72, %p73
      %s76 = sadd.s32 %s75, 1
      %p79 = scmp.eq.s32.totalorder %s27, 1
      %p80 = scmp.ne.s32.totalorder %s75, %s77
      %p81 = scmp.eq.s32.totalorder %s27, 0
      %p82 = por %p80, %p81
      %p83 = scmp.ne.s32.totalorder %s75, %s77
      %p84 = scmp.eq.s32.totalorder %s32, 1
      %p85 = por %p83, %p84
      %p86 = scmp.ne.s32.totalorder %s77, %s78
      %p87 = scmp.eq.s32.totalorder %s32, 0
      %p88 = por %p86, %p87
      %p89 = scmp.ne.s32.totalorder %s77, %s78
      %p90 = scmp.eq.s32.totalorder %s33, 1
      %p91 = por %p89, %p90
      %p93 = scmp.ne.s32.totalorder %s78, %s92
      %p94 = scmp.eq.s32.totalorder %s33, 0
      %p95 = por %p93, %p94
      %s97 = sadd.s32 %s96, 1
      %p100 = scmp.eq.s32.totalorder %s27, 1
      %p101 = scmp.ne.s32.totalorder %s96, %s98
      %p102 = scmp.eq.s32.totalorder %s27, 0
      %p103 = por %p101, %p102
      %p104 = scmp.ne.s32.totalorder %s96, %s98
      %p105 = scmp.eq.s32.totalorder %s32, 1
      %p106 = por %p104, %p105
      %p107 = scmp.ne.s32.totalorder %s98, %s99
      %p108 = scmp.eq.s32.totalorder %s32, 0
      %p109 = por %p107, %p108
      %p110 = scmp.ne.s32.totalorder %s98, %s99
      %p111 = scmp.eq.s32.totalorder %s33, 1
      %p112 = por %p110, %p111
      %p114 = scmp.ne.s32.totalorder %s99, %s113
      %p115 = scmp.eq.s32.totalorder %s33, 0
      %p116 = por %p114, %p115
      %s118 = sadd.s32 %s117, 1
      %p121 = scmp.eq.s32.totalorder %s27, 1
      %p122 = scmp.ne.s32.totalorder %s117, %s119
      %p123 = scmp.eq.s32.totalorder %s27, 0
      %p124 = por %p122, %p123
      %p125 = scmp.ne.s32.totalorder %s117, %s119
      %p126 = scmp.eq.s32.totalorder %s32, 1
      %p127 = por %p125, %p126
      %p128 = scmp.ne.s32.totalorder %s119, %s120
      %p129 = scmp.eq.s32.totalorder %s32, 0
      %p130 = por %p128, %p129
      %p131 = scmp.ne.s32.totalorder %s119, %s120
      %p132 = scmp.eq.s32.totalorder %s33, 1
      %p133 = por %p131, %p132
      %p135 = scmp.ne.s32.totalorder %s120, %s134
      %p136 = scmp.eq.s32.totalorder %s33, 0
      %p137 = por %p135, %p136
      %s138 = ssub.s32 %s35, %s42
      %p139 = scmp.eq.s32.totalorder %s138, 0
      %s141 = sadd.s32 %s140, 1
      %s142 = scalar_select %p139, %s140, %s141
      %p145 = pneg %p139
      %p146 = scmp.eq.s32.totalorder %s27, 1
      %p147 = por %p145, %p146
      %p148 = scmp.ne.s32.totalorder %s140, %s143
      %p149 = scmp.eq.s32.totalorder %s27, 0
      %p150 = por %p148, %p149
      %p151 = scmp.ne.s32.totalorder %s140, %s143
      %p152 = scmp.eq.s32.totalorder %s32, 1
      %p153 = por %p151, %p152
      %p154 = scmp.ne.s32.totalorder %s143, %s144
      %p155 = scmp.eq.s32.totalorder %s32, 0
      %p156 = por %p154, %p155
      %p157 = scmp.ne.s32.totalorder %s143, %s144
      %p158 = scmp.eq.s32.totalorder %s33, 1
      %p159 = por %p157, %p158
      %p161 = scmp.ne.s32.totalorder %s144, %s160
      %p162 = scmp.eq.s32.totalorder %s33, 0
      %p163 = por %p161, %p162
      %s164 = ssub.s32 %s35, %s42
      %p165 = scmp.eq.s32.totalorder %s164, 0
      %s167 = sadd.s32 %s166, 1
      %s168 = scalar_select %p165, %s166, %s167
      %p171 = pneg %p165
      %p172 = scmp.eq.s32.totalorder %s27, 1
      %p173 = por %p171, %p172
      %p174 = scmp.ne.s32.totalorder %s166, %s169
      %p175 = scmp.eq.s32.totalorder %s27, 0
      %p176 = por %p174, %p175
      %p177 = scmp.ne.s32.totalorder %s166, %s169
      %p178 = scmp.eq.s32.totalorder %s32, 1
      %p179 = por %p177, %p178
      %p180 = scmp.ne.s32.totalorder %s169, %s170
      %p181 = scmp.eq.s32.totalorder %s32, 0
      %p182 = por %p180, %p181
      %p183 = scmp.ne.s32.totalorder %s169, %s170
      %p184 = scmp.eq.s32.totalorder %s33, 1
      %p185 = por %p183, %p184
      %p187 = scmp.ne.s32.totalorder %s170, %s186
      %p188 = scmp.eq.s32.totalorder %s33, 0
      %p189 = por %p187, %p188
      %s190 = ssub.s32 %s34, %s46
      %s191 = ssub.s32 %s35, %s42
      %s192 = sor.u32 %s190, %s191
      %p193 = scmp.eq.s32.totalorder %s192, 0
      %s195 = sadd.s32 %s194, 1
      %s196 = scalar_select %p193, %s194, %s195
      %p199 = pneg %p193
      %p200 = scmp.eq.s32.totalorder %s27, 1
      %p201 = por %p199, %p200
      %p202 = scmp.ne.s32.totalorder %s194, %s197
      %p203 = scmp.eq.s32.totalorder %s27, 0
      %p204 = por %p202, %p203
      %p205 = scmp.ne.s32.totalorder %s194, %s197
      %p206 = scmp.eq.s32.totalorder %s32, 1
      %p207 = por %p205, %p206
      %p208 = scmp.ne.s32.totalorder %s197, %s198
      %p209 = scmp.eq.s32.totalorder %s32, 0
      %p210 = por %p208, %p209
      %p211 = scmp.ne.s32.totalorder %s197, %s198
      %p212 = scmp.eq.s32.totalorder %s33, 1
      %p213 = por %p211, %p212
      %p215 = scmp.ne.s32.totalorder %s198, %s214
      %p216 = scmp.eq.s32.totalorder %s33, 0
      %p217 = por %p215, %p216
      %s218 = ssub.s32 %s34, %s46
      %s219 = ssub.s32 %s35, %s42
      %s220 = sor.u32 %s218, %s219
      %p221 = scmp.eq.s32.totalorder %s220, 0
      %s223 = sadd.s32 %s222, 1
      %s224 = scalar_select %p221, %s222, %s223
      %p227 = pneg %p221
      %p228 = scmp.eq.s32.totalorder %s27, 1
      %p229 = por %p227, %p228
      %p230 = scmp.ne.s32.totalorder %s222, %s225
      %p231 = scmp.eq.s32.totalorder %s27, 0
      %p232 = por %p230, %p231
      %p233 = scmp.ne.s32.totalorder %s222, %s225
      %p234 = scmp.eq.s32.totalorder %s32, 1
      %p235 = por %p233, %p234
      %p236 = scmp.ne.s32.totalorder %s225, %s226
      %p237 = scmp.eq.s32.totalorder %s32, 0
      %p238 = por %p236, %p237
      %p239 = scmp.ne.s32.totalorder %s225, %s226
      %p240 = scmp.eq.s32.totalorder %s33, 1
      %p241 = por %p239, %p240
      %p243 = scmp.ne.s32.totalorder %s226, %s242
      %p244 = scmp.eq.s32.totalorder %s33, 0
      %p245 = por %p243, %p244
      %s246 = ssub.s32 %s34, %s46
      %s247 = ssub.s32 %s35, %s42
      %s248 = sor.u32 %s246, %s247
      %p249 = scmp.eq.s32.totalorder %s248, 0
      %s251 = sadd.s32 %s250, 1
      %s252 = scalar_select %p249, %s250, %s251
      %p255 = pneg %p249
      %p256 = scmp.eq.s32.totalorder %s27, 1
      %p257 = por %p255, %p256
      %p258 = scmp.ne.s32.totalorder %s250, %s253
      %p259 = scmp.eq.s32.totalorder %s27, 0
      %p260 = por %p258, %p259
      %p261 = scmp.ne.s32.totalorder %s250, %s253
      %p262 = scmp.eq.s32.totalorder %s32, 1
      %p263 = por %p261, %p262
      %p264 = scmp.ne.s32.totalorder %s253, %s254
      %p265 = scmp.eq.s32.totalorder %s32, 0
      %p266 = por %p264, %p265
      %p267 = scmp.ne.s32.totalorder %s253, %s254
      %p268 = scmp.eq.s32.totalorder %s33, 1
      %p269 = por %p267, %p268
      %p271 = scmp.ne.s32.totalorder %s254, %s270
      %p272 = scmp.eq.s32.totalorder %s33, 0
      %p273 = por %p271, %p272
      %p274 = scmp.le.s32.totalorder 1, %s27
      %p275 = scmp.lt.s32.totalorder %s27, 3
      %p276 = pnand %p274, %p275
      %p277 = pneg %p276
      // Predicated region
      $region9: #{tpu_custom_call.1} parent=5 // pred_check
        _
      $region10: #{tpu_custom_call.1} parent=5 // pred_check_branch
        %279 = sbr.rel (%p276) target = $region12
      $region11: #{tpu_custom_call.1} parent=5 // pred_region
        %s280 = ssub.s32 %s27, 1
        // Predicated region
        $region13: #{tpu_custom_call.1} parent=11 // pred_check
          %p281 = pneg %p88
        $region14: #{tpu_custom_call.1} parent=11 // pred_check_branch
          %283 = sbr.rel (%p281) target = $region16
        $region15: #{tpu_custom_call.1} parent=11 // pred_region
          %285 = vsyncadd [#allocation6], 0
          %s286 = sshll.u32 %s1, 4
          %s287 = int_to_ptr.hbm [resolvable:$true] %s286
          %s288 = sshll.u32 [#allocation5], 4
          %s289 = int_to_ptr.vmem [resolvable:$true] %s288
          %294 = dma.hbm_to_vmem [thread:$0]  %s287, 49152, %s289, [#allocation6], 768, 768, 48
        $region16: #{tpu_custom_call.1} parent=11 // pred_fallthru
          _
        // Predicated region
        $region17: #{tpu_custom_call.1} parent=11 // pred_check
          %p295 = pneg %p109
        $region18: #{tpu_custom_call.1} parent=11 // pred_check_branch
          %297 = sbr.rel (%p295) target = $region20
        $region19: #{tpu_custom_call.1} parent=11 // pred_region
          %299 = vsyncadd [#allocation6], 0
          %s301 = sshll.u32 %s2, 4
          %s302 = int_to_ptr.hbm [resolvable:$true] %s301
          %s303 = sshll.u32 [#allocation7], 4
          %s304 = int_to_ptr.vmem [resolvable:$true] %s303
          %306 = dma.hbm_to_vmem [thread:$0]  %s302, 64, %s304, [#allocation6]
        $region20: #{tpu_custom_call.1} parent=11 // pred_fallthru
          _
        // Predicated region
        $region21: #{tpu_custom_call.1} parent=11 // pred_check
          %p307 = pneg %p130
        $region22: #{tpu_custom_call.1} parent=11 // pred_check_branch
          %309 = sbr.rel (%p307) target = $region24
        $region23: #{tpu_custom_call.1} parent=11 // pred_region
          %311 = vsyncadd [#allocation9], 0
          %s313 = sshll.u32 %s3, 4
          %s314 = int_to_ptr.hbm [resolvable:$true] %s313
          %s315 = sshll.u32 [#allocation8], 4
          %s316 = int_to_ptr.vmem [resolvable:$true] %s315
          %318 = dma.hbm_to_vmem [thread:$0]  %s314, 64, %s316, [#allocation9]
        $region24: #{tpu_custom_call.1} parent=11 // pred_fallthru
          _
        // Predicated region
        $region25: #{tpu_custom_call.1} parent=11 // pred_check
          %p319 = pneg %p156
        $region26: #{tpu_custom_call.1} parent=11 // pred_check_branch
          %321 = sbr.rel (%p319) target = $region28
        $region27: #{tpu_custom_call.1} parent=11 // pred_region
          %s322 = smul.u32 2, %s37
          %324 = vsyncadd [#allocation9], 0
          %s325 = smul.addr %s322, 8
          %s326 = scalar_lea.hbm %s4, %s325
          %s327 = sshll.u32 %s326, 4
          %s328 = int_to_ptr.hbm [resolvable:$true] %s327
          %s329 = sshll.u32 [#allocation10], 4
          %s330 = int_to_ptr.vmem [resolvable:$true] %s329
          %335 = dma.hbm_to_vmem [thread:$0]  %s328, 256, %s330, [#allocation9], 128, 128, 8
        $region28: #{tpu_custom_call.1} parent=11 // pred_fallthru
          _
        // Predicated region
        $region29: #{tpu_custom_call.1} parent=11 // pred_check
          %p336 = pneg %p182
        $region30: #{tpu_custom_call.1} parent=11 // pred_check_branch
          %338 = sbr.rel (%p336) target = $region32
        $region31: #{tpu_custom_call.1} parent=11 // pred_region
          %s339 = smul.u32 2, %s37
          %341 = vsyncadd [#allocation12], 0
          %s342 = smul.addr %s339, 8
          %s343 = scalar_lea.hbm %s5, %s342
          %s344 = sshll.u32 %s343, 4
          %s345 = int_to_ptr.hbm [resolvable:$true] %s344
          %s346 = sshll.u32 [#allocation11], 4
          %s347 = int_to_ptr.vmem [resolvable:$true] %s346
          %352 = dma.hbm_to_vmem [thread:$0]  %s345, 256, %s347, [#allocation12], 128, 128, 8
        $region32: #{tpu_custom_call.1} parent=11 // pred_fallthru
          _
      $region12: #{tpu_custom_call.1} parent=5 // pred_fallthru
        _
      %p353 = scmp.lt.s32.totalorder %s27, 2
      // Predicated region
      $region33: #{tpu_custom_call.1} parent=5 // pred_check
        %p354 = pneg %p353
      $region34: #{tpu_custom_call.1} parent=5 // pred_check_branch
        %356 = sbr.rel (%p354) target = $region36
      $region35: #{tpu_custom_call.1} parent=5 // pred_region
        // Predicated region
        $region37: #{tpu_custom_call.1} parent=35 // pred_check
          %p357 = pneg %p61
        $region38: #{tpu_custom_call.1} parent=35 // pred_check_branch
          %359 = sbr.rel (%p357) target = $region40
        $region39: #{tpu_custom_call.1} parent=35 // pred_region
          %s360 = sand.u32 %s51, 1
          %s361 = scalar_lea.sflag [#allocation3], %s360
          %s362 = sand.u32 %s51, 1
          %s363 = smul.addr %s362, 64
          %s364 = scalar_lea.vmem [#allocation2], %s363
          %s365 = smul.u32 2, %s35
          %367 = vsyncadd %s361, 0
          %s368 = smul.addr %s365, 4
          %s369 = smul.addr %s34, 8
          %s370 = sadd.s32 %s368, %s369
          %s371 = smul.addr %s370, 8
          %s372 = scalar_lea.hbm %s0, %s371
          %s373 = sshll.u32 %s372, 4
          %s374 = int_to_ptr.hbm [resolvable:$true] %s373
          %s375 = sshll.u32 %s364, 4
          %s376 = int_to_ptr.vmem [resolvable:$true] %s375
          %381 = dma.hbm_to_vmem [thread:$0]  %s374, 1024, %s376, %s361, 512, 512, 32
        $region40: #{tpu_custom_call.1} parent=35 // pred_fallthru
          _
      $region36: #{tpu_custom_call.1} parent=5 // pred_fallthru
        _
      %p382 = scmp.le.s32.totalorder 1, %s27
      %p383 = scmp.lt.s32.totalorder %s27, 3
      %p384 = pnand %p382, %p383
      %p385 = pneg %p384
      // Predicated region
      $region41: #{tpu_custom_call.1} parent=5 // pred_check
        _
      $region42: #{tpu_custom_call.1} parent=5 // pred_check_branch
        %387 = sbr.rel (%p384) target = $region44
      $region43: #{tpu_custom_call.1} parent=5 // pred_region
        %s388 = ssub.s32 %s27, 1
        %s389 = sand.u32 %s54, 1
        %s390 = scalar_lea.sflag [#allocation3], %s389
        %s391 = sand.u32 %s54, 1
        %s392 = smul.addr %s391, 64
        %s393 = scalar_lea.vmem [#allocation2], %s392
        // Predicated region
        $region45: #{tpu_custom_call.1} parent=43 // pred_check
          %p394 = pneg %p67
        $region46: #{tpu_custom_call.1} parent=43 // pred_check_branch
          %396 = sbr.rel (%p394) target = $region48
        $region47: #{tpu_custom_call.1} parent=43 // pred_region
          %398 = dma.done %s390, 1024
        $region48: #{tpu_custom_call.1} parent=43 // pred_fallthru
          _
        // Predicated region
        $region49: #{tpu_custom_call.1} parent=43 // pred_check
          %p399 = pneg %p88
        $region50: #{tpu_custom_call.1} parent=43 // pred_check_branch
          %401 = sbr.rel (%p399) target = $region52
        $region51: #{tpu_custom_call.1} parent=43 // pred_region
          %403 = dma.done [#allocation6], 49152
        $region52: #{tpu_custom_call.1} parent=43 // pred_fallthru
          _
        // Predicated region
        $region53: #{tpu_custom_call.1} parent=43 // pred_check
          %p404 = pneg %p109
        $region54: #{tpu_custom_call.1} parent=43 // pred_check_branch
          %406 = sbr.rel (%p404) target = $region56
        $region55: #{tpu_custom_call.1} parent=43 // pred_region
          %408 = dma.done [#allocation6], 64
        $region56: #{tpu_custom_call.1} parent=43 // pred_fallthru
          _
        // Predicated region
        $region57: #{tpu_custom_call.1} parent=43 // pred_check
          %p409 = pneg %p130
        $region58: #{tpu_custom_call.1} parent=43 // pred_check_branch
          %411 = sbr.rel (%p409) target = $region60
        $region59: #{tpu_custom_call.1} parent=43 // pred_region
          %413 = dma.done [#allocation9], 64
        $region60: #{tpu_custom_call.1} parent=43 // pred_fallthru
          _
        // Predicated region
        $region61: #{tpu_custom_call.1} parent=43 // pred_check
          %p414 = pneg %p156
        $region62: #{tpu_custom_call.1} parent=43 // pred_check_branch
          %416 = sbr.rel (%p414) target = $region64
        $region63: #{tpu_custom_call.1} parent=43 // pred_region
          %418 = dma.done [#allocation9], 256
        $region64: #{tpu_custom_call.1} parent=43 // pred_fallthru
          _
        // Predicated region
        $region65: #{tpu_custom_call.1} parent=43 // pred_check
          %p419 = pneg %p182
        $region66: #{tpu_custom_call.1} parent=43 // pred_check_branch
          %421 = sbr.rel (%p419) target = $region68
        $region67: #{tpu_custom_call.1} parent=43 // pred_region
          %423 = dma.done [#allocation12], 256
        $region68: #{tpu_custom_call.1} parent=43 // pred_fallthru
          _
        %s424 = sand.u32 %s54, 1
        %s425 = scalar_lea.sflag [#allocation3], %s424
        %s426 = sand.u32 %s54, 1
        %s427 = smul.addr %s426, 64
        %s428 = scalar_lea.vmem [#allocation2], %s427
        %p429 = pneg %p67
        %p430 = pneg %p64
        %p431 = pneg %p88
        %p432 = pneg %p85
        %p433 = pneg %p109
        %p434 = pneg %p106
        %p435 = pneg %p130
        %p436 = pneg %p127
        %p437 = pneg %p156
        %p438 = pneg %p153
        %p439 = pneg %p182
        %p440 = pneg %p179
        %p441 = pneg %p210
        %p442 = pneg %p207
        %s443 = sand.u32 %s197, 1
        %s444 = scalar_lea.sflag [#allocation4], %s443
        %s445 = sand.u32 %s197, 1
        %s446 = smul.addr %s445, 32
        %s447 = scalar_lea.vmem [#allocation13], %s446
        %p448 = pneg %p238
        %p449 = pneg %p235
        %s450 = sand.u32 %s32, 1
        %s451 = scalar_lea.sflag [#allocation15], %s450
        %s452 = sand.u32 %s225, 1
        %s453 = smul.addr %s452, 32
        %s454 = scalar_lea.vmem [#allocation14], %s453
        %p455 = pneg %p266
        %p456 = pneg %p263
        %s457 = sand.u32 %s32, 1
        %s458 = scalar_lea.sflag [#allocation15], %s457
        %s459 = sand.u32 %s253, 1
        %s460 = smul.addr %s459, 32
        %s461 = scalar_lea.vmem [#allocation16], %s460
        %s462 = smul.u32 2, %s37
        %s463 = smul.u32 2, %s37
        %s464 = smul.u32 2, %s37
        %s465 = smul.u32 2, %s37
        %s466 = smul.u32 2, %s37
        %s467 = smul.u32 2, %s37
        %v468 = vld [vmem:[%s393] sm:$0xff]
        %v469 = vld [vmem:[%s393 + $0x8] sm:$0xff]
        %v470 = vld [vmem:[%s393 + $0x10] sm:$0xff]
        %v471 = vld [vmem:[%s393 + $0x18] sm:$0xff]
        %v472 = vld [vmem:[%s393 + $0x20] sm:$0xff]
        %v473 = vld [vmem:[%s393 + $0x28] sm:$0xff]
        %v474 = vld [vmem:[%s393 + $0x30] sm:$0xff]
        %v475 = vld [vmem:[%s393 + $0x38] sm:$0xff]
        %v476 = vpack.c.bf16 %v472, %v468
        %v477 = vpack.c.bf16 %v473, %v469
        %v478 = vpack.c.bf16 %v474, %v470
        %v479 = vpack.c.bf16 %v475, %v471
        %v480 = vld [vmem:[#allocation5] sm:$0xff]
        %v481 = vld [vmem:[#allocation5 + $0x8] sm:$0xff]
        %v482 = vld [vmem:[#allocation5 + $0x10] sm:$0xff]
        %v483 = vld [vmem:[#allocation5 + $0x18] sm:$0xff]
        %v484 = vld [vmem:[#allocation5 + $0x20] sm:$0xff]
        %v485 = vld [vmem:[#allocation5 + $0x28] sm:$0xff]
        %v486 = vld [vmem:[#allocation5 + $0x30] sm:$0xff]
        %v487 = vld [vmem:[#allocation5 + $0x38] sm:$0xff]
        %v488 = vld [vmem:[#allocation5 + $0x40] sm:$0xff]
        %v489 = vld [vmem:[#allocation5 + $0x48] sm:$0xff]
        %v490 = vld [vmem:[#allocation5 + $0x50] sm:$0xff]
        %v491 = vld [vmem:[#allocation5 + $0x58] sm:$0xff]
        %v492 = vld [vmem:[#allocation5 + $0x60] sm:$0xff]
        %v493 = vld [vmem:[#allocation5 + $0x68] sm:$0xff]
        %v494 = vld [vmem:[#allocation5 + $0x70] sm:$0xff]
        %v495 = vld [vmem:[#allocation5 + $0x78] sm:$0xff]
        %v496 = vld [vmem:[#allocation5 + $0x80] sm:$0xff]
        %v497 = vld [vmem:[#allocation5 + $0x88] sm:$0xff]
        %v498 = vld [vmem:[#allocation5 + $0x90] sm:$0xff]
        %v499 = vld [vmem:[#allocation5 + $0x98] sm:$0xff]
        %v500 = vld [vmem:[#allocation5 + $0xa0] sm:$0xff]
        %v501 = vld [vmem:[#allocation5 + $0xa8] sm:$0xff]
        %v502 = vld [vmem:[#allocation5 + $0xb0] sm:$0xff]
        %v503 = vld [vmem:[#allocation5 + $0xb8] sm:$0xff]
        %v504 = vld [vmem:[#allocation5 + $0xc0] sm:$0xff]
        %v505 = vld [vmem:[#allocation5 + $0xc8] sm:$0xff]
        %v506 = vld [vmem:[#allocation5 + $0xd0] sm:$0xff]
        %v507 = vld [vmem:[#allocation5 + $0xd8] sm:$0xff]
        %v508 = vld [vmem:[#allocation5 + $0xe0] sm:$0xff]
        %v509 = vld [vmem:[#allocation5 + $0xe8] sm:$0xff]
        %v510 = vld [vmem:[#allocation5 + $0xf0] sm:$0xff]
        %v511 = vld [vmem:[#allocation5 + $0xf8] sm:$0xff]
        %v512 = vld [vmem:[#allocation5 + $0x100] sm:$0xff]
        %v513 = vld [vmem:[#allocation5 + $0x108] sm:$0xff]
        %v514 = vld [vmem:[#allocation5 + $0x110] sm:$0xff]
        %v515 = vld [vmem:[#allocation5 + $0x118] sm:$0xff]
        %v516 = vld [vmem:[#allocation5 + $0x120] sm:$0xff]
        %v517 = vld [vmem:[#allocation5 + $0x128] sm:$0xff]
        %v518 = vld [vmem:[#allocation5 + $0x130] sm:$0xff]
        %v519 = vld [vmem:[#allocation5 + $0x138] sm:$0xff]
        %v520 = vld [vmem:[#allocation5 + $0x140] sm:$0xff]
        %v521 = vld [vmem:[#allocation5 + $0x148] sm:$0xff]
        %v522 = vld [vmem:[#allocation5 + $0x150] sm:$0xff]
        %v523 = vld [vmem:[#allocation5 + $0x158] sm:$0xff]
        %v524 = vld [vmem:[#allocation5 + $0x160] sm:$0xff]
        %v525 = vld [vmem:[#allocation5 + $0x168] sm:$0xff]
        %v526 = vld [vmem:[#allocation5 + $0x170] sm:$0xff]
        %v527 = vld [vmem:[#allocation5 + $0x178] sm:$0xff]
        %v528 = vld [vmem:[#allocation5 + $0x180] sm:$0xff]
        %v529 = vld [vmem:[#allocation5 + $0x188] sm:$0xff]
        %v530 = vld [vmem:[#allocation5 + $0x190] sm:$0xff]
        %v531 = vld [vmem:[#allocation5 + $0x198] sm:$0xff]
        %v532 = vld [vmem:[#allocation5 + $0x1a0] sm:$0xff]
        %v533 = vld [vmem:[#allocation5 + $0x1a8] sm:$0xff]
        %v534 = vld [vmem:[#allocation5 + $0x1b0] sm:$0xff]
        %v535 = vld [vmem:[#allocation5 + $0x1b8] sm:$0xff]
        %v536 = vld [vmem:[#allocation5 + $0x1c0] sm:$0xff]
        %v537 = vld [vmem:[#allocation5 + $0x1c8] sm:$0xff]
        %v538 = vld [vmem:[#allocation5 + $0x1d0] sm:$0xff]
        %v539 = vld [vmem:[#allocation5 + $0x1d8] sm:$0xff]
        %v540 = vld [vmem:[#allocation5 + $0x1e0] sm:$0xff]
        %v541 = vld [vmem:[#allocation5 + $0x1e8] sm:$0xff]
        %v542 = vld [vmem:[#allocation5 + $0x1f0] sm:$0xff]
        %v543 = vld [vmem:[#allocation5 + $0x1f8] sm:$0xff]
        %v544 = vld [vmem:[#allocation5 + $0x200] sm:$0xff]
        %v545 = vld [vmem:[#allocation5 + $0x208] sm:$0xff]
        %v546 = vld [vmem:[#allocation5 + $0x210] sm:$0xff]
        %v547 = vld [vmem:[#allocation5 + $0x218] sm:$0xff]
        %v548 = vld [vmem:[#allocation5 + $0x220] sm:$0xff]
        %v549 = vld [vmem:[#allocation5 + $0x228] sm:$0xff]
        %v550 = vld [vmem:[#allocation5 + $0x230] sm:$0xff]
        %v551 = vld [vmem:[#allocation5 + $0x238] sm:$0xff]
        %v552 = vld [vmem:[#allocation5 + $0x240] sm:$0xff]
        %v553 = vld [vmem:[#allocation5 + $0x248] sm:$0xff]
        %v554 = vld [vmem:[#allocation5 + $0x250] sm:$0xff]
        %v555 = vld [vmem:[#allocation5 + $0x258] sm:$0xff]
        %v556 = vld [vmem:[#allocation5 + $0x260] sm:$0xff]
        %v557 = vld [vmem:[#allocation5 + $0x268] sm:$0xff]
        %v558 = vld [vmem:[#allocation5 + $0x270] sm:$0xff]
        %v559 = vld [vmem:[#allocation5 + $0x278] sm:$0xff]
        %v560 = vld [vmem:[#allocation5 + $0x280] sm:$0xff]
        %v561 = vld [vmem:[#allocation5 + $0x288] sm:$0xff]
        %v562 = vld [vmem:[#allocation5 + $0x290] sm:$0xff]
        %v563 = vld [vmem:[#allocation5 + $0x298] sm:$0xff]
        %v564 = vld [vmem:[#allocation5 + $0x2a0] sm:$0xff]
        %v565 = vld [vmem:[#allocation5 + $0x2a8] sm:$0xff]
        %v566 = vld [vmem:[#allocation5 + $0x2b0] sm:$0xff]
        %v567 = vld [vmem:[#allocation5 + $0x2b8] sm:$0xff]
        %v568 = vld [vmem:[#allocation5 + $0x2c0] sm:$0xff]
        %v569 = vld [vmem:[#allocation5 + $0x2c8] sm:$0xff]
        %v570 = vld [vmem:[#allocation5 + $0x2d0] sm:$0xff]
        %v571 = vld [vmem:[#allocation5 + $0x2d8] sm:$0xff]
        %v572 = vld [vmem:[#allocation5 + $0x2e0] sm:$0xff]
        %v573 = vld [vmem:[#allocation5 + $0x2e8] sm:$0xff]
        %v574 = vld [vmem:[#allocation5 + $0x2f0] sm:$0xff]
        %v575 = vld [vmem:[#allocation5 + $0x2f8] sm:$0xff]
        %v576 = vld [vmem:[#allocation5 + $0x300] sm:$0xff]
        %v577 = vld [vmem:[#allocation5 + $0x308] sm:$0xff]
        %v578 = vld [vmem:[#allocation5 + $0x310] sm:$0xff]
        %v579 = vld [vmem:[#allocation5 + $0x318] sm:$0xff]
        %v580 = vld [vmem:[#allocation5 + $0x320] sm:$0xff]
        %v581 = vld [vmem:[#allocation5 + $0x328] sm:$0xff]
        %v582 = vld [vmem:[#allocation5 + $0x330] sm:$0xff]
        %v583 = vld [vmem:[#allocation5 + $0x338] sm:$0xff]
        %v584 = vld [vmem:[#allocation5 + $0x340] sm:$0xff]
        %v585 = vld [vmem:[#allocation5 + $0x348] sm:$0xff]
        %v586 = vld [vmem:[#allocation5 + $0x350] sm:$0xff]
        %v587 = vld [vmem:[#allocation5 + $0x358] sm:$0xff]
        %v588 = vld [vmem:[#allocation5 + $0x360] sm:$0xff]
        %v589 = vld [vmem:[#allocation5 + $0x368] sm:$0xff]
        %v590 = vld [vmem:[#allocation5 + $0x370] sm:$0xff]
        %v591 = vld [vmem:[#allocation5 + $0x378] sm:$0xff]
        %v592 = vld [vmem:[#allocation5 + $0x380] sm:$0xff]
        %v593 = vld [vmem:[#allocation5 + $0x388] sm:$0xff]
        %v594 = vld [vmem:[#allocation5 + $0x390] sm:$0xff]
        %v595 = vld [vmem:[#allocation5 + $0x398] sm:$0xff]
        %v596 = vld [vmem:[#allocation5 + $0x3a0] sm:$0xff]
        %v597 = vld [vmem:[#allocation5 + $0x3a8] sm:$0xff]
        %v598 = vld [vmem:[#allocation5 + $0x3b0] sm:$0xff]
        %v599 = vld [vmem:[#allocation5 + $0x3b8] sm:$0xff]
        %v600 = vld [vmem:[#allocation5 + $0x3c0] sm:$0xff]
        %v601 = vld [vmem:[#allocation5 + $0x3c8] sm:$0xff]
        %v602 = vld [vmem:[#allocation5 + $0x3d0] sm:$0xff]
        %v603 = vld [vmem:[#allocation5 + $0x3d8] sm:$0xff]
        %v604 = vld [vmem:[#allocation5 + $0x3e0] sm:$0xff]
        %v605 = vld [vmem:[#allocation5 + $0x3e8] sm:$0xff]
        %v606 = vld [vmem:[#allocation5 + $0x3f0] sm:$0xff]
        %v607 = vld [vmem:[#allocation5 + $0x3f8] sm:$0xff]
        %v608 = vld [vmem:[#allocation5 + $0x400] sm:$0xff]
        %v609 = vld [vmem:[#allocation5 + $0x408] sm:$0xff]
        %v610 = vld [vmem:[#allocation5 + $0x410] sm:$0xff]
        %v611 = vld [vmem:[#allocation5 + $0x418] sm:$0xff]
        %v612 = vld [vmem:[#allocation5 + $0x420] sm:$0xff]
        %v613 = vld [vmem:[#allocation5 + $0x428] sm:$0xff]
        %v614 = vld [vmem:[#allocation5 + $0x430] sm:$0xff]
        %v615 = vld [vmem:[#allocation5 + $0x438] sm:$0xff]
        %v616 = vld [vmem:[#allocation5 + $0x440] sm:$0xff]
        %v617 = vld [vmem:[#allocation5 + $0x448] sm:$0xff]
        %v618 = vld [vmem:[#allocation5 + $0x450] sm:$0xff]
        %v619 = vld [vmem:[#allocation5 + $0x458] sm:$0xff]
        %v620 = vld [vmem:[#allocation5 + $0x460] sm:$0xff]
        %v621 = vld [vmem:[#allocation5 + $0x468] sm:$0xff]
        %v622 = vld [vmem:[#allocation5 + $0x470] sm:$0xff]
        %v623 = vld [vmem:[#allocation5 + $0x478] sm:$0xff]
        %v624 = vld [vmem:[#allocation5 + $0x480] sm:$0xff]
        %v625 = vld [vmem:[#allocation5 + $0x488] sm:$0xff]
        %v626 = vld [vmem:[#allocation5 + $0x490] sm:$0xff]
        %v627 = vld [vmem:[#allocation5 + $0x498] sm:$0xff]
        %v628 = vld [vmem:[#allocation5 + $0x4a0] sm:$0xff]
        %v629 = vld [vmem:[#allocation5 + $0x4a8] sm:$0xff]
        %v630 = vld [vmem:[#allocation5 + $0x4b0] sm:$0xff]
        %v631 = vld [vmem:[#allocation5 + $0x4b8] sm:$0xff]
        %v632 = vld [vmem:[#allocation5 + $0x4c0] sm:$0xff]
        %v633 = vld [vmem:[#allocation5 + $0x4c8] sm:$0xff]
        %v634 = vld [vmem:[#allocation5 + $0x4d0] sm:$0xff]
        %v635 = vld [vmem:[#allocation5 + $0x4d8] sm:$0xff]
        %v636 = vld [vmem:[#allocation5 + $0x4e0] sm:$0xff]
        %v637 = vld [vmem:[#allocation5 + $0x4e8] sm:$0xff]
        %v638 = vld [vmem:[#allocation5 + $0x4f0] sm:$0xff]
        %v639 = vld [vmem:[#allocation5 + $0x4f8] sm:$0xff]
        %v640 = vld [vmem:[#allocation5 + $0x500] sm:$0xff]
        %v641 = vld [vmem:[#allocation5 + $0x508] sm:$0xff]
        %v642 = vld [vmem:[#allocation5 + $0x510] sm:$0xff]
        %v643 = vld [vmem:[#allocation5 + $0x518] sm:$0xff]
        %v644 = vld [vmem:[#allocation5 + $0x520] sm:$0xff]
        %v645 = vld [vmem:[#allocation5 + $0x528] sm:$0xff]
        %v646 = vld [vmem:[#allocation5 + $0x530] sm:$0xff]
        %v647 = vld [vmem:[#allocation5 + $0x538] sm:$0xff]
        %v648 = vld [vmem:[#allocation5 + $0x540] sm:$0xff]
        %v649 = vld [vmem:[#allocation5 + $0x548] sm:$0xff]
        %v650 = vld [vmem:[#allocation5 + $0x550] sm:$0xff]
        %v651 = vld [vmem:[#allocation5 + $0x558] sm:$0xff]
        %v652 = vld [vmem:[#allocation5 + $0x560] sm:$0xff]
        %v653 = vld [vmem:[#allocation5 + $0x568] sm:$0xff]
        %v654 = vld [vmem:[#allocation5 + $0x570] sm:$0xff]
        %v655 = vld [vmem:[#allocation5 + $0x578] sm:$0xff]
        %v656 = vld [vmem:[#allocation5 + $0x580] sm:$0xff]
        %v657 = vld [vmem:[#allocation5 + $0x588] sm:$0xff]
        %v658 = vld [vmem:[#allocation5 + $0x590] sm:$0xff]
        %v659 = vld [vmem:[#allocation5 + $0x598] sm:$0xff]
        %v660 = vld [vmem:[#allocation5 + $0x5a0] sm:$0xff]
        %v661 = vld [vmem:[#allocation5 + $0x5a8] sm:$0xff]
        %v662 = vld [vmem:[#allocation5 + $0x5b0] sm:$0xff]
        %v663 = vld [vmem:[#allocation5 + $0x5b8] sm:$0xff]
        %v664 = vld [vmem:[#allocation5 + $0x5c0] sm:$0xff]
        %v665 = vld [vmem:[#allocation5 + $0x5c8] sm:$0xff]
        %v666 = vld [vmem:[#allocation5 + $0x5d0] sm:$0xff]
        %v667 = vld [vmem:[#allocation5 + $0x5d8] sm:$0xff]
        %v668 = vld [vmem:[#allocation5 + $0x5e0] sm:$0xff]
        %v669 = vld [vmem:[#allocation5 + $0x5e8] sm:$0xff]
        %v670 = vld [vmem:[#allocation5 + $0x5f0] sm:$0xff]
        %v671 = vld [vmem:[#allocation5 + $0x5f8] sm:$0xff]
        %v672 = vld [vmem:[#allocation5 + $0x600] sm:$0xff]
        %v673 = vld [vmem:[#allocation5 + $0x608] sm:$0xff]
        %v674 = vld [vmem:[#allocation5 + $0x610] sm:$0xff]
        %v675 = vld [vmem:[#allocation5 + $0x618] sm:$0xff]
        %v676 = vld [vmem:[#allocation5 + $0x620] sm:$0xff]
        %v677 = vld [vmem:[#allocation5 + $0x628] sm:$0xff]
        %v678 = vld [vmem:[#allocation5 + $0x630] sm:$0xff]
        %v679 = vld [vmem:[#allocation5 + $0x638] sm:$0xff]
        %v680 = vld [vmem:[#allocation5 + $0x640] sm:$0xff]
        %v681 = vld [vmem:[#allocation5 + $0x648] sm:$0xff]
        %v682 = vld [vmem:[#allocation5 + $0x650] sm:$0xff]
        %v683 = vld [vmem:[#allocation5 + $0x658] sm:$0xff]
        %v684 = vld [vmem:[#allocation5 + $0x660] sm:$0xff]
        %v685 = vld [vmem:[#allocation5 + $0x668] sm:$0xff]
        %v686 = vld [vmem:[#allocation5 + $0x670] sm:$0xff]
        %v687 = vld [vmem:[#allocation5 + $0x678] sm:$0xff]
        %v688 = vld [vmem:[#allocation5 + $0x680] sm:$0xff]
        %v689 = vld [vmem:[#allocation5 + $0x688] sm:$0xff]
        %v690 = vld [vmem:[#allocation5 + $0x690] sm:$0xff]
        %v691 = vld [vmem:[#allocation5 + $0x698] sm:$0xff]
        %v692 = vld [vmem:[#allocation5 + $0x6a0] sm:$0xff]
        %v693 = vld [vmem:[#allocation5 + $0x6a8] sm:$0xff]
        %v694 = vld [vmem:[#allocation5 + $0x6b0] sm:$0xff]
        %v695 = vld [vmem:[#allocation5 + $0x6b8] sm:$0xff]
        %v696 = vld [vmem:[#allocation5 + $0x6c0] sm:$0xff]
        %v697 = vld [vmem:[#allocation5 + $0x6c8] sm:$0xff]
        %v698 = vld [vmem:[#allocation5 + $0x6d0] sm:$0xff]
        %v699 = vld [vmem:[#allocation5 + $0x6d8] sm:$0xff]
        %v700 = vld [vmem:[#allocation5 + $0x6e0] sm:$0xff]
        %v701 = vld [vmem:[#allocation5 + $0x6e8] sm:$0xff]
        %v702 = vld [vmem:[#allocation5 + $0x6f0] sm:$0xff]
        %v703 = vld [vmem:[#allocation5 + $0x6f8] sm:$0xff]
        %v704 = vld [vmem:[#allocation5 + $0x700] sm:$0xff]
        %v705 = vld [vmem:[#allocation5 + $0x708] sm:$0xff]
        %v706 = vld [vmem:[#allocation5 + $0x710] sm:$0xff]
        %v707 = vld [vmem:[#allocation5 + $0x718] sm:$0xff]
        %v708 = vld [vmem:[#allocation5 + $0x720] sm:$0xff]
        %v709 = vld [vmem:[#allocation5 + $0x728] sm:$0xff]
        %v710 = vld [vmem:[#allocation5 + $0x730] sm:$0xff]
        %v711 = vld [vmem:[#allocation5 + $0x738] sm:$0xff]
        %v712 = vld [vmem:[#allocation5 + $0x740] sm:$0xff]
        %v713 = vld [vmem:[#allocation5 + $0x748] sm:$0xff]
        %v714 = vld [vmem:[#allocation5 + $0x750] sm:$0xff]
        %v715 = vld [vmem:[#allocation5 + $0x758] sm:$0xff]
        %v716 = vld [vmem:[#allocation5 + $0x760] sm:$0xff]
        %v717 = vld [vmem:[#allocation5 + $0x768] sm:$0xff]
        %v718 = vld [vmem:[#allocation5 + $0x770] sm:$0xff]
        %v719 = vld [vmem:[#allocation5 + $0x778] sm:$0xff]
        %v720 = vld [vmem:[#allocation5 + $0x780] sm:$0xff]
        %v721 = vld [vmem:[#allocation5 + $0x788] sm:$0xff]
        %v722 = vld [vmem:[#allocation5 + $0x790] sm:$0xff]
        %v723 = vld [vmem:[#allocation5 + $0x798] sm:$0xff]
        %v724 = vld [vmem:[#allocation5 + $0x7a0] sm:$0xff]
        %v725 = vld [vmem:[#allocation5 + $0x7a8] sm:$0xff]
        %v726 = vld [vmem:[#allocation5 + $0x7b0] sm:$0xff]
        %v727 = vld [vmem:[#allocation5 + $0x7b8] sm:$0xff]
        %v728 = vld [vmem:[#allocation5 + $0x7c0] sm:$0xff]
        %v729 = vld [vmem:[#allocation5 + $0x7c8] sm:$0xff]
        %v730 = vld [vmem:[#allocation5 + $0x7d0] sm:$0xff]
        %v731 = vld [vmem:[#allocation5 + $0x7d8] sm:$0xff]
        %v732 = vld [vmem:[#allocation5 + $0x7e0] sm:$0xff]
        %v733 = vld [vmem:[#allocation5 + $0x7e8] sm:$0xff]
        %v734 = vld [vmem:[#allocation5 + $0x7f0] sm:$0xff]
        %v735 = vld [vmem:[#allocation5 + $0x7f8] sm:$0xff]
        %v736 = vld [vmem:[#allocation5 + $0x800] sm:$0xff]
        %v737 = vld [vmem:[#allocation5 + $0x808] sm:$0xff]
        %v738 = vld [vmem:[#allocation5 + $0x810] sm:$0xff]
        %v739 = vld [vmem:[#allocation5 + $0x818] sm:$0xff]
        %v740 = vld [vmem:[#allocation5 + $0x820] sm:$0xff]
        %v741 = vld [vmem:[#allocation5 + $0x828] sm:$0xff]
        %v742 = vld [vmem:[#allocation5 + $0x830] sm:$0xff]
        %v743 = vld [vmem:[#allocation5 + $0x838] sm:$0xff]
        %v744 = vld [vmem:[#allocation5 + $0x840] sm:$0xff]
        %v745 = vld [vmem:[#allocation5 + $0x848] sm:$0xff]
        %v746 = vld [vmem:[#allocation5 + $0x850] sm:$0xff]
        %v747 = vld [vmem:[#allocation5 + $0x858] sm:$0xff]
        %v748 = vld [vmem:[#allocation5 + $0x860] sm:$0xff]
        %v749 = vld [vmem:[#allocation5 + $0x868] sm:$0xff]
        %v750 = vld [vmem:[#allocation5 + $0x870] sm:$0xff]
        %v751 = vld [vmem:[#allocation5 + $0x878] sm:$0xff]
        %v752 = vld [vmem:[#allocation5 + $0x880] sm:$0xff]
        %v753 = vld [vmem:[#allocation5 + $0x888] sm:$0xff]
        %v754 = vld [vmem:[#allocation5 + $0x890] sm:$0xff]
        %v755 = vld [vmem:[#allocation5 + $0x898] sm:$0xff]
        %v756 = vld [vmem:[#allocation5 + $0x8a0] sm:$0xff]
        %v757 = vld [vmem:[#allocation5 + $0x8a8] sm:$0xff]
        %v758 = vld [vmem:[#allocation5 + $0x8b0] sm:$0xff]
        %v759 = vld [vmem:[#allocation5 + $0x8b8] sm:$0xff]
        %v760 = vld [vmem:[#allocation5 + $0x8c0] sm:$0xff]
        %v761 = vld [vmem:[#allocation5 + $0x8c8] sm:$0xff]
        %v762 = vld [vmem:[#allocation5 + $0x8d0] sm:$0xff]
        %v763 = vld [vmem:[#allocation5 + $0x8d8] sm:$0xff]
        %v764 = vld [vmem:[#allocation5 + $0x8e0] sm:$0xff]
        %v765 = vld [vmem:[#allocation5 + $0x8e8] sm:$0xff]
        %v766 = vld [vmem:[#allocation5 + $0x8f0] sm:$0xff]
        %v767 = vld [vmem:[#allocation5 + $0x8f8] sm:$0xff]
        %v768 = vld [vmem:[#allocation5 + $0x900] sm:$0xff]
        %v769 = vld [vmem:[#allocation5 + $0x908] sm:$0xff]
        %v770 = vld [vmem:[#allocation5 + $0x910] sm:$0xff]
        %v771 = vld [vmem:[#allocation5 + $0x918] sm:$0xff]
        %v772 = vld [vmem:[#allocation5 + $0x920] sm:$0xff]
        %v773 = vld [vmem:[#allocation5 + $0x928] sm:$0xff]
        %v774 = vld [vmem:[#allocation5 + $0x930] sm:$0xff]
        %v775 = vld [vmem:[#allocation5 + $0x938] sm:$0xff]
        %v776 = vld [vmem:[#allocation5 + $0x940] sm:$0xff]
        %v777 = vld [vmem:[#allocation5 + $0x948] sm:$0xff]
        %v778 = vld [vmem:[#allocation5 + $0x950] sm:$0xff]
        %v779 = vld [vmem:[#allocation5 + $0x958] sm:$0xff]
        %v780 = vld [vmem:[#allocation5 + $0x960] sm:$0xff]
        %v781 = vld [vmem:[#allocation5 + $0x968] sm:$0xff]
        %v782 = vld [vmem:[#allocation5 + $0x970] sm:$0xff]
        %v783 = vld [vmem:[#allocation5 + $0x978] sm:$0xff]
        %v784 = vld [vmem:[#allocation5 + $0x980] sm:$0xff]
        %v785 = vld [vmem:[#allocation5 + $0x988] sm:$0xff]
        %v786 = vld [vmem:[#allocation5 + $0x990] sm:$0xff]
        %v787 = vld [vmem:[#allocation5 + $0x998] sm:$0xff]
        %v788 = vld [vmem:[#allocation5 + $0x9a0] sm:$0xff]
        %v789 = vld [vmem:[#allocation5 + $0x9a8] sm:$0xff]
        %v790 = vld [vmem:[#allocation5 + $0x9b0] sm:$0xff]
        %v791 = vld [vmem:[#allocation5 + $0x9b8] sm:$0xff]
        %v792 = vld [vmem:[#allocation5 + $0x9c0] sm:$0xff]
        %v793 = vld [vmem:[#allocation5 + $0x9c8] sm:$0xff]
        %v794 = vld [vmem:[#allocation5 + $0x9d0] sm:$0xff]
        %v795 = vld [vmem:[#allocation5 + $0x9d8] sm:$0xff]
        %v796 = vld [vmem:[#allocation5 + $0x9e0] sm:$0xff]
        %v797 = vld [vmem:[#allocation5 + $0x9e8] sm:$0xff]
        %v798 = vld [vmem:[#allocation5 + $0x9f0] sm:$0xff]
        %v799 = vld [vmem:[#allocation5 + $0x9f8] sm:$0xff]
        %v800 = vld [vmem:[#allocation5 + $0xa00] sm:$0xff]
        %v801 = vld [vmem:[#allocation5 + $0xa08] sm:$0xff]
        %v802 = vld [vmem:[#allocation5 + $0xa10] sm:$0xff]
        %v803 = vld [vmem:[#allocation5 + $0xa18] sm:$0xff]
        %v804 = vld [vmem:[#allocation5 + $0xa20] sm:$0xff]
        %v805 = vld [vmem:[#allocation5 + $0xa28] sm:$0xff]
        %v806 = vld [vmem:[#allocation5 + $0xa30] sm:$0xff]
        %v807 = vld [vmem:[#allocation5 + $0xa38] sm:$0xff]
        %v808 = vld [vmem:[#allocation5 + $0xa40] sm:$0xff]
        %v809 = vld [vmem:[#allocation5 + $0xa48] sm:$0xff]
        %v810 = vld [vmem:[#allocation5 + $0xa50] sm:$0xff]
        %v811 = vld [vmem:[#allocation5 + $0xa58] sm:$0xff]
        %v812 = vld [vmem:[#allocation5 + $0xa60] sm:$0xff]
        %v813 = vld [vmem:[#allocation5 + $0xa68] sm:$0xff]
        %v814 = vld [vmem:[#allocation5 + $0xa70] sm:$0xff]
        %v815 = vld [vmem:[#allocation5 + $0xa78] sm:$0xff]
        %v816 = vld [vmem:[#allocation5 + $0xa80] sm:$0xff]
        %v817 = vld [vmem:[#allocation5 + $0xa88] sm:$0xff]
        %v818 = vld [vmem:[#allocation5 + $0xa90] sm:$0xff]
        %v819 = vld [vmem:[#allocation5 + $0xa98] sm:$0xff]
        %v820 = vld [vmem:[#allocation5 + $0xaa0] sm:$0xff]
        %v821 = vld [vmem:[#allocation5 + $0xaa8] sm:$0xff]
        %v822 = vld [vmem:[#allocation5 + $0xab0] sm:$0xff]
        %v823 = vld [vmem:[#allocation5 + $0xab8] sm:$0xff]
        %v824 = vld [vmem:[#allocation5 + $0xac0] sm:$0xff]
        %v825 = vld [vmem:[#allocation5 + $0xac8] sm:$0xff]
        %v826 = vld [vmem:[#allocation5 + $0xad0] sm:$0xff]
        %v827 = vld [vmem:[#allocation5 + $0xad8] sm:$0xff]
        %v828 = vld [vmem:[#allocation5 + $0xae0] sm:$0xff]
        %v829 = vld [vmem:[#allocation5 + $0xae8] sm:$0xff]
        %v830 = vld [vmem:[#allocation5 + $0xaf0] sm:$0xff]
        %v831 = vld [vmem:[#allocation5 + $0xaf8] sm:$0xff]
        %v832 = vld [vmem:[#allocation5 + $0xb00] sm:$0xff]
        %v833 = vld [vmem:[#allocation5 + $0xb08] sm:$0xff]
        %v834 = vld [vmem:[#allocation5 + $0xb10] sm:$0xff]
        %v835 = vld [vmem:[#allocation5 + $0xb18] sm:$0xff]
        %v836 = vld [vmem:[#allocation5 + $0xb20] sm:$0xff]
        %v837 = vld [vmem:[#allocation5 + $0xb28] sm:$0xff]
        %v838 = vld [vmem:[#allocation5 + $0xb30] sm:$0xff]
        %v839 = vld [vmem:[#allocation5 + $0xb38] sm:$0xff]
        %v840 = vld [vmem:[#allocation5 + $0xb40] sm:$0xff]
        %v841 = vld [vmem:[#allocation5 + $0xb48] sm:$0xff]
        %v842 = vld [vmem:[#allocation5 + $0xb50] sm:$0xff]
        %v843 = vld [vmem:[#allocation5 + $0xb58] sm:$0xff]
        %v844 = vld [vmem:[#allocation5 + $0xb60] sm:$0xff]
        %v845 = vld [vmem:[#allocation5 + $0xb68] sm:$0xff]
        %v846 = vld [vmem:[#allocation5 + $0xb70] sm:$0xff]
        %v847 = vld [vmem:[#allocation5 + $0xb78] sm:$0xff]
        %v848 = vld [vmem:[#allocation5 + $0xb80] sm:$0xff]
        %v849 = vld [vmem:[#allocation5 + $0xb88] sm:$0xff]
        %v850 = vld [vmem:[#allocation5 + $0xb90] sm:$0xff]
        %v851 = vld [vmem:[#allocation5 + $0xb98] sm:$0xff]
        %v852 = vld [vmem:[#allocation5 + $0xba0] sm:$0xff]
        %v853 = vld [vmem:[#allocation5 + $0xba8] sm:$0xff]
        %v854 = vld [vmem:[#allocation5 + $0xbb0] sm:$0xff]
        %v855 = vld [vmem:[#allocation5 + $0xbb8] sm:$0xff]
        %v856 = vld [vmem:[#allocation5 + $0xbc0] sm:$0xff]
        %v857 = vld [vmem:[#allocation5 + $0xbc8] sm:$0xff]
        %v858 = vld [vmem:[#allocation5 + $0xbd0] sm:$0xff]
        %v859 = vld [vmem:[#allocation5 + $0xbd8] sm:$0xff]
        %v860 = vld [vmem:[#allocation5 + $0xbe0] sm:$0xff]
        %v861 = vld [vmem:[#allocation5 + $0xbe8] sm:$0xff]
        %v862 = vld [vmem:[#allocation5 + $0xbf0] sm:$0xff]
        %v863 = vld [vmem:[#allocation5 + $0xbf8] sm:$0xff]
        %v1248 = vunpack.c.l.b16 %v480
        %v1249 = vunpack.c.h.b16 %v480
        %v1250 = vunpack.c.l.b16 %v481
        %v1251 = vunpack.c.h.b16 %v481
        %v1252 = vunpack.c.l.b16 %v482
        %v1253 = vunpack.c.h.b16 %v482
        %v1254 = vunpack.c.l.b16 %v483
        %v1255 = vunpack.c.h.b16 %v483
        %v1256 = vunpack.c.l.b16 %v484
        %v1257 = vunpack.c.h.b16 %v484
        %v1258 = vunpack.c.l.b16 %v485
        %v1259 = vunpack.c.h.b16 %v485
        %v1260 = vunpack.c.l.b16 %v486
        %v1261 = vunpack.c.h.b16 %v486
        %v1262 = vunpack.c.l.b16 %v487
        %v1263 = vunpack.c.h.b16 %v487
        %v1264 = vunpack.c.l.b16 %v488
        %v1265 = vunpack.c.h.b16 %v488
        %v1266 = vunpack.c.l.b16 %v489
        %v1267 = vunpack.c.h.b16 %v489
        %v1268 = vunpack.c.l.b16 %v490
        %v1269 = vunpack.c.h.b16 %v490
        %v1270 = vunpack.c.l.b16 %v491
        %v1271 = vunpack.c.h.b16 %v491
        %v1272 = vunpack.c.l.b16 %v492
        %v1273 = vunpack.c.h.b16 %v492
        %v1274 = vunpack.c.l.b16 %v493
        %v1275 = vunpack.c.h.b16 %v493
        %v1276 = vunpack.c.l.b16 %v494
        %v1277 = vunpack.c.h.b16 %v494
        %v1278 = vunpack.c.l.b16 %v495
        %v1279 = vunpack.c.h.b16 %v495
        %v1280 = vunpack.c.l.b16 %v496
        %v1281 = vunpack.c.h.b16 %v496
        %v1282 = vunpack.c.l.b16 %v497
        %v1283 = vunpack.c.h.b16 %v497
        %v1284 = vunpack.c.l.b16 %v498
        %v1285 = vunpack.c.h.b16 %v498
        %v1286 = vunpack.c.l.b16 %v499
        %v1287 = vunpack.c.h.b16 %v499
        %v1288 = vunpack.c.l.b16 %v500
        %v1289 = vunpack.c.h.b16 %v500
        %v1290 = vunpack.c.l.b16 %v501
        %v1291 = vunpack.c.h.b16 %v501
        %v1292 = vunpack.c.l.b16 %v502
        %v1293 = vunpack.c.h.b16 %v502
        %v1294 = vunpack.c.l.b16 %v503
        %v1295 = vunpack.c.h.b16 %v503
        %v1296 = vunpack.c.l.b16 %v504
        %v1297 = vunpack.c.h.b16 %v504
        %v1298 = vunpack.c.l.b16 %v505
        %v1299 = vunpack.c.h.b16 %v505
        %v1300 = vunpack.c.l.b16 %v506
        %v1301 = vunpack.c.h.b16 %v506
        %v1302 = vunpack.c.l.b16 %v507
        %v1303 = vunpack.c.h.b16 %v507
        %v1304 = vunpack.c.l.b16 %v508
        %v1305 = vunpack.c.h.b16 %v508
        %v1306 = vunpack.c.l.b16 %v509
        %v1307 = vunpack.c.h.b16 %v509
        %v1308 = vunpack.c.l.b16 %v510
        %v1309 = vunpack.c.h.b16 %v510
        %v1310 = vunpack.c.l.b16 %v511
        %v1311 = vunpack.c.h.b16 %v511
        %v1312 = vunpack.c.l.b16 %v512
        %v1313 = vunpack.c.h.b16 %v512
        %v1314 = vunpack.c.l.b16 %v513
        %v1315 = vunpack.c.h.b16 %v513
        %v1316 = vunpack.c.l.b16 %v514
        %v1317 = vunpack.c.h.b16 %v514
        %v1318 = vunpack.c.l.b16 %v515
        %v1319 = vunpack.c.h.b16 %v515
        %v1320 = vunpack.c.l.b16 %v516
        %v1321 = vunpack.c.h.b16 %v516
        %v1322 = vunpack.c.l.b16 %v517
        %v1323 = vunpack.c.h.b16 %v517
        %v1324 = vunpack.c.l.b16 %v518
        %v1325 = vunpack.c.h.b16 %v518
        %v1326 = vunpack.c.l.b16 %v519
        %v1327 = vunpack.c.h.b16 %v519
        %v1328 = vunpack.c.l.b16 %v520
        %v1329 = vunpack.c.h.b16 %v520
        %v1330 = vunpack.c.l.b16 %v521
        %v1331 = vunpack.c.h.b16 %v521
        %v1332 = vunpack.c.l.b16 %v522
        %v1333 = vunpack.c.h.b16 %v522
        %v1334 = vunpack.c.l.b16 %v523
        %v1335 = vunpack.c.h.b16 %v523
        %v1336 = vunpack.c.l.b16 %v524
        %v1337 = vunpack.c.h.b16 %v524
        %v1338 = vunpack.c.l.b16 %v525
        %v1339 = vunpack.c.h.b16 %v525
        %v1340 = vunpack.c.l.b16 %v526
        %v1341 = vunpack.c.h.b16 %v526
        %v1342 = vunpack.c.l.b16 %v527
        %v1343 = vunpack.c.h.b16 %v527
        %v1344 = vunpack.c.l.b16 %v528
        %v1345 = vunpack.c.h.b16 %v528
        %v1346 = vunpack.c.l.b16 %v529
        %v1347 = vunpack.c.h.b16 %v529
        %v1348 = vunpack.c.l.b16 %v530
        %v1349 = vunpack.c.h.b16 %v530
        %v1350 = vunpack.c.l.b16 %v531
        %v1351 = vunpack.c.h.b16 %v531
        %v1352 = vunpack.c.l.b16 %v532
        %v1353 = vunpack.c.h.b16 %v532
        %v1354 = vunpack.c.l.b16 %v533
        %v1355 = vunpack.c.h.b16 %v533
        %v1356 = vunpack.c.l.b16 %v534
        %v1357 = vunpack.c.h.b16 %v534
        %v1358 = vunpack.c.l.b16 %v535
        %v1359 = vunpack.c.h.b16 %v535
        %v1360 = vunpack.c.l.b16 %v536
        %v1361 = vunpack.c.h.b16 %v536
        %v1362 = vunpack.c.l.b16 %v537
        %v1363 = vunpack.c.h.b16 %v537
        %v1364 = vunpack.c.l.b16 %v538
        %v1365 = vunpack.c.h.b16 %v538
        %v1366 = vunpack.c.l.b16 %v539
        %v1367 = vunpack.c.h.b16 %v539
        %v1368 = vunpack.c.l.b16 %v540
        %v1369 = vunpack.c.h.b16 %v540
        %v1370 = vunpack.c.l.b16 %v541
        %v1371 = vunpack.c.h.b16 %v541
        %v1372 = vunpack.c.l.b16 %v542
        %v1373 = vunpack.c.h.b16 %v542
        %v1374 = vunpack.c.l.b16 %v543
        %v1375 = vunpack.c.h.b16 %v543
        %v1376 = vunpack.c.l.b16 %v544
        %v1377 = vunpack.c.h.b16 %v544
        %v1378 = vunpack.c.l.b16 %v545
        %v1379 = vunpack.c.h.b16 %v545
        %v1380 = vunpack.c.l.b16 %v546
        %v1381 = vunpack.c.h.b16 %v546
        %v1382 = vunpack.c.l.b16 %v547
        %v1383 = vunpack.c.h.b16 %v547
        %v1384 = vunpack.c.l.b16 %v548
        %v1385 = vunpack.c.h.b16 %v548
        %v1386 = vunpack.c.l.b16 %v549
        %v1387 = vunpack.c.h.b16 %v549
        %v1388 = vunpack.c.l.b16 %v550
        %v1389 = vunpack.c.h.b16 %v550
        %v1390 = vunpack.c.l.b16 %v551
        %v1391 = vunpack.c.h.b16 %v551
        %v1392 = vunpack.c.l.b16 %v552
        %v1393 = vunpack.c.h.b16 %v552
        %v1394 = vunpack.c.l.b16 %v553
        %v1395 = vunpack.c.h.b16 %v553
        %v1396 = vunpack.c.l.b16 %v554
        %v1397 = vunpack.c.h.b16 %v554
        %v1398 = vunpack.c.l.b16 %v555
        %v1399 = vunpack.c.h.b16 %v555
        %v1400 = vunpack.c.l.b16 %v556
        %v1401 = vunpack.c.h.b16 %v556
        %v1402 = vunpack.c.l.b16 %v557
        %v1403 = vunpack.c.h.b16 %v557
        %v1404 = vunpack.c.l.b16 %v558
        %v1405 = vunpack.c.h.b16 %v558
        %v1406 = vunpack.c.l.b16 %v559
        %v1407 = vunpack.c.h.b16 %v559
        %v1408 = vunpack.c.l.b16 %v560
        %v1409 = vunpack.c.h.b16 %v560
        %v1410 = vunpack.c.l.b16 %v561
        %v1411 = vunpack.c.h.b16 %v561
        %v1412 = vunpack.c.l.b16 %v562
        %v1413 = vunpack.c.h.b16 %v562
        %v1414 = vunpack.c.l.b16 %v563
        %v1415 = vunpack.c.h.b16 %v563
        %v1416 = vunpack.c.l.b16 %v564
        %v1417 = vunpack.c.h.b16 %v564
        %v1418 = vunpack.c.l.b16 %v565
        %v1419 = vunpack.c.h.b16 %v565
        %v1420 = vunpack.c.l.b16 %v566
        %v1421 = vunpack.c.h.b16 %v566
        %v1422 = vunpack.c.l.b16 %v567
        %v1423 = vunpack.c.h.b16 %v567
        %v1424 = vunpack.c.l.b16 %v568
        %v1425 = vunpack.c.h.b16 %v568
        %v1426 = vunpack.c.l.b16 %v569
        %v1427 = vunpack.c.h.b16 %v569
        %v1428 = vunpack.c.l.b16 %v570
        %v1429 = vunpack.c.h.b16 %v570
        %v1430 = vunpack.c.l.b16 %v571
        %v1431 = vunpack.c.h.b16 %v571
        %v1432 = vunpack.c.l.b16 %v572
        %v1433 = vunpack.c.h.b16 %v572
        %v1434 = vunpack.c.l.b16 %v573
        %v1435 = vunpack.c.h.b16 %v573
        %v1436 = vunpack.c.l.b16 %v574
        %v1437 = vunpack.c.h.b16 %v574
        %v1438 = vunpack.c.l.b16 %v575
        %v1439 = vunpack.c.h.b16 %v575
        %v1440 = vunpack.c.l.b16 %v576
        %v1441 = vunpack.c.h.b16 %v576
        %v1442 = vunpack.c.l.b16 %v577
        %v1443 = vunpack.c.h.b16 %v577
        %v1444 = vunpack.c.l.b16 %v578
        %v1445 = vunpack.c.h.b16 %v578
        %v1446 = vunpack.c.l.b16 %v579
        %v1447 = vunpack.c.h.b16 %v579
        %v1448 = vunpack.c.l.b16 %v580
        %v1449 = vunpack.c.h.b16 %v580
        %v1450 = vunpack.c.l.b16 %v581
        %v1451 = vunpack.c.h.b16 %v581
        %v1452 = vunpack.c.l.b16 %v582
        %v1453 = vunpack.c.h.b16 %v582
        %v1454 = vunpack.c.l.b16 %v583
        %v1455 = vunpack.c.h.b16 %v583
        %v1456 = vunpack.c.l.b16 %v584
        %v1457 = vunpack.c.h.b16 %v584
        %v1458 = vunpack.c.l.b16 %v585
        %v1459 = vunpack.c.h.b16 %v585
        %v1460 = vunpack.c.l.b16 %v586
        %v1461 = vunpack.c.h.b16 %v586
        %v1462 = vunpack.c.l.b16 %v587
        %v1463 = vunpack.c.h.b16 %v587
        %v1464 = vunpack.c.l.b16 %v588
        %v1465 = vunpack.c.h.b16 %v588
        %v1466 = vunpack.c.l.b16 %v589
        %v1467 = vunpack.c.h.b16 %v589
        %v1468 = vunpack.c.l.b16 %v590
        %v1469 = vunpack.c.h.b16 %v590
        %v1470 = vunpack.c.l.b16 %v591
        %v1471 = vunpack.c.h.b16 %v591
        %v1472 = vunpack.c.l.b16 %v592
        %v1473 = vunpack.c.h.b16 %v592
        %v1474 = vunpack.c.l.b16 %v593
        %v1475 = vunpack.c.h.b16 %v593
        %v1476 = vunpack.c.l.b16 %v594
        %v1477 = vunpack.c.h.b16 %v594
        %v1478 = vunpack.c.l.b16 %v595
        %v1479 = vunpack.c.h.b16 %v595
        %v1480 = vunpack.c.l.b16 %v596
        %v1481 = vunpack.c.h.b16 %v596
        %v1482 = vunpack.c.l.b16 %v597
        %v1483 = vunpack.c.h.b16 %v597
        %v1484 = vunpack.c.l.b16 %v598
        %v1485 = vunpack.c.h.b16 %v598
        %v1486 = vunpack.c.l.b16 %v599
        %v1487 = vunpack.c.h.b16 %v599
        %v1488 = vunpack.c.l.b16 %v600
        %v1489 = vunpack.c.h.b16 %v600
        %v1490 = vunpack.c.l.b16 %v601
        %v1491 = vunpack.c.h.b16 %v601
        %v1492 = vunpack.c.l.b16 %v602
        %v1493 = vunpack.c.h.b16 %v602
        %v1494 = vunpack.c.l.b16 %v603
        %v1495 = vunpack.c.h.b16 %v603
        %v1496 = vunpack.c.l.b16 %v604
        %v1497 = vunpack.c.h.b16 %v604
        %v1498 = vunpack.c.l.b16 %v605
        %v1499 = vunpack.c.h.b16 %v605
        %v1500 = vunpack.c.l.b16 %v606
        %v1501 = vunpack.c.h.b16 %v606
        %v1502 = vunpack.c.l.b16 %v607
        %v1503 = vunpack.c.h.b16 %v607
        %v1504 = vunpack.c.l.b16 %v608
        %v1505 = vunpack.c.h.b16 %v608
        %v1506 = vunpack.c.l.b16 %v609
        %v1507 = vunpack.c.h.b16 %v609
        %v1508 = vunpack.c.l.b16 %v610
        %v1509 = vunpack.c.h.b16 %v610
        %v1510 = vunpack.c.l.b16 %v611
        %v1511 = vunpack.c.h.b16 %v611
        %v1512 = vunpack.c.l.b16 %v612
        %v1513 = vunpack.c.h.b16 %v612
        %v1514 = vunpack.c.l.b16 %v613
        %v1515 = vunpack.c.h.b16 %v613
        %v1516 = vunpack.c.l.b16 %v614
        %v1517 = vunpack.c.h.b16 %v614
        %v1518 = vunpack.c.l.b16 %v615
        %v1519 = vunpack.c.h.b16 %v615
        %v1520 = vunpack.c.l.b16 %v616
        %v1521 = vunpack.c.h.b16 %v616
        %v1522 = vunpack.c.l.b16 %v617
        %v1523 = vunpack.c.h.b16 %v617
        %v1524 = vunpack.c.l.b16 %v618
        %v1525 = vunpack.c.h.b16 %v618
        %v1526 = vunpack.c.l.b16 %v619
        %v1527 = vunpack.c.h.b16 %v619
        %v1528 = vunpack.c.l.b16 %v620
        %v1529 = vunpack.c.h.b16 %v620
        %v1530 = vunpack.c.l.b16 %v621
        %v1531 = vunpack.c.h.b16 %v621
        %v1532 = vunpack.c.l.b16 %v622
        %v1533 = vunpack.c.h.b16 %v622
        %v1534 = vunpack.c.l.b16 %v623
        %v1535 = vunpack.c.h.b16 %v623
        %v1536 = vunpack.c.l.b16 %v624
        %v1537 = vunpack.c.h.b16 %v624
        %v1538 = vunpack.c.l.b16 %v625
        %v1539 = vunpack.c.h.b16 %v625
        %v1540 = vunpack.c.l.b16 %v626
        %v1541 = vunpack.c.h.b16 %v626
        %v1542 = vunpack.c.l.b16 %v627
        %v1543 = vunpack.c.h.b16 %v627
        %v1544 = vunpack.c.l.b16 %v628
        %v1545 = vunpack.c.h.b16 %v628
        %v1546 = vunpack.c.l.b16 %v629
        %v1547 = vunpack.c.h.b16 %v629
        %v1548 = vunpack.c.l.b16 %v630
        %v1549 = vunpack.c.h.b16 %v630
        %v1550 = vunpack.c.l.b16 %v631
        %v1551 = vunpack.c.h.b16 %v631
        %v1552 = vunpack.c.l.b16 %v632
        %v1553 = vunpack.c.h.b16 %v632
        %v1554 = vunpack.c.l.b16 %v633
        %v1555 = vunpack.c.h.b16 %v633
        %v1556 = vunpack.c.l.b16 %v634
        %v1557 = vunpack.c.h.b16 %v634
        %v1558 = vunpack.c.l.b16 %v635
        %v1559 = vunpack.c.h.b16 %v635
        %v1560 = vunpack.c.l.b16 %v636
        %v1561 = vunpack.c.h.b16 %v636
        %v1562 = vunpack.c.l.b16 %v637
        %v1563 = vunpack.c.h.b16 %v637
        %v1564 = vunpack.c.l.b16 %v638
        %v1565 = vunpack.c.h.b16 %v638
        %v1566 = vunpack.c.l.b16 %v639
        %v1567 = vunpack.c.h.b16 %v639
        %v1568 = vunpack.c.l.b16 %v640
        %v1569 = vunpack.c.h.b16 %v640
        %v1570 = vunpack.c.l.b16 %v641
        %v1571 = vunpack.c.h.b16 %v641
        %v1572 = vunpack.c.l.b16 %v642
        %v1573 = vunpack.c.h.b16 %v642
        %v1574 = vunpack.c.l.b16 %v643
        %v1575 = vunpack.c.h.b16 %v643
        %v1576 = vunpack.c.l.b16 %v644
        %v1577 = vunpack.c.h.b16 %v644
        %v1578 = vunpack.c.l.b16 %v645
        %v1579 = vunpack.c.h.b16 %v645
        %v1580 = vunpack.c.l.b16 %v646
        %v1581 = vunpack.c.h.b16 %v646
        %v1582 = vunpack.c.l.b16 %v647
        %v1583 = vunpack.c.h.b16 %v647
        %v1584 = vunpack.c.l.b16 %v648
        %v1585 = vunpack.c.h.b16 %v648
        %v1586 = vunpack.c.l.b16 %v649
        %v1587 = vunpack.c.h.b16 %v649
        %v1588 = vunpack.c.l.b16 %v650
        %v1589 = vunpack.c.h.b16 %v650
        %v1590 = vunpack.c.l.b16 %v651
        %v1591 = vunpack.c.h.b16 %v651
        %v1592 = vunpack.c.l.b16 %v652
        %v1593 = vunpack.c.h.b16 %v652
        %v1594 = vunpack.c.l.b16 %v653
        %v1595 = vunpack.c.h.b16 %v653
        %v1596 = vunpack.c.l.b16 %v654
        %v1597 = vunpack.c.h.b16 %v654
        %v1598 = vunpack.c.l.b16 %v655
        %v1599 = vunpack.c.h.b16 %v655
        %v1600 = vunpack.c.l.b16 %v656
        %v1601 = vunpack.c.h.b16 %v656
        %v1602 = vunpack.c.l.b16 %v657
        %v1603 = vunpack.c.h.b16 %v657
        %v1604 = vunpack.c.l.b16 %v658
        %v1605 = vunpack.c.h.b16 %v658
        %v1606 = vunpack.c.l.b16 %v659
        %v1607 = vunpack.c.h.b16 %v659
        %v1608 = vunpack.c.l.b16 %v660
        %v1609 = vunpack.c.h.b16 %v660
        %v1610 = vunpack.c.l.b16 %v661
        %v1611 = vunpack.c.h.b16 %v661
        %v1612 = vunpack.c.l.b16 %v662
        %v1613 = vunpack.c.h.b16 %v662
        %v1614 = vunpack.c.l.b16 %v663
        %v1615 = vunpack.c.h.b16 %v663
        %v1616 = vunpack.c.l.b16 %v664
        %v1617 = vunpack.c.h.b16 %v664
        %v1618 = vunpack.c.l.b16 %v665
        %v1619 = vunpack.c.h.b16 %v665
        %v1620 = vunpack.c.l.b16 %v666
        %v1621 = vunpack.c.h.b16 %v666
        %v1622 = vunpack.c.l.b16 %v667
        %v1623 = vunpack.c.h.b16 %v667
        %v1624 = vunpack.c.l.b16 %v668
        %v1625 = vunpack.c.h.b16 %v668
        %v1626 = vunpack.c.l.b16 %v669
        %v1627 = vunpack.c.h.b16 %v669
        %v1628 = vunpack.c.l.b16 %v670
        %v1629 = vunpack.c.h.b16 %v670
        %v1630 = vunpack.c.l.b16 %v671
        %v1631 = vunpack.c.h.b16 %v671
        %v1632 = vunpack.c.l.b16 %v672
        %v1633 = vunpack.c.h.b16 %v672
        %v1634 = vunpack.c.l.b16 %v673
        %v1635 = vunpack.c.h.b16 %v673
        %v1636 = vunpack.c.l.b16 %v674
        %v1637 = vunpack.c.h.b16 %v674
        %v1638 = vunpack.c.l.b16 %v675
        %v1639 = vunpack.c.h.b16 %v675
        %v1640 = vunpack.c.l.b16 %v676
        %v1641 = vunpack.c.h.b16 %v676
        %v1642 = vunpack.c.l.b16 %v677
        %v1643 = vunpack.c.h.b16 %v677
        %v1644 = vunpack.c.l.b16 %v678
        %v1645 = vunpack.c.h.b16 %v678
        %v1646 = vunpack.c.l.b16 %v679
        %v1647 = vunpack.c.h.b16 %v679
        %v1648 = vunpack.c.l.b16 %v680
        %v1649 = vunpack.c.h.b16 %v680
        %v1650 = vunpack.c.l.b16 %v681
        %v1651 = vunpack.c.h.b16 %v681
        %v1652 = vunpack.c.l.b16 %v682
        %v1653 = vunpack.c.h.b16 %v682
        %v1654 = vunpack.c.l.b16 %v683
        %v1655 = vunpack.c.h.b16 %v683
        %v1656 = vunpack.c.l.b16 %v684
        %v1657 = vunpack.c.h.b16 %v684
        %v1658 = vunpack.c.l.b16 %v685
        %v1659 = vunpack.c.h.b16 %v685
        %v1660 = vunpack.c.l.b16 %v686
        %v1661 = vunpack.c.h.b16 %v686
        %v1662 = vunpack.c.l.b16 %v687
        %v1663 = vunpack.c.h.b16 %v687
        %v1664 = vunpack.c.l.b16 %v688
        %v1665 = vunpack.c.h.b16 %v688
        %v1666 = vunpack.c.l.b16 %v689
        %v1667 = vunpack.c.h.b16 %v689
        %v1668 = vunpack.c.l.b16 %v690
        %v1669 = vunpack.c.h.b16 %v690
        %v1670 = vunpack.c.l.b16 %v691
        %v1671 = vunpack.c.h.b16 %v691
        %v1672 = vunpack.c.l.b16 %v692
        %v1673 = vunpack.c.h.b16 %v692
        %v1674 = vunpack.c.l.b16 %v693
        %v1675 = vunpack.c.h.b16 %v693
        %v1676 = vunpack.c.l.b16 %v694
        %v1677 = vunpack.c.h.b16 %v694
        %v1678 = vunpack.c.l.b16 %v695
        %v1679 = vunpack.c.h.b16 %v695
        %v1680 = vunpack.c.l.b16 %v696
        %v1681 = vunpack.c.h.b16 %v696
        %v1682 = vunpack.c.l.b16 %v697
        %v1683 = vunpack.c.h.b16 %v697
        %v1684 = vunpack.c.l.b16 %v698
        %v1685 = vunpack.c.h.b16 %v698
        %v1686 = vunpack.c.l.b16 %v699
        %v1687 = vunpack.c.h.b16 %v699
        %v1688 = vunpack.c.l.b16 %v700
        %v1689 = vunpack.c.h.b16 %v700
        %v1690 = vunpack.c.l.b16 %v701
        %v1691 = vunpack.c.h.b16 %v701
        %v1692 = vunpack.c.l.b16 %v702
        %v1693 = vunpack.c.h.b16 %v702
        %v1694 = vunpack.c.l.b16 %v703
        %v1695 = vunpack.c.h.b16 %v703
        %v1696 = vunpack.c.l.b16 %v704
        %v1697 = vunpack.c.h.b16 %v704
        %v1698 = vunpack.c.l.b16 %v705
        %v1699 = vunpack.c.h.b16 %v705
        %v1700 = vunpack.c.l.b16 %v706
        %v1701 = vunpack.c.h.b16 %v706
        %v1702 = vunpack.c.l.b16 %v707
        %v1703 = vunpack.c.h.b16 %v707
        %v1704 = vunpack.c.l.b16 %v708
        %v1705 = vunpack.c.h.b16 %v708
        %v1706 = vunpack.c.l.b16 %v709
        %v1707 = vunpack.c.h.b16 %v709
        %v1708 = vunpack.c.l.b16 %v710
        %v1709 = vunpack.c.h.b16 %v710
        %v1710 = vunpack.c.l.b16 %v711
        %v1711 = vunpack.c.h.b16 %v711
        %v1712 = vunpack.c.l.b16 %v712
        %v1713 = vunpack.c.h.b16 %v712
        %v1714 = vunpack.c.l.b16 %v713
        %v1715 = vunpack.c.h.b16 %v713
        %v1716 = vunpack.c.l.b16 %v714
        %v1717 = vunpack.c.h.b16 %v714
        %v1718 = vunpack.c.l.b16 %v715
        %v1719 = vunpack.c.h.b16 %v715
        %v1720 = vunpack.c.l.b16 %v716
        %v1721 = vunpack.c.h.b16 %v716
        %v1722 = vunpack.c.l.b16 %v717
        %v1723 = vunpack.c.h.b16 %v717
        %v1724 = vunpack.c.l.b16 %v718
        %v1725 = vunpack.c.h.b16 %v718
        %v1726 = vunpack.c.l.b16 %v719
        %v1727 = vunpack.c.h.b16 %v719
        %v1728 = vunpack.c.l.b16 %v720
        %v1729 = vunpack.c.h.b16 %v720
        %v1730 = vunpack.c.l.b16 %v721
        %v1731 = vunpack.c.h.b16 %v721
        %v1732 = vunpack.c.l.b16 %v722
        %v1733 = vunpack.c.h.b16 %v722
        %v1734 = vunpack.c.l.b16 %v723
        %v1735 = vunpack.c.h.b16 %v723
        %v1736 = vunpack.c.l.b16 %v724
        %v1737 = vunpack.c.h.b16 %v724
        %v1738 = vunpack.c.l.b16 %v725
        %v1739 = vunpack.c.h.b16 %v725
        %v1740 = vunpack.c.l.b16 %v726
        %v1741 = vunpack.c.h.b16 %v726
        %v1742 = vunpack.c.l.b16 %v727
        %v1743 = vunpack.c.h.b16 %v727
        %v1744 = vunpack.c.l.b16 %v728
        %v1745 = vunpack.c.h.b16 %v728
        %v1746 = vunpack.c.l.b16 %v729
        %v1747 = vunpack.c.h.b16 %v729
        %v1748 = vunpack.c.l.b16 %v730
        %v1749 = vunpack.c.h.b16 %v730
        %v1750 = vunpack.c.l.b16 %v731
        %v1751 = vunpack.c.h.b16 %v731
        %v1752 = vunpack.c.l.b16 %v732
        %v1753 = vunpack.c.h.b16 %v732
        %v1754 = vunpack.c.l.b16 %v733
        %v1755 = vunpack.c.h.b16 %v733
        %v1756 = vunpack.c.l.b16 %v734
        %v1757 = vunpack.c.h.b16 %v734
        %v1758 = vunpack.c.l.b16 %v735
        %v1759 = vunpack.c.h.b16 %v735
        %v1760 = vunpack.c.l.b16 %v736
        %v1761 = vunpack.c.h.b16 %v736
        %v1762 = vunpack.c.l.b16 %v737
        %v1763 = vunpack.c.h.b16 %v737
        %v1764 = vunpack.c.l.b16 %v738
        %v1765 = vunpack.c.h.b16 %v738
        %v1766 = vunpack.c.l.b16 %v739
        %v1767 = vunpack.c.h.b16 %v739
        %v1768 = vunpack.c.l.b16 %v740
        %v1769 = vunpack.c.h.b16 %v740
        %v1770 = vunpack.c.l.b16 %v741
        %v1771 = vunpack.c.h.b16 %v741
        %v1772 = vunpack.c.l.b16 %v742
        %v1773 = vunpack.c.h.b16 %v742
        %v1774 = vunpack.c.l.b16 %v743
        %v1775 = vunpack.c.h.b16 %v743
        %v1776 = vunpack.c.l.b16 %v744
        %v1777 = vunpack.c.h.b16 %v744
        %v1778 = vunpack.c.l.b16 %v745
        %v1779 = vunpack.c.h.b16 %v745
        %v1780 = vunpack.c.l.b16 %v746
        %v1781 = vunpack.c.h.b16 %v746
        %v1782 = vunpack.c.l.b16 %v747
        %v1783 = vunpack.c.h.b16 %v747
        %v1784 = vunpack.c.l.b16 %v748
        %v1785 = vunpack.c.h.b16 %v748
        %v1786 = vunpack.c.l.b16 %v749
        %v1787 = vunpack.c.h.b16 %v749
        %v1788 = vunpack.c.l.b16 %v750
        %v1789 = vunpack.c.h.b16 %v750
        %v1790 = vunpack.c.l.b16 %v751
        %v1791 = vunpack.c.h.b16 %v751
        %v1792 = vunpack.c.l.b16 %v752
        %v1793 = vunpack.c.h.b16 %v752
        %v1794 = vunpack.c.l.b16 %v753
        %v1795 = vunpack.c.h.b16 %v753
        %v1796 = vunpack.c.l.b16 %v754
        %v1797 = vunpack.c.h.b16 %v754
        %v1798 = vunpack.c.l.b16 %v755
        %v1799 = vunpack.c.h.b16 %v755
        %v1800 = vunpack.c.l.b16 %v756
        %v1801 = vunpack.c.h.b16 %v756
        %v1802 = vunpack.c.l.b16 %v757
        %v1803 = vunpack.c.h.b16 %v757
        %v1804 = vunpack.c.l.b16 %v758
        %v1805 = vunpack.c.h.b16 %v758
        %v1806 = vunpack.c.l.b16 %v759
        %v1807 = vunpack.c.h.b16 %v759
        %v1808 = vunpack.c.l.b16 %v760
        %v1809 = vunpack.c.h.b16 %v760
        %v1810 = vunpack.c.l.b16 %v761
        %v1811 = vunpack.c.h.b16 %v761
        %v1812 = vunpack.c.l.b16 %v762
        %v1813 = vunpack.c.h.b16 %v762
        %v1814 = vunpack.c.l.b16 %v763
        %v1815 = vunpack.c.h.b16 %v763
        %v1816 = vunpack.c.l.b16 %v764
        %v1817 = vunpack.c.h.b16 %v764
        %v1818 = vunpack.c.l.b16 %v765
        %v1819 = vunpack.c.h.b16 %v765
        %v1820 = vunpack.c.l.b16 %v766
        %v1821 = vunpack.c.h.b16 %v766
        %v1822 = vunpack.c.l.b16 %v767
        %v1823 = vunpack.c.h.b16 %v767
        %v1824 = vunpack.c.l.b16 %v768
        %v1825 = vunpack.c.h.b16 %v768
        %v1826 = vunpack.c.l.b16 %v769
        %v1827 = vunpack.c.h.b16 %v769
        %v1828 = vunpack.c.l.b16 %v770
        %v1829 = vunpack.c.h.b16 %v770
        %v1830 = vunpack.c.l.b16 %v771
        %v1831 = vunpack.c.h.b16 %v771
        %v1832 = vunpack.c.l.b16 %v772
        %v1833 = vunpack.c.h.b16 %v772
        %v1834 = vunpack.c.l.b16 %v773
        %v1835 = vunpack.c.h.b16 %v773
        %v1836 = vunpack.c.l.b16 %v774
        %v1837 = vunpack.c.h.b16 %v774
        %v1838 = vunpack.c.l.b16 %v775
        %v1839 = vunpack.c.h.b16 %v775
        %v1840 = vunpack.c.l.b16 %v776
        %v1841 = vunpack.c.h.b16 %v776
        %v1842 = vunpack.c.l.b16 %v777
        %v1843 = vunpack.c.h.b16 %v777
        %v1844 = vunpack.c.l.b16 %v778
        %v1845 = vunpack.c.h.b16 %v778
        %v1846 = vunpack.c.l.b16 %v779
        %v1847 = vunpack.c.h.b16 %v779
        %v1848 = vunpack.c.l.b16 %v780
        %v1849 = vunpack.c.h.b16 %v780
        %v1850 = vunpack.c.l.b16 %v781
        %v1851 = vunpack.c.h.b16 %v781
        %v1852 = vunpack.c.l.b16 %v782
        %v1853 = vunpack.c.h.b16 %v782
        %v1854 = vunpack.c.l.b16 %v783
        %v1855 = vunpack.c.h.b16 %v783
        %v1856 = vunpack.c.l.b16 %v784
        %v1857 = vunpack.c.h.b16 %v784
        %v1858 = vunpack.c.l.b16 %v785
        %v1859 = vunpack.c.h.b16 %v785
        %v1860 = vunpack.c.l.b16 %v786
        %v1861 = vunpack.c.h.b16 %v786
        %v1862 = vunpack.c.l.b16 %v787
        %v1863 = vunpack.c.h.b16 %v787
        %v1864 = vunpack.c.l.b16 %v788
        %v1865 = vunpack.c.h.b16 %v788
        %v1866 = vunpack.c.l.b16 %v789
        %v1867 = vunpack.c.h.b16 %v789
        %v1868 = vunpack.c.l.b16 %v790
        %v1869 = vunpack.c.h.b16 %v790
        %v1870 = vunpack.c.l.b16 %v791
        %v1871 = vunpack.c.h.b16 %v791
        %v1872 = vunpack.c.l.b16 %v792
        %v1873 = vunpack.c.h.b16 %v792
        %v1874 = vunpack.c.l.b16 %v793
        %v1875 = vunpack.c.h.b16 %v793
        %v1876 = vunpack.c.l.b16 %v794
        %v1877 = vunpack.c.h.b16 %v794
        %v1878 = vunpack.c.l.b16 %v795
        %v1879 = vunpack.c.h.b16 %v795
        %v1880 = vunpack.c.l.b16 %v796
        %v1881 = vunpack.c.h.b16 %v796
        %v1882 = vunpack.c.l.b16 %v797
        %v1883 = vunpack.c.h.b16 %v797
        %v1884 = vunpack.c.l.b16 %v798
        %v1885 = vunpack.c.h.b16 %v798
        %v1886 = vunpack.c.l.b16 %v799
        %v1887 = vunpack.c.h.b16 %v799
        %v1888 = vunpack.c.l.b16 %v800
        %v1889 = vunpack.c.h.b16 %v800
        %v1890 = vunpack.c.l.b16 %v801
        %v1891 = vunpack.c.h.b16 %v801
        %v1892 = vunpack.c.l.b16 %v802
        %v1893 = vunpack.c.h.b16 %v802
        %v1894 = vunpack.c.l.b16 %v803
        %v1895 = vunpack.c.h.b16 %v803
        %v1896 = vunpack.c.l.b16 %v804
        %v1897 = vunpack.c.h.b16 %v804
        %v1898 = vunpack.c.l.b16 %v805
        %v1899 = vunpack.c.h.b16 %v805
        %v1900 = vunpack.c.l.b16 %v806
        %v1901 = vunpack.c.h.b16 %v806
        %v1902 = vunpack.c.l.b16 %v807
        %v1903 = vunpack.c.h.b16 %v807
        %v1904 = vunpack.c.l.b16 %v808
        %v1905 = vunpack.c.h.b16 %v808
        %v1906 = vunpack.c.l.b16 %v809
        %v1907 = vunpack.c.h.b16 %v809
        %v1908 = vunpack.c.l.b16 %v810
        %v1909 = vunpack.c.h.b16 %v810
        %v1910 = vunpack.c.l.b16 %v811
        %v1911 = vunpack.c.h.b16 %v811
        %v1912 = vunpack.c.l.b16 %v812
        %v1913 = vunpack.c.h.b16 %v812
        %v1914 = vunpack.c.l.b16 %v813
        %v1915 = vunpack.c.h.b16 %v813
        %v1916 = vunpack.c.l.b16 %v814
        %v1917 = vunpack.c.h.b16 %v814
        %v1918 = vunpack.c.l.b16 %v815
        %v1919 = vunpack.c.h.b16 %v815
        %v1920 = vunpack.c.l.b16 %v816
        %v1921 = vunpack.c.h.b16 %v816
        %v1922 = vunpack.c.l.b16 %v817
        %v1923 = vunpack.c.h.b16 %v817
        %v1924 = vunpack.c.l.b16 %v818
        %v1925 = vunpack.c.h.b16 %v818
        %v1926 = vunpack.c.l.b16 %v819
        %v1927 = vunpack.c.h.b16 %v819
        %v1928 = vunpack.c.l.b16 %v820
        %v1929 = vunpack.c.h.b16 %v820
        %v1930 = vunpack.c.l.b16 %v821
        %v1931 = vunpack.c.h.b16 %v821
        %v1932 = vunpack.c.l.b16 %v822
        %v1933 = vunpack.c.h.b16 %v822
        %v1934 = vunpack.c.l.b16 %v823
        %v1935 = vunpack.c.h.b16 %v823
        %v1936 = vunpack.c.l.b16 %v824
        %v1937 = vunpack.c.h.b16 %v824
        %v1938 = vunpack.c.l.b16 %v825
        %v1939 = vunpack.c.h.b16 %v825
        %v1940 = vunpack.c.l.b16 %v826
        %v1941 = vunpack.c.h.b16 %v826
        %v1942 = vunpack.c.l.b16 %v827
        %v1943 = vunpack.c.h.b16 %v827
        %v1944 = vunpack.c.l.b16 %v828
        %v1945 = vunpack.c.h.b16 %v828
        %v1946 = vunpack.c.l.b16 %v829
        %v1947 = vunpack.c.h.b16 %v829
        %v1948 = vunpack.c.l.b16 %v830
        %v1949 = vunpack.c.h.b16 %v830
        %v1950 = vunpack.c.l.b16 %v831
        %v1951 = vunpack.c.h.b16 %v831
        %v1952 = vunpack.c.l.b16 %v832
        %v1953 = vunpack.c.h.b16 %v832
        %v1954 = vunpack.c.l.b16 %v833
        %v1955 = vunpack.c.h.b16 %v833
        %v1956 = vunpack.c.l.b16 %v834
        %v1957 = vunpack.c.h.b16 %v834
        %v1958 = vunpack.c.l.b16 %v835
        %v1959 = vunpack.c.h.b16 %v835
        %v1960 = vunpack.c.l.b16 %v836
        %v1961 = vunpack.c.h.b16 %v836
        %v1962 = vunpack.c.l.b16 %v837
        %v1963 = vunpack.c.h.b16 %v837
        %v1964 = vunpack.c.l.b16 %v838
        %v1965 = vunpack.c.h.b16 %v838
        %v1966 = vunpack.c.l.b16 %v839
        %v1967 = vunpack.c.h.b16 %v839
        %v1968 = vunpack.c.l.b16 %v840
        %v1969 = vunpack.c.h.b16 %v840
        %v1970 = vunpack.c.l.b16 %v841
        %v1971 = vunpack.c.h.b16 %v841
        %v1972 = vunpack.c.l.b16 %v842
        %v1973 = vunpack.c.h.b16 %v842
        %v1974 = vunpack.c.l.b16 %v843
        %v1975 = vunpack.c.h.b16 %v843
        %v1976 = vunpack.c.l.b16 %v844
        %v1977 = vunpack.c.h.b16 %v844
        %v1978 = vunpack.c.l.b16 %v845
        %v1979 = vunpack.c.h.b16 %v845
        %v1980 = vunpack.c.l.b16 %v846
        %v1981 = vunpack.c.h.b16 %v846
        %v1982 = vunpack.c.l.b16 %v847
        %v1983 = vunpack.c.h.b16 %v847
        %v1984 = vunpack.c.l.b16 %v848
        %v1985 = vunpack.c.h.b16 %v848
        %v1986 = vunpack.c.l.b16 %v849
        %v1987 = vunpack.c.h.b16 %v849
        %v1988 = vunpack.c.l.b16 %v850
        %v1989 = vunpack.c.h.b16 %v850
        %v1990 = vunpack.c.l.b16 %v851
        %v1991 = vunpack.c.h.b16 %v851
        %v1992 = vunpack.c.l.b16 %v852
        %v1993 = vunpack.c.h.b16 %v852
        %v1994 = vunpack.c.l.b16 %v853
        %v1995 = vunpack.c.h.b16 %v853
        %v1996 = vunpack.c.l.b16 %v854
        %v1997 = vunpack.c.h.b16 %v854
        %v1998 = vunpack.c.l.b16 %v855
        %v1999 = vunpack.c.h.b16 %v855
        %v2000 = vunpack.c.l.b16 %v856
        %v2001 = vunpack.c.h.b16 %v856
        %v2002 = vunpack.c.l.b16 %v857
        %v2003 = vunpack.c.h.b16 %v857
        %v2004 = vunpack.c.l.b16 %v858
        %v2005 = vunpack.c.h.b16 %v858
        %v2006 = vunpack.c.l.b16 %v859
        %v2007 = vunpack.c.h.b16 %v859
        %v2008 = vunpack.c.l.b16 %v860
        %v2009 = vunpack.c.h.b16 %v860
        %v2010 = vunpack.c.l.b16 %v861
        %v2011 = vunpack.c.h.b16 %v861
        %v2012 = vunpack.c.l.b16 %v862
        %v2013 = vunpack.c.h.b16 %v862
        %v2014 = vunpack.c.l.b16 %v863
        %v2015 = vunpack.c.h.b16 %v863
        %v2016 = vpack.c.b16 %v1260, %v1248
        %v2017 = vpack.c.b16 %v1261, %v1249
        %v2018 = vpack.c.b16 %v1262, %v1250
        %v2019 = vpack.c.b16 %v1263, %v1251
        %v2020 = vpack.c.b16 %v1264, %v1252
        %v2021 = vpack.c.b16 %v1265, %v1253
        %v2022 = vpack.c.b16 %v1266, %v1254
        %v2023 = vpack.c.b16 %v1267, %v1255
        %v2024 = vpack.c.b16 %v1268, %v1256
        %v2025 = vpack.c.b16 %v1269, %v1257
        %v2026 = vpack.c.b16 %v1270, %v1258
        %v2027 = vpack.c.b16 %v1271, %v1259
        %v2028 = vpack.c.b16 %v1284, %v1272
        %v2029 = vpack.c.b16 %v1285, %v1273
        %v2030 = vpack.c.b16 %v1286, %v1274
        %v2031 = vpack.c.b16 %v1287, %v1275
        %v2032 = vpack.c.b16 %v1288, %v1276
        %v2033 = vpack.c.b16 %v1289, %v1277
        %v2034 = vpack.c.b16 %v1290, %v1278
        %v2035 = vpack.c.b16 %v1291, %v1279
        %v2036 = vpack.c.b16 %v1292, %v1280
        %v2037 = vpack.c.b16 %v1293, %v1281
        %v2038 = vpack.c.b16 %v1294, %v1282
        %v2039 = vpack.c.b16 %v1295, %v1283
        %v2040 = vpack.c.b16 %v1308, %v1296
        %v2041 = vpack.c.b16 %v1309, %v1297
        %v2042 = vpack.c.b16 %v1310, %v1298
        %v2043 = vpack.c.b16 %v1311, %v1299
        %v2044 = vpack.c.b16 %v1312, %v1300
        %v2045 = vpack.c.b16 %v1313, %v1301
        %v2046 = vpack.c.b16 %v1314, %v1302
        %v2047 = vpack.c.b16 %v1315, %v1303
        %v2048 = vpack.c.b16 %v1316, %v1304
        %v2049 = vpack.c.b16 %v1317, %v1305
        %v2050 = vpack.c.b16 %v1318, %v1306
        %v2051 = vpack.c.b16 %v1319, %v1307
        %v2052 = vpack.c.b16 %v1332, %v1320
        %v2053 = vpack.c.b16 %v1333, %v1321
        %v2054 = vpack.c.b16 %v1334, %v1322
        %v2055 = vpack.c.b16 %v1335, %v1323
        %v2056 = vpack.c.b16 %v1336, %v1324
        %v2057 = vpack.c.b16 %v1337, %v1325
        %v2058 = vpack.c.b16 %v1338, %v1326
        %v2059 = vpack.c.b16 %v1339, %v1327
        %v2060 = vpack.c.b16 %v1340, %v1328
        %v2061 = vpack.c.b16 %v1341, %v1329
        %v2062 = vpack.c.b16 %v1342, %v1330
        %v2063 = vpack.c.b16 %v1343, %v1331
        %v2064 = vpack.c.b16 %v1356, %v1344
        %v2065 = vpack.c.b16 %v1357, %v1345
        %v2066 = vpack.c.b16 %v1358, %v1346
        %v2067 = vpack.c.b16 %v1359, %v1347
        %v2068 = vpack.c.b16 %v1360, %v1348
        %v2069 = vpack.c.b16 %v1361, %v1349
        %v2070 = vpack.c.b16 %v1362, %v1350
        %v2071 = vpack.c.b16 %v1363, %v1351
        %v2072 = vpack.c.b16 %v1364, %v1352
        %v2073 = vpack.c.b16 %v1365, %v1353
        %v2074 = vpack.c.b16 %v1366, %v1354
        %v2075 = vpack.c.b16 %v1367, %v1355
        %v2076 = vpack.c.b16 %v1380, %v1368
        %v2077 = vpack.c.b16 %v1381, %v1369
        %v2078 = vpack.c.b16 %v1382, %v1370
        %v2079 = vpack.c.b16 %v1383, %v1371
        %v2080 = vpack.c.b16 %v1384, %v1372
        %v2081 = vpack.c.b16 %v1385, %v1373
        %v2082 = vpack.c.b16 %v1386, %v1374
        %v2083 = vpack.c.b16 %v1387, %v1375
        %v2084 = vpack.c.b16 %v1388, %v1376
        %v2085 = vpack.c.b16 %v1389, %v1377
        %v2086 = vpack.c.b16 %v1390, %v1378
        %v2087 = vpack.c.b16 %v1391, %v1379
        %v2088 = vpack.c.b16 %v1404, %v1392
        %v2089 = vpack.c.b16 %v1405, %v1393
        %v2090 = vpack.c.b16 %v1406, %v1394
        %v2091 = vpack.c.b16 %v1407, %v1395
        %v2092 = vpack.c.b16 %v1408, %v1396
        %v2093 = vpack.c.b16 %v1409, %v1397
        %v2094 = vpack.c.b16 %v1410, %v1398
        %v2095 = vpack.c.b16 %v1411, %v1399
        %v2096 = vpack.c.b16 %v1412, %v1400
        %v2097 = vpack.c.b16 %v1413, %v1401
        %v2098 = vpack.c.b16 %v1414, %v1402
        %v2099 = vpack.c.b16 %v1415, %v1403
        %v2100 = vpack.c.b16 %v1428, %v1416
        %v2101 = vpack.c.b16 %v1429, %v1417
        %v2102 = vpack.c.b16 %v1430, %v1418
        %v2103 = vpack.c.b16 %v1431, %v1419
        %v2104 = vpack.c.b16 %v1432, %v1420
        %v2105 = vpack.c.b16 %v1433, %v1421
        %v2106 = vpack.c.b16 %v1434, %v1422
        %v2107 = vpack.c.b16 %v1435, %v1423
        %v2108 = vpack.c.b16 %v1436, %v1424
        %v2109 = vpack.c.b16 %v1437, %v1425
        %v2110 = vpack.c.b16 %v1438, %v1426
        %v2111 = vpack.c.b16 %v1439, %v1427
        %v2112 = vpack.c.b16 %v1452, %v1440
        %v2113 = vpack.c.b16 %v1453, %v1441
        %v2114 = vpack.c.b16 %v1454, %v1442
        %v2115 = vpack.c.b16 %v1455, %v1443
        %v2116 = vpack.c.b16 %v1456, %v1444
        %v2117 = vpack.c.b16 %v1457, %v1445
        %v2118 = vpack.c.b16 %v1458, %v1446
        %v2119 = vpack.c.b16 %v1459, %v1447
        %v2120 = vpack.c.b16 %v1460, %v1448
        %v2121 = vpack.c.b16 %v1461, %v1449
        %v2122 = vpack.c.b16 %v1462, %v1450
        %v2123 = vpack.c.b16 %v1463, %v1451
        %v2124 = vpack.c.b16 %v1476, %v1464
        %v2125 = vpack.c.b16 %v1477, %v1465
        %v2126 = vpack.c.b16 %v1478, %v1466
        %v2127 = vpack.c.b16 %v1479, %v1467
        %v2128 = vpack.c.b16 %v1480, %v1468
        %v2129 = vpack.c.b16 %v1481, %v1469
        %v2130 = vpack.c.b16 %v1482, %v1470
        %v2131 = vpack.c.b16 %v1483, %v1471
        %v2132 = vpack.c.b16 %v1484, %v1472
        %v2133 = vpack.c.b16 %v1485, %v1473
        %v2134 = vpack.c.b16 %v1486, %v1474
        %v2135 = vpack.c.b16 %v1487, %v1475
        %v2136 = vpack.c.b16 %v1500, %v1488
        %v2137 = vpack.c.b16 %v1501, %v1489
        %v2138 = vpack.c.b16 %v1502, %v1490
        %v2139 = vpack.c.b16 %v1503, %v1491
        %v2140 = vpack.c.b16 %v1504, %v1492
        %v2141 = vpack.c.b16 %v1505, %v1493
        %v2142 = vpack.c.b16 %v1506, %v1494
        %v2143 = vpack.c.b16 %v1507, %v1495
        %v2144 = vpack.c.b16 %v1508, %v1496
        %v2145 = vpack.c.b16 %v1509, %v1497
        %v2146 = vpack.c.b16 %v1510, %v1498
        %v2147 = vpack.c.b16 %v1511, %v1499
        %v2148 = vpack.c.b16 %v1524, %v1512
        %v2149 = vpack.c.b16 %v1525, %v1513
        %v2150 = vpack.c.b16 %v1526, %v1514
        %v2151 = vpack.c.b16 %v1527, %v1515
        %v2152 = vpack.c.b16 %v1528, %v1516
        %v2153 = vpack.c.b16 %v1529, %v1517
        %v2154 = vpack.c.b16 %v1530, %v1518
        %v2155 = vpack.c.b16 %v1531, %v1519
        %v2156 = vpack.c.b16 %v1532, %v1520
        %v2157 = vpack.c.b16 %v1533, %v1521
        %v2158 = vpack.c.b16 %v1534, %v1522
        %v2159 = vpack.c.b16 %v1535, %v1523
        %v2160 = vpack.c.b16 %v1548, %v1536
        %v2161 = vpack.c.b16 %v1549, %v1537
        %v2162 = vpack.c.b16 %v1550, %v1538
        %v2163 = vpack.c.b16 %v1551, %v1539
        %v2164 = vpack.c.b16 %v1552, %v1540
        %v2165 = vpack.c.b16 %v1553, %v1541
        %v2166 = vpack.c.b16 %v1554, %v1542
        %v2167 = vpack.c.b16 %v1555, %v1543
        %v2168 = vpack.c.b16 %v1556, %v1544
        %v2169 = vpack.c.b16 %v1557, %v1545
        %v2170 = vpack.c.b16 %v1558, %v1546
        %v2171 = vpack.c.b16 %v1559, %v1547
        %v2172 = vpack.c.b16 %v1572, %v1560
        %v2173 = vpack.c.b16 %v1573, %v1561
        %v2174 = vpack.c.b16 %v1574, %v1562
        %v2175 = vpack.c.b16 %v1575, %v1563
        %v2176 = vpack.c.b16 %v1576, %v1564
        %v2177 = vpack.c.b16 %v1577, %v1565
        %v2178 = vpack.c.b16 %v1578, %v1566
        %v2179 = vpack.c.b16 %v1579, %v1567
        %v2180 = vpack.c.b16 %v1580, %v1568
        %v2181 = vpack.c.b16 %v1581, %v1569
        %v2182 = vpack.c.b16 %v1582, %v1570
        %v2183 = vpack.c.b16 %v1583, %v1571
        %v2184 = vpack.c.b16 %v1596, %v1584
        %v2185 = vpack.c.b16 %v1597, %v1585
        %v2186 = vpack.c.b16 %v1598, %v1586
        %v2187 = vpack.c.b16 %v1599, %v1587
        %v2188 = vpack.c.b16 %v1600, %v1588
        %v2189 = vpack.c.b16 %v1601, %v1589
        %v2190 = vpack.c.b16 %v1602, %v1590
        %v2191 = vpack.c.b16 %v1603, %v1591
        %v2192 = vpack.c.b16 %v1604, %v1592
        %v2193 = vpack.c.b16 %v1605, %v1593
        %v2194 = vpack.c.b16 %v1606, %v1594
        %v2195 = vpack.c.b16 %v1607, %v1595
        %v2196 = vpack.c.b16 %v1620, %v1608
        %v2197 = vpack.c.b16 %v1621, %v1609
        %v2198 = vpack.c.b16 %v1622, %v1610
        %v2199 = vpack.c.b16 %v1623, %v1611
        %v2200 = vpack.c.b16 %v1624, %v1612
        %v2201 = vpack.c.b16 %v1625, %v1613
        %v2202 = vpack.c.b16 %v1626, %v1614
        %v2203 = vpack.c.b16 %v1627, %v1615
        %v2204 = vpack.c.b16 %v1628, %v1616
        %v2205 = vpack.c.b16 %v1629, %v1617
        %v2206 = vpack.c.b16 %v1630, %v1618
        %v2207 = vpack.c.b16 %v1631, %v1619
        %v2208 = vpack.c.b16 %v1644, %v1632
        %v2209 = vpack.c.b16 %v1645, %v1633
        %v2210 = vpack.c.b16 %v1646, %v1634
        %v2211 = vpack.c.b16 %v1647, %v1635
        %v2212 = vpack.c.b16 %v1648, %v1636
        %v2213 = vpack.c.b16 %v1649, %v1637
        %v2214 = vpack.c.b16 %v1650, %v1638
        %v2215 = vpack.c.b16 %v1651, %v1639
        %v2216 = vpack.c.b16 %v1652, %v1640
        %v2217 = vpack.c.b16 %v1653, %v1641
        %v2218 = vpack.c.b16 %v1654, %v1642
        %v2219 = vpack.c.b16 %v1655, %v1643
        %v2220 = vpack.c.b16 %v1668, %v1656
        %v2221 = vpack.c.b16 %v1669, %v1657
        %v2222 = vpack.c.b16 %v1670, %v1658
        %v2223 = vpack.c.b16 %v1671, %v1659
        %v2224 = vpack.c.b16 %v1672, %v1660
        %v2225 = vpack.c.b16 %v1673, %v1661
        %v2226 = vpack.c.b16 %v1674, %v1662
        %v2227 = vpack.c.b16 %v1675, %v1663
        %v2228 = vpack.c.b16 %v1676, %v1664
        %v2229 = vpack.c.b16 %v1677, %v1665
        %v2230 = vpack.c.b16 %v1678, %v1666
        %v2231 = vpack.c.b16 %v1679, %v1667
        %v2232 = vpack.c.b16 %v1692, %v1680
        %v2233 = vpack.c.b16 %v1693, %v1681
        %v2234 = vpack.c.b16 %v1694, %v1682
        %v2235 = vpack.c.b16 %v1695, %v1683
        %v2236 = vpack.c.b16 %v1696, %v1684
        %v2237 = vpack.c.b16 %v1697, %v1685
        %v2238 = vpack.c.b16 %v1698, %v1686
        %v2239 = vpack.c.b16 %v1699, %v1687
        %v2240 = vpack.c.b16 %v1700, %v1688
        %v2241 = vpack.c.b16 %v1701, %v1689
        %v2242 = vpack.c.b16 %v1702, %v1690
        %v2243 = vpack.c.b16 %v1703, %v1691
        %v2244 = vpack.c.b16 %v1716, %v1704
        %v2245 = vpack.c.b16 %v1717, %v1705
        %v2246 = vpack.c.b16 %v1718, %v1706
        %v2247 = vpack.c.b16 %v1719, %v1707
        %v2248 = vpack.c.b16 %v1720, %v1708
        %v2249 = vpack.c.b16 %v1721, %v1709
        %v2250 = vpack.c.b16 %v1722, %v1710
        %v2251 = vpack.c.b16 %v1723, %v1711
        %v2252 = vpack.c.b16 %v1724, %v1712
        %v2253 = vpack.c.b16 %v1725, %v1713
        %v2254 = vpack.c.b16 %v1726, %v1714
        %v2255 = vpack.c.b16 %v1727, %v1715
        %v2256 = vpack.c.b16 %v1740, %v1728
        %v2257 = vpack.c.b16 %v1741, %v1729
        %v2258 = vpack.c.b16 %v1742, %v1730
        %v2259 = vpack.c.b16 %v1743, %v1731
        %v2260 = vpack.c.b16 %v1744, %v1732
        %v2261 = vpack.c.b16 %v1745, %v1733
        %v2262 = vpack.c.b16 %v1746, %v1734
        %v2263 = vpack.c.b16 %v1747, %v1735
        %v2264 = vpack.c.b16 %v1748, %v1736
        %v2265 = vpack.c.b16 %v1749, %v1737
        %v2266 = vpack.c.b16 %v1750, %v1738
        %v2267 = vpack.c.b16 %v1751, %v1739
        %v2268 = vpack.c.b16 %v1764, %v1752
        %v2269 = vpack.c.b16 %v1765, %v1753
        %v2270 = vpack.c.b16 %v1766, %v1754
        %v2271 = vpack.c.b16 %v1767, %v1755
        %v2272 = vpack.c.b16 %v1768, %v1756
        %v2273 = vpack.c.b16 %v1769, %v1757
        %v2274 = vpack.c.b16 %v1770, %v1758
        %v2275 = vpack.c.b16 %v1771, %v1759
        %v2276 = vpack.c.b16 %v1772, %v1760
        %v2277 = vpack.c.b16 %v1773, %v1761
        %v2278 = vpack.c.b16 %v1774, %v1762
        %v2279 = vpack.c.b16 %v1775, %v1763
        %v2280 = vpack.c.b16 %v1788, %v1776
        %v2281 = vpack.c.b16 %v1789, %v1777
        %v2282 = vpack.c.b16 %v1790, %v1778
        %v2283 = vpack.c.b16 %v1791, %v1779
        %v2284 = vpack.c.b16 %v1792, %v1780
        %v2285 = vpack.c.b16 %v1793, %v1781
        %v2286 = vpack.c.b16 %v1794, %v1782
        %v2287 = vpack.c.b16 %v1795, %v1783
        %v2288 = vpack.c.b16 %v1796, %v1784
        %v2289 = vpack.c.b16 %v1797, %v1785
        %v2290 = vpack.c.b16 %v1798, %v1786
        %v2291 = vpack.c.b16 %v1799, %v1787
        %v2292 = vpack.c.b16 %v1812, %v1800
        %v2293 = vpack.c.b16 %v1813, %v1801
        %v2294 = vpack.c.b16 %v1814, %v1802
        %v2295 = vpack.c.b16 %v1815, %v1803
        %v2296 = vpack.c.b16 %v1816, %v1804
        %v2297 = vpack.c.b16 %v1817, %v1805
        %v2298 = vpack.c.b16 %v1818, %v1806
        %v2299 = vpack.c.b16 %v1819, %v1807
        %v2300 = vpack.c.b16 %v1820, %v1808
        %v2301 = vpack.c.b16 %v1821, %v1809
        %v2302 = vpack.c.b16 %v1822, %v1810
        %v2303 = vpack.c.b16 %v1823, %v1811
        %v2304 = vpack.c.b16 %v1836, %v1824
        %v2305 = vpack.c.b16 %v1837, %v1825
        %v2306 = vpack.c.b16 %v1838, %v1826
        %v2307 = vpack.c.b16 %v1839, %v1827
        %v2308 = vpack.c.b16 %v1840, %v1828
        %v2309 = vpack.c.b16 %v1841, %v1829
        %v2310 = vpack.c.b16 %v1842, %v1830
        %v2311 = vpack.c.b16 %v1843, %v1831
        %v2312 = vpack.c.b16 %v1844, %v1832
        %v2313 = vpack.c.b16 %v1845, %v1833
        %v2314 = vpack.c.b16 %v1846, %v1834
        %v2315 = vpack.c.b16 %v1847, %v1835
        %v2316 = vpack.c.b16 %v1860, %v1848
        %v2317 = vpack.c.b16 %v1861, %v1849
        %v2318 = vpack.c.b16 %v1862, %v1850
        %v2319 = vpack.c.b16 %v1863, %v1851
        %v2320 = vpack.c.b16 %v1864, %v1852
        %v2321 = vpack.c.b16 %v1865, %v1853
        %v2322 = vpack.c.b16 %v1866, %v1854
        %v2323 = vpack.c.b16 %v1867, %v1855
        %v2324 = vpack.c.b16 %v1868, %v1856
        %v2325 = vpack.c.b16 %v1869, %v1857
        %v2326 = vpack.c.b16 %v1870, %v1858
        %v2327 = vpack.c.b16 %v1871, %v1859
        %v2328 = vpack.c.b16 %v1884, %v1872
        %v2329 = vpack.c.b16 %v1885, %v1873
        %v2330 = vpack.c.b16 %v1886, %v1874
        %v2331 = vpack.c.b16 %v1887, %v1875
        %v2332 = vpack.c.b16 %v1888, %v1876
        %v2333 = vpack.c.b16 %v1889, %v1877
        %v2334 = vpack.c.b16 %v1890, %v1878
        %v2335 = vpack.c.b16 %v1891, %v1879
        %v2336 = vpack.c.b16 %v1892, %v1880
        %v2337 = vpack.c.b16 %v1893, %v1881
        %v2338 = vpack.c.b16 %v1894, %v1882
        %v2339 = vpack.c.b16 %v1895, %v1883
        %v2340 = vpack.c.b16 %v1908, %v1896
        %v2341 = vpack.c.b16 %v1909, %v1897
        %v2342 = vpack.c.b16 %v1910, %v1898
        %v2343 = vpack.c.b16 %v1911, %v1899
        %v2344 = vpack.c.b16 %v1912, %v1900
        %v2345 = vpack.c.b16 %v1913, %v1901
        %v2346 = vpack.c.b16 %v1914, %v1902
        %v2347 = vpack.c.b16 %v1915, %v1903
        %v2348 = vpack.c.b16 %v1916, %v1904
        %v2349 = vpack.c.b16 %v1917, %v1905
        %v2350 = vpack.c.b16 %v1918, %v1906
        %v2351 = vpack.c.b16 %v1919, %v1907
        %v2352 = vpack.c.b16 %v1932, %v1920
        %v2353 = vpack.c.b16 %v1933, %v1921
        %v2354 = vpack.c.b16 %v1934, %v1922
        %v2355 = vpack.c.b16 %v1935, %v1923
        %v2356 = vpack.c.b16 %v1936, %v1924
        %v2357 = vpack.c.b16 %v1937, %v1925
        %v2358 = vpack.c.b16 %v1938, %v1926
        %v2359 = vpack.c.b16 %v1939, %v1927
        %v2360 = vpack.c.b16 %v1940, %v1928
        %v2361 = vpack.c.b16 %v1941, %v1929
        %v2362 = vpack.c.b16 %v1942, %v1930
        %v2363 = vpack.c.b16 %v1943, %v1931
        %v2364 = vpack.c.b16 %v1956, %v1944
        %v2365 = vpack.c.b16 %v1957, %v1945
        %v2366 = vpack.c.b16 %v1958, %v1946
        %v2367 = vpack.c.b16 %v1959, %v1947
        %v2368 = vpack.c.b16 %v1960, %v1948
        %v2369 = vpack.c.b16 %v1961, %v1949
        %v2370 = vpack.c.b16 %v1962, %v1950
        %v2371 = vpack.c.b16 %v1963, %v1951
        %v2372 = vpack.c.b16 %v1964, %v1952
        %v2373 = vpack.c.b16 %v1965, %v1953
        %v2374 = vpack.c.b16 %v1966, %v1954
        %v2375 = vpack.c.b16 %v1967, %v1955
        %v2376 = vpack.c.b16 %v1980, %v1968
        %v2377 = vpack.c.b16 %v1981, %v1969
        %v2378 = vpack.c.b16 %v1982, %v1970
        %v2379 = vpack.c.b16 %v1983, %v1971
        %v2380 = vpack.c.b16 %v1984, %v1972
        %v2381 = vpack.c.b16 %v1985, %v1973
        %v2382 = vpack.c.b16 %v1986, %v1974
        %v2383 = vpack.c.b16 %v1987, %v1975
        %v2384 = vpack.c.b16 %v1988, %v1976
        %v2385 = vpack.c.b16 %v1989, %v1977
        %v2386 = vpack.c.b16 %v1990, %v1978
        %v2387 = vpack.c.b16 %v1991, %v1979
        %v2388 = vpack.c.b16 %v2004, %v1992
        %v2389 = vpack.c.b16 %v2005, %v1993
        %v2390 = vpack.c.b16 %v2006, %v1994
        %v2391 = vpack.c.b16 %v2007, %v1995
        %v2392 = vpack.c.b16 %v2008, %v1996
        %v2393 = vpack.c.b16 %v2009, %v1997
        %v2394 = vpack.c.b16 %v2010, %v1998
        %v2395 = vpack.c.b16 %v2011, %v1999
        %v2396 = vpack.c.b16 %v2012, %v2000
        %v2397 = vpack.c.b16 %v2013, %v2001
        %v2398 = vpack.c.b16 %v2014, %v2002
        %v2399 = vpack.c.b16 %v2015, %v2003
        %2784 = vmatpush.bf16.msra.mxu0 %v2100
        %2785 = vmatpush.bf16.msra.mxu0 %v2088
        %2786 = vmatpush.bf16.msra.mxu0 %v2076
        %2787 = vmatpush.bf16.msra.mxu0 %v2064
        %2788 = vmatpush.bf16.msra.mxu0 %v2052
        %2789 = vmatpush.bf16.msra.mxu0 %v2040
        %2790 = vmatpush.bf16.msra.mxu0 %v2028
        %2791 = vmatpush.bf16.msra.mxu0 %v2016
        %2792 = vmatmul.bf16.gmra.mxu0 %v476
        %v2793 = vpop.f32.mrf.mxu0
        %v2794 = vadd.f32 0.0, %v2793
        %v2795 = vpop.f32.mrf.mxu0
        %v2796 = vadd.f32 0.0, %v2795
        %2797 = vdwg.mxu0
        %2798 = vmatpush.bf16.msra.mxu0 %v2196
        %2799 = vmatpush.bf16.msra.mxu0 %v2184
        %2800 = vmatpush.bf16.msra.mxu0 %v2172
        %2801 = vmatpush.bf16.msra.mxu0 %v2160
        %2802 = vmatpush.bf16.msra.mxu0 %v2148
        %2803 = vmatpush.bf16.msra.mxu0 %v2136
        %2804 = vmatpush.bf16.msra.mxu0 %v2124
        %2805 = vmatpush.bf16.msra.mxu0 %v2112
        %2806 = vmatmul.bf16.gmra.mxu0 %v477
        %v2807 = vpop.f32.mrf.mxu0
        %v2808 = vadd.f32 %v2794, %v2807
        %v2809 = vpop.f32.mrf.mxu0
        %v2810 = vadd.f32 %v2796, %v2809
        %2811 = vdwg.mxu0
        %2812 = vmatpush.bf16.msra.mxu0 %v2292
        %2813 = vmatpush.bf16.msra.mxu0 %v2280
        %2814 = vmatpush.bf16.msra.mxu0 %v2268
        %2815 = vmatpush.bf16.msra.mxu0 %v2256
        %2816 = vmatpush.bf16.msra.mxu0 %v2244
        %2817 = vmatpush.bf16.msra.mxu0 %v2232
        %2818 = vmatpush.bf16.msra.mxu0 %v2220
        %2819 = vmatpush.bf16.msra.mxu0 %v2208
        %2820 = vmatmul.bf16.gmra.mxu0 %v478
        %v2821 = vpop.f32.mrf.mxu0
        %v2822 = vadd.f32 %v2808, %v2821
        %v2823 = vpop.f32.mrf.mxu0
        %v2824 = vadd.f32 %v2810, %v2823
        %2825 = vdwg.mxu0
        %2826 = vmatpush.bf16.msra.mxu0 %v2388
        %2827 = vmatpush.bf16.msra.mxu0 %v2376
        %2828 = vmatpush.bf16.msra.mxu0 %v2364
        %2829 = vmatpush.bf16.msra.mxu0 %v2352
        %2830 = vmatpush.bf16.msra.mxu0 %v2340
        %2831 = vmatpush.bf16.msra.mxu0 %v2328
        %2832 = vmatpush.bf16.msra.mxu0 %v2316
        %2833 = vmatpush.bf16.msra.mxu0 %v2304
        %2834 = vmatmul.bf16.gmra.mxu0 %v479
        %v2835 = vpop.f32.mrf.mxu0
        %v2836 = vadd.f32 %v2822, %v2835
        %v2837 = vpop.f32.mrf.mxu0
        %v2838 = vadd.f32 %v2824, %v2837
        %2839 = vdwg.mxu0
        %2840 = vmatpush.bf16.msra.mxu0 %v2101
        %2841 = vmatpush.bf16.msra.mxu0 %v2089
        %2842 = vmatpush.bf16.msra.mxu0 %v2077
        %2843 = vmatpush.bf16.msra.mxu0 %v2065
        %2844 = vmatpush.bf16.msra.mxu0 %v2053
        %2845 = vmatpush.bf16.msra.mxu0 %v2041
        %2846 = vmatpush.bf16.msra.mxu0 %v2029
        %2847 = vmatpush.bf16.msra.mxu0 %v2017
        %2848 = vmatmul.bf16.gmra.mxu0 %v476
        %v2849 = vpop.f32.mrf.mxu0
        %v2850 = vadd.f32 0.0, %v2849
        %v2851 = vpop.f32.mrf.mxu0
        %v2852 = vadd.f32 0.0, %v2851
        %2853 = vdwg.mxu0
        %2854 = vmatpush.bf16.msra.mxu0 %v2197
        %2855 = vmatpush.bf16.msra.mxu0 %v2185
        %2856 = vmatpush.bf16.msra.mxu0 %v2173
        %2857 = vmatpush.bf16.msra.mxu0 %v2161
        %2858 = vmatpush.bf16.msra.mxu0 %v2149
        %2859 = vmatpush.bf16.msra.mxu0 %v2137
        %2860 = vmatpush.bf16.msra.mxu0 %v2125
        %2861 = vmatpush.bf16.msra.mxu0 %v2113
        %2862 = vmatmul.bf16.gmra.mxu0 %v477
        %v2863 = vpop.f32.mrf.mxu0
        %v2864 = vadd.f32 %v2850, %v2863
        %v2865 = vpop.f32.mrf.mxu0
        %v2866 = vadd.f32 %v2852, %v2865
        %2867 = vdwg.mxu0
        %2868 = vmatpush.bf16.msra.mxu0 %v2293
        %2869 = vmatpush.bf16.msra.mxu0 %v2281
        %2870 = vmatpush.bf16.msra.mxu0 %v2269
        %2871 = vmatpush.bf16.msra.mxu0 %v2257
        %2872 = vmatpush.bf16.msra.mxu0 %v2245
        %2873 = vmatpush.bf16.msra.mxu0 %v2233
        %2874 = vmatpush.bf16.msra.mxu0 %v2221
        %2875 = vmatpush.bf16.msra.mxu0 %v2209
        %2876 = vmatmul.bf16.gmra.mxu0 %v478
        %v2877 = vpop.f32.mrf.mxu0
        %v2878 = vadd.f32 %v2864, %v2877
        %v2879 = vpop.f32.mrf.mxu0
        %v2880 = vadd.f32 %v2866, %v2879
        %2881 = vdwg.mxu0
        %2882 = vmatpush.bf16.msra.mxu0 %v2389
        %2883 = vmatpush.bf16.msra.mxu0 %v2377
        %2884 = vmatpush.bf16.msra.mxu0 %v2365
        %2885 = vmatpush.bf16.msra.mxu0 %v2353
        %2886 = vmatpush.bf16.msra.mxu0 %v2341
        %2887 = vmatpush.bf16.msra.mxu0 %v2329
        %2888 = vmatpush.bf16.msra.mxu0 %v2317
        %2889 = vmatpush.bf16.msra.mxu0 %v2305
        %2890 = vmatmul.bf16.gmra.mxu0 %v479
        %v2891 = vpop.f32.mrf.mxu0
        %v2892 = vadd.f32 %v2878, %v2891
        %v2893 = vpop.f32.mrf.mxu0
        %v2894 = vadd.f32 %v2880, %v2893
        %2895 = vdwg.mxu0
        %2896 = vmatpush.bf16.msra.mxu0 %v2102
        %2897 = vmatpush.bf16.msra.mxu0 %v2090
        %2898 = vmatpush.bf16.msra.mxu0 %v2078
        %2899 = vmatpush.bf16.msra.mxu0 %v2066
        %2900 = vmatpush.bf16.msra.mxu0 %v2054
        %2901 = vmatpush.bf16.msra.mxu0 %v2042
        %2902 = vmatpush.bf16.msra.mxu0 %v2030
        %2903 = vmatpush.bf16.msra.mxu0 %v2018
        %2904 = vmatmul.bf16.gmra.mxu0 %v476
        %v2905 = vpop.f32.mrf.mxu0
        %v2906 = vadd.f32 0.0, %v2905
        %v2907 = vpop.f32.mrf.mxu0
        %v2908 = vadd.f32 0.0, %v2907
        %2909 = vdwg.mxu0
        %2910 = vmatpush.bf16.msra.mxu0 %v2198
        %2911 = vmatpush.bf16.msra.mxu0 %v2186
        %2912 = vmatpush.bf16.msra.mxu0 %v2174
        %2913 = vmatpush.bf16.msra.mxu0 %v2162
        %2914 = vmatpush.bf16.msra.mxu0 %v2150
        %2915 = vmatpush.bf16.msra.mxu0 %v2138
        %2916 = vmatpush.bf16.msra.mxu0 %v2126
        %2917 = vmatpush.bf16.msra.mxu0 %v2114
        %2918 = vmatmul.bf16.gmra.mxu0 %v477
        %v2919 = vpop.f32.mrf.mxu0
        %v2920 = vadd.f32 %v2906, %v2919
        %v2921 = vpop.f32.mrf.mxu0
        %v2922 = vadd.f32 %v2908, %v2921
        %2923 = vdwg.mxu0
        %2924 = vmatpush.bf16.msra.mxu0 %v2294
        %2925 = vmatpush.bf16.msra.mxu0 %v2282
        %2926 = vmatpush.bf16.msra.mxu0 %v2270
        %2927 = vmatpush.bf16.msra.mxu0 %v2258
        %2928 = vmatpush.bf16.msra.mxu0 %v2246
        %2929 = vmatpush.bf16.msra.mxu0 %v2234
        %2930 = vmatpush.bf16.msra.mxu0 %v2222
        %2931 = vmatpush.bf16.msra.mxu0 %v2210
        %2932 = vmatmul.bf16.gmra.mxu0 %v478
        %v2933 = vpop.f32.mrf.mxu0
        %v2934 = vadd.f32 %v2920, %v2933
        %v2935 = vpop.f32.mrf.mxu0
        %v2936 = vadd.f32 %v2922, %v2935
        %2937 = vdwg.mxu0
        %2938 = vmatpush.bf16.msra.mxu0 %v2390
        %2939 = vmatpush.bf16.msra.mxu0 %v2378
        %2940 = vmatpush.bf16.msra.mxu0 %v2366
        %2941 = vmatpush.bf16.msra.mxu0 %v2354
        %2942 = vmatpush.bf16.msra.mxu0 %v2342
        %2943 = vmatpush.bf16.msra.mxu0 %v2330
        %2944 = vmatpush.bf16.msra.mxu0 %v2318
        %2945 = vmatpush.bf16.msra.mxu0 %v2306
        %2946 = vmatmul.bf16.gmra.mxu0 %v479
        %v2947 = vpop.f32.mrf.mxu0
        %v2948 = vadd.f32 %v2934, %v2947
        %v2949 = vpop.f32.mrf.mxu0
        %v2950 = vadd.f32 %v2936, %v2949
        %2951 = vdwg.mxu0
        %2952 = vmatpush.bf16.msra.mxu0 %v2103
        %2953 = vmatpush.bf16.msra.mxu0 %v2091
        %2954 = vmatpush.bf16.msra.mxu0 %v2079
        %2955 = vmatpush.bf16.msra.mxu0 %v2067
        %2956 = vmatpush.bf16.msra.mxu0 %v2055
        %2957 = vmatpush.bf16.msra.mxu0 %v2043
        %2958 = vmatpush.bf16.msra.mxu0 %v2031
        %2959 = vmatpush.bf16.msra.mxu0 %v2019
        %2960 = vmatmul.bf16.gmra.mxu0 %v476
        %v2961 = vpop.f32.mrf.mxu0
        %v2962 = vadd.f32 0.0, %v2961
        %v2963 = vpop.f32.mrf.mxu0
        %v2964 = vadd.f32 0.0, %v2963
        %2965 = vdwg.mxu0
        %2966 = vmatpush.bf16.msra.mxu0 %v2199
        %2967 = vmatpush.bf16.msra.mxu0 %v2187
        %2968 = vmatpush.bf16.msra.mxu0 %v2175
        %2969 = vmatpush.bf16.msra.mxu0 %v2163
        %2970 = vmatpush.bf16.msra.mxu0 %v2151
        %2971 = vmatpush.bf16.msra.mxu0 %v2139
        %2972 = vmatpush.bf16.msra.mxu0 %v2127
        %2973 = vmatpush.bf16.msra.mxu0 %v2115
        %2974 = vmatmul.bf16.gmra.mxu0 %v477
        %v2975 = vpop.f32.mrf.mxu0
        %v2976 = vadd.f32 %v2962, %v2975
        %v2977 = vpop.f32.mrf.mxu0
        %v2978 = vadd.f32 %v2964, %v2977
        %2979 = vdwg.mxu0
        %2980 = vmatpush.bf16.msra.mxu0 %v2295
        %2981 = vmatpush.bf16.msra.mxu0 %v2283
        %2982 = vmatpush.bf16.msra.mxu0 %v2271
        %2983 = vmatpush.bf16.msra.mxu0 %v2259
        %2984 = vmatpush.bf16.msra.mxu0 %v2247
        %2985 = vmatpush.bf16.msra.mxu0 %v2235
        %2986 = vmatpush.bf16.msra.mxu0 %v2223
        %2987 = vmatpush.bf16.msra.mxu0 %v2211
        %2988 = vmatmul.bf16.gmra.mxu0 %v478
        %v2989 = vpop.f32.mrf.mxu0
        %v2990 = vadd.f32 %v2976, %v2989
        %v2991 = vpop.f32.mrf.mxu0
        %v2992 = vadd.f32 %v2978, %v2991
        %2993 = vdwg.mxu0
        %2994 = vmatpush.bf16.msra.mxu0 %v2391
        %2995 = vmatpush.bf16.msra.mxu0 %v2379
        %2996 = vmatpush.bf16.msra.mxu0 %v2367
        %2997 = vmatpush.bf16.msra.mxu0 %v2355
        %2998 = vmatpush.bf16.msra.mxu0 %v2343
        %2999 = vmatpush.bf16.msra.mxu0 %v2331
        %3000 = vmatpush.bf16.msra.mxu0 %v2319
        %3001 = vmatpush.bf16.msra.mxu0 %v2307
        %3002 = vmatmul.bf16.gmra.mxu0 %v479
        %v3003 = vpop.f32.mrf.mxu0
        %v3004 = vadd.f32 %v2990, %v3003
        %v3005 = vpop.f32.mrf.mxu0
        %v3006 = vadd.f32 %v2992, %v3005
        %3007 = vdwg.mxu0
        %3008 = vmatpush.bf16.msra.mxu0 %v2104
        %3009 = vmatpush.bf16.msra.mxu0 %v2092
        %3010 = vmatpush.bf16.msra.mxu0 %v2080
        %3011 = vmatpush.bf16.msra.mxu0 %v2068
        %3012 = vmatpush.bf16.msra.mxu0 %v2056
        %3013 = vmatpush.bf16.msra.mxu0 %v2044
        %3014 = vmatpush.bf16.msra.mxu0 %v2032
        %3015 = vmatpush.bf16.msra.mxu0 %v2020
        %3016 = vmatmul.bf16.gmra.mxu0 %v476
        %v3017 = vpop.f32.mrf.mxu0
        %v3018 = vadd.f32 0.0, %v3017
        %v3019 = vpop.f32.mrf.mxu0
        %v3020 = vadd.f32 0.0, %v3019
        %3021 = vdwg.mxu0
        %3022 = vmatpush.bf16.msra.mxu0 %v2200
        %3023 = vmatpush.bf16.msra.mxu0 %v2188
        %3024 = vmatpush.bf16.msra.mxu0 %v2176
        %3025 = vmatpush.bf16.msra.mxu0 %v2164
        %3026 = vmatpush.bf16.msra.mxu0 %v2152
        %3027 = vmatpush.bf16.msra.mxu0 %v2140
        %3028 = vmatpush.bf16.msra.mxu0 %v2128
        %3029 = vmatpush.bf16.msra.mxu0 %v2116
        %3030 = vmatmul.bf16.gmra.mxu0 %v477
        %v3031 = vpop.f32.mrf.mxu0
        %v3032 = vadd.f32 %v3018, %v3031
        %v3033 = vpop.f32.mrf.mxu0
        %v3034 = vadd.f32 %v3020, %v3033
        %3035 = vdwg.mxu0
        %3036 = vmatpush.bf16.msra.mxu0 %v2296
        %3037 = vmatpush.bf16.msra.mxu0 %v2284
        %3038 = vmatpush.bf16.msra.mxu0 %v2272
        %3039 = vmatpush.bf16.msra.mxu0 %v2260
        %3040 = vmatpush.bf16.msra.mxu0 %v2248
        %3041 = vmatpush.bf16.msra.mxu0 %v2236
        %3042 = vmatpush.bf16.msra.mxu0 %v2224
        %3043 = vmatpush.bf16.msra.mxu0 %v2212
        %3044 = vmatmul.bf16.gmra.mxu0 %v478
        %v3045 = vpop.f32.mrf.mxu0
        %v3046 = vadd.f32 %v3032, %v3045
        %v3047 = vpop.f32.mrf.mxu0
        %v3048 = vadd.f32 %v3034, %v3047
        %3049 = vdwg.mxu0
        %3050 = vmatpush.bf16.msra.mxu0 %v2392
        %3051 = vmatpush.bf16.msra.mxu0 %v2380
        %3052 = vmatpush.bf16.msra.mxu0 %v2368
        %3053 = vmatpush.bf16.msra.mxu0 %v2356
        %3054 = vmatpush.bf16.msra.mxu0 %v2344
        %3055 = vmatpush.bf16.msra.mxu0 %v2332
        %3056 = vmatpush.bf16.msra.mxu0 %v2320
        %3057 = vmatpush.bf16.msra.mxu0 %v2308
        %3058 = vmatmul.bf16.gmra.mxu0 %v479
        %v3059 = vpop.f32.mrf.mxu0
        %v3060 = vadd.f32 %v3046, %v3059
        %v3061 = vpop.f32.mrf.mxu0
        %v3062 = vadd.f32 %v3048, %v3061
        %3063 = vdwg.mxu0
        %3064 = vmatpush.bf16.msra.mxu0 %v2105
        %3065 = vmatpush.bf16.msra.mxu0 %v2093
        %3066 = vmatpush.bf16.msra.mxu0 %v2081
        %3067 = vmatpush.bf16.msra.mxu0 %v2069
        %3068 = vmatpush.bf16.msra.mxu0 %v2057
        %3069 = vmatpush.bf16.msra.mxu0 %v2045
        %3070 = vmatpush.bf16.msra.mxu0 %v2033
        %3071 = vmatpush.bf16.msra.mxu0 %v2021
        %3072 = vmatmul.bf16.gmra.mxu0 %v476
        %v3073 = vpop.f32.mrf.mxu0
        %v3074 = vadd.f32 0.0, %v3073
        %v3075 = vpop.f32.mrf.mxu0
        %v3076 = vadd.f32 0.0, %v3075
        %3077 = vdwg.mxu0
        %3078 = vmatpush.bf16.msra.mxu0 %v2201
        %3079 = vmatpush.bf16.msra.mxu0 %v2189
        %3080 = vmatpush.bf16.msra.mxu0 %v2177
        %3081 = vmatpush.bf16.msra.mxu0 %v2165
        %3082 = vmatpush.bf16.msra.mxu0 %v2153
        %3083 = vmatpush.bf16.msra.mxu0 %v2141
        %3084 = vmatpush.bf16.msra.mxu0 %v2129
        %3085 = vmatpush.bf16.msra.mxu0 %v2117
        %3086 = vmatmul.bf16.gmra.mxu0 %v477
        %v3087 = vpop.f32.mrf.mxu0
        %v3088 = vadd.f32 %v3074, %v3087
        %v3089 = vpop.f32.mrf.mxu0
        %v3090 = vadd.f32 %v3076, %v3089
        %3091 = vdwg.mxu0
        %3092 = vmatpush.bf16.msra.mxu0 %v2297
        %3093 = vmatpush.bf16.msra.mxu0 %v2285
        %3094 = vmatpush.bf16.msra.mxu0 %v2273
        %3095 = vmatpush.bf16.msra.mxu0 %v2261
        %3096 = vmatpush.bf16.msra.mxu0 %v2249
        %3097 = vmatpush.bf16.msra.mxu0 %v2237
        %3098 = vmatpush.bf16.msra.mxu0 %v2225
        %3099 = vmatpush.bf16.msra.mxu0 %v2213
        %3100 = vmatmul.bf16.gmra.mxu0 %v478
        %v3101 = vpop.f32.mrf.mxu0
        %v3102 = vadd.f32 %v3088, %v3101
        %v3103 = vpop.f32.mrf.mxu0
        %v3104 = vadd.f32 %v3090, %v3103
        %3105 = vdwg.mxu0
        %3106 = vmatpush.bf16.msra.mxu0 %v2393
        %3107 = vmatpush.bf16.msra.mxu0 %v2381
        %3108 = vmatpush.bf16.msra.mxu0 %v2369
        %3109 = vmatpush.bf16.msra.mxu0 %v2357
        %3110 = vmatpush.bf16.msra.mxu0 %v2345
        %3111 = vmatpush.bf16.msra.mxu0 %v2333
        %3112 = vmatpush.bf16.msra.mxu0 %v2321
        %3113 = vmatpush.bf16.msra.mxu0 %v2309
        %3114 = vmatmul.bf16.gmra.mxu0 %v479
        %v3115 = vpop.f32.mrf.mxu0
        %v3116 = vadd.f32 %v3102, %v3115
        %v3117 = vpop.f32.mrf.mxu0
        %v3118 = vadd.f32 %v3104, %v3117
        %3119 = vdwg.mxu0
        %3120 = vmatpush.bf16.msra.mxu0 %v2106
        %3121 = vmatpush.bf16.msra.mxu0 %v2094
        %3122 = vmatpush.bf16.msra.mxu0 %v2082
        %3123 = vmatpush.bf16.msra.mxu0 %v2070
        %3124 = vmatpush.bf16.msra.mxu0 %v2058
        %3125 = vmatpush.bf16.msra.mxu0 %v2046
        %3126 = vmatpush.bf16.msra.mxu0 %v2034
        %3127 = vmatpush.bf16.msra.mxu0 %v2022
        %3128 = vmatmul.bf16.gmra.mxu0 %v476
        %v3129 = vpop.f32.mrf.mxu0
        %v3130 = vadd.f32 0.0, %v3129
        %v3131 = vpop.f32.mrf.mxu0
        %v3132 = vadd.f32 0.0, %v3131
        %3133 = vdwg.mxu0
        %3134 = vmatpush.bf16.msra.mxu0 %v2202
        %3135 = vmatpush.bf16.msra.mxu0 %v2190
        %3136 = vmatpush.bf16.msra.mxu0 %v2178
        %3137 = vmatpush.bf16.msra.mxu0 %v2166
        %3138 = vmatpush.bf16.msra.mxu0 %v2154
        %3139 = vmatpush.bf16.msra.mxu0 %v2142
        %3140 = vmatpush.bf16.msra.mxu0 %v2130
        %3141 = vmatpush.bf16.msra.mxu0 %v2118
        %3142 = vmatmul.bf16.gmra.mxu0 %v477
        %v3143 = vpop.f32.mrf.mxu0
        %v3144 = vadd.f32 %v3130, %v3143
        %v3145 = vpop.f32.mrf.mxu0
        %v3146 = vadd.f32 %v3132, %v3145
        %3147 = vdwg.mxu0
        %3148 = vmatpush.bf16.msra.mxu0 %v2298
        %3149 = vmatpush.bf16.msra.mxu0 %v2286
        %3150 = vmatpush.bf16.msra.mxu0 %v2274
        %3151 = vmatpush.bf16.msra.mxu0 %v2262
        %3152 = vmatpush.bf16.msra.mxu0 %v2250
        %3153 = vmatpush.bf16.msra.mxu0 %v2238
        %3154 = vmatpush.bf16.msra.mxu0 %v2226
        %3155 = vmatpush.bf16.msra.mxu0 %v2214
        %3156 = vmatmul.bf16.gmra.mxu0 %v478
        %v3157 = vpop.f32.mrf.mxu0
        %v3158 = vadd.f32 %v3144, %v3157
        %v3159 = vpop.f32.mrf.mxu0
        %v3160 = vadd.f32 %v3146, %v3159
        %3161 = vdwg.mxu0
        %3162 = vmatpush.bf16.msra.mxu0 %v2394
        %3163 = vmatpush.bf16.msra.mxu0 %v2382
        %3164 = vmatpush.bf16.msra.mxu0 %v2370
        %3165 = vmatpush.bf16.msra.mxu0 %v2358
        %3166 = vmatpush.bf16.msra.mxu0 %v2346
        %3167 = vmatpush.bf16.msra.mxu0 %v2334
        %3168 = vmatpush.bf16.msra.mxu0 %v2322
        %3169 = vmatpush.bf16.msra.mxu0 %v2310
        %3170 = vmatmul.bf16.gmra.mxu0 %v479
        %v3171 = vpop.f32.mrf.mxu0
        %v3172 = vadd.f32 %v3158, %v3171
        %v3173 = vpop.f32.mrf.mxu0
        %v3174 = vadd.f32 %v3160, %v3173
        %3175 = vdwg.mxu0
        %3176 = vmatpush.bf16.msra.mxu0 %v2107
        %3177 = vmatpush.bf16.msra.mxu0 %v2095
        %3178 = vmatpush.bf16.msra.mxu0 %v2083
        %3179 = vmatpush.bf16.msra.mxu0 %v2071
        %3180 = vmatpush.bf16.msra.mxu0 %v2059
        %3181 = vmatpush.bf16.msra.mxu0 %v2047
        %3182 = vmatpush.bf16.msra.mxu0 %v2035
        %3183 = vmatpush.bf16.msra.mxu0 %v2023
        %3184 = vmatmul.bf16.gmra.mxu0 %v476
        %v3185 = vpop.f32.mrf.mxu0
        %v3186 = vadd.f32 0.0, %v3185
        %v3187 = vpop.f32.mrf.mxu0
        %v3188 = vadd.f32 0.0, %v3187
        %3189 = vdwg.mxu0
        %3190 = vmatpush.bf16.msra.mxu0 %v2203
        %3191 = vmatpush.bf16.msra.mxu0 %v2191
        %3192 = vmatpush.bf16.msra.mxu0 %v2179
        %3193 = vmatpush.bf16.msra.mxu0 %v2167
        %3194 = vmatpush.bf16.msra.mxu0 %v2155
        %3195 = vmatpush.bf16.msra.mxu0 %v2143
        %3196 = vmatpush.bf16.msra.mxu0 %v2131
        %3197 = vmatpush.bf16.msra.mxu0 %v2119
        %3198 = vmatmul.bf16.gmra.mxu0 %v477
        %v3199 = vpop.f32.mrf.mxu0
        %v3200 = vadd.f32 %v3186, %v3199
        %v3201 = vpop.f32.mrf.mxu0
        %v3202 = vadd.f32 %v3188, %v3201
        %3203 = vdwg.mxu0
        %3204 = vmatpush.bf16.msra.mxu0 %v2299
        %3205 = vmatpush.bf16.msra.mxu0 %v2287
        %3206 = vmatpush.bf16.msra.mxu0 %v2275
        %3207 = vmatpush.bf16.msra.mxu0 %v2263
        %3208 = vmatpush.bf16.msra.mxu0 %v2251
        %3209 = vmatpush.bf16.msra.mxu0 %v2239
        %3210 = vmatpush.bf16.msra.mxu0 %v2227
        %3211 = vmatpush.bf16.msra.mxu0 %v2215
        %3212 = vmatmul.bf16.gmra.mxu0 %v478
        %v3213 = vpop.f32.mrf.mxu0
        %v3214 = vadd.f32 %v3200, %v3213
        %v3215 = vpop.f32.mrf.mxu0
        %v3216 = vadd.f32 %v3202, %v3215
        %3217 = vdwg.mxu0
        %3218 = vmatpush.bf16.msra.mxu0 %v2395
        %3219 = vmatpush.bf16.msra.mxu0 %v2383
        %3220 = vmatpush.bf16.msra.mxu0 %v2371
        %3221 = vmatpush.bf16.msra.mxu0 %v2359
        %3222 = vmatpush.bf16.msra.mxu0 %v2347
        %3223 = vmatpush.bf16.msra.mxu0 %v2335
        %3224 = vmatpush.bf16.msra.mxu0 %v2323
        %3225 = vmatpush.bf16.msra.mxu0 %v2311
        %3226 = vmatmul.bf16.gmra.mxu0 %v479
        %v3227 = vpop.f32.mrf.mxu0
        %v3228 = vadd.f32 %v3214, %v3227
        %v3229 = vpop.f32.mrf.mxu0
        %v3230 = vadd.f32 %v3216, %v3229
        %3231 = vdwg.mxu0
        %3232 = vmatpush.bf16.msra.mxu0 %v2108
        %3233 = vmatpush.bf16.msra.mxu0 %v2096
        %3234 = vmatpush.bf16.msra.mxu0 %v2084
        %3235 = vmatpush.bf16.msra.mxu0 %v2072
        %3236 = vmatpush.bf16.msra.mxu0 %v2060
        %3237 = vmatpush.bf16.msra.mxu0 %v2048
        %3238 = vmatpush.bf16.msra.mxu0 %v2036
        %3239 = vmatpush.bf16.msra.mxu0 %v2024
        %3240 = vmatmul.bf16.gmra.mxu0 %v476
        %v3241 = vpop.f32.mrf.mxu0
        %v3242 = vadd.f32 0.0, %v3241
        %v3243 = vpop.f32.mrf.mxu0
        %v3244 = vadd.f32 0.0, %v3243
        %3245 = vdwg.mxu0
        %3246 = vmatpush.bf16.msra.mxu0 %v2204
        %3247 = vmatpush.bf16.msra.mxu0 %v2192
        %3248 = vmatpush.bf16.msra.mxu0 %v2180
        %3249 = vmatpush.bf16.msra.mxu0 %v2168
        %3250 = vmatpush.bf16.msra.mxu0 %v2156
        %3251 = vmatpush.bf16.msra.mxu0 %v2144
        %3252 = vmatpush.bf16.msra.mxu0 %v2132
        %3253 = vmatpush.bf16.msra.mxu0 %v2120
        %3254 = vmatmul.bf16.gmra.mxu0 %v477
        %v3255 = vpop.f32.mrf.mxu0
        %v3256 = vadd.f32 %v3242, %v3255
        %v3257 = vpop.f32.mrf.mxu0
        %v3258 = vadd.f32 %v3244, %v3257
        %3259 = vdwg.mxu0
        %3260 = vmatpush.bf16.msra.mxu0 %v2300
        %3261 = vmatpush.bf16.msra.mxu0 %v2288
        %3262 = vmatpush.bf16.msra.mxu0 %v2276
        %3263 = vmatpush.bf16.msra.mxu0 %v2264
        %3264 = vmatpush.bf16.msra.mxu0 %v2252
        %3265 = vmatpush.bf16.msra.mxu0 %v2240
        %3266 = vmatpush.bf16.msra.mxu0 %v2228
        %3267 = vmatpush.bf16.msra.mxu0 %v2216
        %3268 = vmatmul.bf16.gmra.mxu0 %v478
        %v3269 = vpop.f32.mrf.mxu0
        %v3270 = vadd.f32 %v3256, %v3269
        %v3271 = vpop.f32.mrf.mxu0
        %v3272 = vadd.f32 %v3258, %v3271
        %3273 = vdwg.mxu0
        %3274 = vmatpush.bf16.msra.mxu0 %v2396
        %3275 = vmatpush.bf16.msra.mxu0 %v2384
        %3276 = vmatpush.bf16.msra.mxu0 %v2372
        %3277 = vmatpush.bf16.msra.mxu0 %v2360
        %3278 = vmatpush.bf16.msra.mxu0 %v2348
        %3279 = vmatpush.bf16.msra.mxu0 %v2336
        %3280 = vmatpush.bf16.msra.mxu0 %v2324
        %3281 = vmatpush.bf16.msra.mxu0 %v2312
        %3282 = vmatmul.bf16.gmra.mxu0 %v479
        %v3283 = vpop.f32.mrf.mxu0
        %v3284 = vadd.f32 %v3270, %v3283
        %v3285 = vpop.f32.mrf.mxu0
        %v3286 = vadd.f32 %v3272, %v3285
        %3287 = vdwg.mxu0
        %3288 = vmatpush.bf16.msra.mxu0 %v2109
        %3289 = vmatpush.bf16.msra.mxu0 %v2097
        %3290 = vmatpush.bf16.msra.mxu0 %v2085
        %3291 = vmatpush.bf16.msra.mxu0 %v2073
        %3292 = vmatpush.bf16.msra.mxu0 %v2061
        %3293 = vmatpush.bf16.msra.mxu0 %v2049
        %3294 = vmatpush.bf16.msra.mxu0 %v2037
        %3295 = vmatpush.bf16.msra.mxu0 %v2025
        %3296 = vmatmul.bf16.gmra.mxu0 %v476
        %v3297 = vpop.f32.mrf.mxu0
        %v3298 = vadd.f32 0.0, %v3297
        %v3299 = vpop.f32.mrf.mxu0
        %v3300 = vadd.f32 0.0, %v3299
        %3301 = vdwg.mxu0
        %3302 = vmatpush.bf16.msra.mxu0 %v2205
        %3303 = vmatpush.bf16.msra.mxu0 %v2193
        %3304 = vmatpush.bf16.msra.mxu0 %v2181
        %3305 = vmatpush.bf16.msra.mxu0 %v2169
        %3306 = vmatpush.bf16.msra.mxu0 %v2157
        %3307 = vmatpush.bf16.msra.mxu0 %v2145
        %3308 = vmatpush.bf16.msra.mxu0 %v2133
        %3309 = vmatpush.bf16.msra.mxu0 %v2121
        %3310 = vmatmul.bf16.gmra.mxu0 %v477
        %v3311 = vpop.f32.mrf.mxu0
        %v3312 = vadd.f32 %v3298, %v3311
        %v3313 = vpop.f32.mrf.mxu0
        %v3314 = vadd.f32 %v3300, %v3313
        %3315 = vdwg.mxu0
        %3316 = vmatpush.bf16.msra.mxu0 %v2301
        %3317 = vmatpush.bf16.msra.mxu0 %v2289
        %3318 = vmatpush.bf16.msra.mxu0 %v2277
        %3319 = vmatpush.bf16.msra.mxu0 %v2265
        %3320 = vmatpush.bf16.msra.mxu0 %v2253
        %3321 = vmatpush.bf16.msra.mxu0 %v2241
        %3322 = vmatpush.bf16.msra.mxu0 %v2229
        %3323 = vmatpush.bf16.msra.mxu0 %v2217
        %3324 = vmatmul.bf16.gmra.mxu0 %v478
        %v3325 = vpop.f32.mrf.mxu0
        %v3326 = vadd.f32 %v3312, %v3325
        %v3327 = vpop.f32.mrf.mxu0
        %v3328 = vadd.f32 %v3314, %v3327
        %3329 = vdwg.mxu0
        %3330 = vmatpush.bf16.msra.mxu0 %v2397
        %3331 = vmatpush.bf16.msra.mxu0 %v2385
        %3332 = vmatpush.bf16.msra.mxu0 %v2373
        %3333 = vmatpush.bf16.msra.mxu0 %v2361
        %3334 = vmatpush.bf16.msra.mxu0 %v2349
        %3335 = vmatpush.bf16.msra.mxu0 %v2337
        %3336 = vmatpush.bf16.msra.mxu0 %v2325
        %3337 = vmatpush.bf16.msra.mxu0 %v2313
        %3338 = vmatmul.bf16.gmra.mxu0 %v479
        %v3339 = vpop.f32.mrf.mxu0
        %v3340 = vadd.f32 %v3326, %v3339
        %v3341 = vpop.f32.mrf.mxu0
        %v3342 = vadd.f32 %v3328, %v3341
        %3343 = vdwg.mxu0
        %3344 = vmatpush.bf16.msra.mxu0 %v2110
        %3345 = vmatpush.bf16.msra.mxu0 %v2098
        %3346 = vmatpush.bf16.msra.mxu0 %v2086
        %3347 = vmatpush.bf16.msra.mxu0 %v2074
        %3348 = vmatpush.bf16.msra.mxu0 %v2062
        %3349 = vmatpush.bf16.msra.mxu0 %v2050
        %3350 = vmatpush.bf16.msra.mxu0 %v2038
        %3351 = vmatpush.bf16.msra.mxu0 %v2026
        %3352 = vmatmul.bf16.gmra.mxu0 %v476
        %v3353 = vpop.f32.mrf.mxu0
        %v3354 = vadd.f32 0.0, %v3353
        %v3355 = vpop.f32.mrf.mxu0
        %v3356 = vadd.f32 0.0, %v3355
        %3357 = vdwg.mxu0
        %3358 = vmatpush.bf16.msra.mxu0 %v2206
        %3359 = vmatpush.bf16.msra.mxu0 %v2194
        %3360 = vmatpush.bf16.msra.mxu0 %v2182
        %3361 = vmatpush.bf16.msra.mxu0 %v2170
        %3362 = vmatpush.bf16.msra.mxu0 %v2158
        %3363 = vmatpush.bf16.msra.mxu0 %v2146
        %3364 = vmatpush.bf16.msra.mxu0 %v2134
        %3365 = vmatpush.bf16.msra.mxu0 %v2122
        %3366 = vmatmul.bf16.gmra.mxu0 %v477
        %v3367 = vpop.f32.mrf.mxu0
        %v3368 = vadd.f32 %v3354, %v3367
        %v3369 = vpop.f32.mrf.mxu0
        %v3370 = vadd.f32 %v3356, %v3369
        %3371 = vdwg.mxu0
        %3372 = vmatpush.bf16.msra.mxu0 %v2302
        %3373 = vmatpush.bf16.msra.mxu0 %v2290
        %3374 = vmatpush.bf16.msra.mxu0 %v2278
        %3375 = vmatpush.bf16.msra.mxu0 %v2266
        %3376 = vmatpush.bf16.msra.mxu0 %v2254
        %3377 = vmatpush.bf16.msra.mxu0 %v2242
        %3378 = vmatpush.bf16.msra.mxu0 %v2230
        %3379 = vmatpush.bf16.msra.mxu0 %v2218
        %3380 = vmatmul.bf16.gmra.mxu0 %v478
        %v3381 = vpop.f32.mrf.mxu0
        %v3382 = vadd.f32 %v3368, %v3381
        %v3383 = vpop.f32.mrf.mxu0
        %v3384 = vadd.f32 %v3370, %v3383
        %3385 = vdwg.mxu0
        %3386 = vmatpush.bf16.msra.mxu0 %v2398
        %3387 = vmatpush.bf16.msra.mxu0 %v2386
        %3388 = vmatpush.bf16.msra.mxu0 %v2374
        %3389 = vmatpush.bf16.msra.mxu0 %v2362
        %3390 = vmatpush.bf16.msra.mxu0 %v2350
        %3391 = vmatpush.bf16.msra.mxu0 %v2338
        %3392 = vmatpush.bf16.msra.mxu0 %v2326
        %3393 = vmatpush.bf16.msra.mxu0 %v2314
        %3394 = vmatmul.bf16.gmra.mxu0 %v479
        %v3395 = vpop.f32.mrf.mxu0
        %v3396 = vadd.f32 %v3382, %v3395
        %v3397 = vpop.f32.mrf.mxu0
        %v3398 = vadd.f32 %v3384, %v3397
        %3399 = vdwg.mxu0
        %3400 = vmatpush.bf16.msra.mxu0 %v2111
        %3401 = vmatpush.bf16.msra.mxu0 %v2099
        %3402 = vmatpush.bf16.msra.mxu0 %v2087
        %3403 = vmatpush.bf16.msra.mxu0 %v2075
        %3404 = vmatpush.bf16.msra.mxu0 %v2063
        %3405 = vmatpush.bf16.msra.mxu0 %v2051
        %3406 = vmatpush.bf16.msra.mxu0 %v2039
        %3407 = vmatpush.bf16.msra.mxu0 %v2027
        %3408 = vmatmul.bf16.gmra.mxu0 %v476
        %v3409 = vpop.f32.mrf.mxu0
        %v3410 = vadd.f32 0.0, %v3409
        %v3411 = vpop.f32.mrf.mxu0
        %v3412 = vadd.f32 0.0, %v3411
        %3413 = vdwg.mxu0
        %3414 = vmatpush.bf16.msra.mxu0 %v2207
        %3415 = vmatpush.bf16.msra.mxu0 %v2195
        %3416 = vmatpush.bf16.msra.mxu0 %v2183
        %3417 = vmatpush.bf16.msra.mxu0 %v2171
        %3418 = vmatpush.bf16.msra.mxu0 %v2159
        %3419 = vmatpush.bf16.msra.mxu0 %v2147
        %3420 = vmatpush.bf16.msra.mxu0 %v2135
        %3421 = vmatpush.bf16.msra.mxu0 %v2123
        %3422 = vmatmul.bf16.gmra.mxu0 %v477
        %v3423 = vpop.f32.mrf.mxu0
        %v3424 = vadd.f32 %v3410, %v3423
        %v3425 = vpop.f32.mrf.mxu0
        %v3426 = vadd.f32 %v3412, %v3425
        %3427 = vdwg.mxu0
        %3428 = vmatpush.bf16.msra.mxu0 %v2303
        %3429 = vmatpush.bf16.msra.mxu0 %v2291
        %3430 = vmatpush.bf16.msra.mxu0 %v2279
        %3431 = vmatpush.bf16.msra.mxu0 %v2267
        %3432 = vmatpush.bf16.msra.mxu0 %v2255
        %3433 = vmatpush.bf16.msra.mxu0 %v2243
        %3434 = vmatpush.bf16.msra.mxu0 %v2231
        %3435 = vmatpush.bf16.msra.mxu0 %v2219
        %3436 = vmatmul.bf16.gmra.mxu0 %v478
        %v3437 = vpop.f32.mrf.mxu0
        %v3438 = vadd.f32 %v3424, %v3437
        %v3439 = vpop.f32.mrf.mxu0
        %v3440 = vadd.f32 %v3426, %v3439
        %3441 = vdwg.mxu0
        %3442 = vmatpush.bf16.msra.mxu0 %v2399
        %3443 = vmatpush.bf16.msra.mxu0 %v2387
        %3444 = vmatpush.bf16.msra.mxu0 %v2375
        %3445 = vmatpush.bf16.msra.mxu0 %v2363
        %3446 = vmatpush.bf16.msra.mxu0 %v2351
        %3447 = vmatpush.bf16.msra.mxu0 %v2339
        %3448 = vmatpush.bf16.msra.mxu0 %v2327
        %3449 = vmatpush.bf16.msra.mxu0 %v2315
        %3450 = vmatmul.bf16.gmra.mxu0 %v479
        %v3451 = vpop.f32.mrf.mxu0
        %v3452 = vadd.f32 %v3438, %v3451
        %v3453 = vpop.f32.mrf.mxu0
        %v3454 = vadd.f32 %v3440, %v3453
        %3455 = vdwg.mxu0
        %v3456 = vld [vmem:[#allocation7] sm:$0xf]
        %v3457 = vadd.f32 %v2836, %v2892
        %v3458 = vadd.f32 %v3457, %v2948
        %v3459 = vadd.f32 %v3458, %v3004
        %3460 = vadd.xlane.f32.xlu0 %v3459
        %v3461 = vpop.xlane.xlu0 %3460
        %v3462 = vadd.f32 %v2838, %v2894
        %v3463 = vadd.f32 %v3462, %v2950
        %v3464 = vadd.f32 %v3463, %v3006
        %3465 = vadd.xlane.f32.xlu0 %v3464
        %v3466 = vpop.xlane.xlu0 %3465
        %v3467 = vrcp.pop 512.0
        %v3468 = vmul.f32 512.0, %v3467
        %v3469 = vsub.f32 1.0, %v3468
        %v3470 = vmul.f32 %v3467, %v3469
        %v3471 = vadd.f32 %v3467, %v3470
        %vm3472 = vweird.f32 %v3467
        %v3473 = vsel %vm3472, %v3467, %v3471
        %v3474 = vmul.f32 %v3461, %v3473
        %v3475 = vmul.f32 %v3466, %v3473
        %v3476 = vmul.f32 %v2836, %v2836
        %v3477 = vmul.f32 %v2892, %v2892
        %v3478 = vmul.f32 %v2948, %v2948
        %v3479 = vmul.f32 %v3004, %v3004
        %v3480 = vmul.f32 %v2838, %v2838
        %v3481 = vmul.f32 %v2894, %v2894
        %v3482 = vmul.f32 %v2950, %v2950
        %v3483 = vmul.f32 %v3006, %v3006
        %v3484 = vadd.f32 %v3476, %v3477
        %v3485 = vadd.f32 %v3484, %v3478
        %v3486 = vadd.f32 %v3485, %v3479
        %3487 = vadd.xlane.f32.xlu0 %v3486
        %v3488 = vpop.xlane.xlu0 %3487
        %v3489 = vadd.f32 %v3480, %v3481
        %v3490 = vadd.f32 %v3489, %v3482
        %v3491 = vadd.f32 %v3490, %v3483
        %3492 = vadd.xlane.f32.xlu0 %v3491
        %v3493 = vpop.xlane.xlu0 %3492
        %v3494 = vmul.f32 %v3488, %v3473
        %v3495 = vmul.f32 %v3493, %v3473
        %v3496 = vmul.f32 %v3474, %v3474
        %v3497 = vmul.f32 %v3475, %v3475
        %v3498 = vsub.f32 %v3494, %v3496
        %v3499 = vsub.f32 %v3495, %v3497
        %v3500 = vsub.f32 %v2836, %v3474
        %v3501 = vsub.f32 %v2892, %v3474
        %v3502 = vsub.f32 %v2948, %v3474
        %v3503 = vsub.f32 %v3004, %v3474
        %v3504 = vsub.f32 %v2838, %v3475
        %v3505 = vsub.f32 %v2894, %v3475
        %v3506 = vsub.f32 %v2950, %v3475
        %v3507 = vsub.f32 %v3006, %v3475
        %v3508 = vadd.f32 %v3498, 1e-05
        %v3509 = vadd.f32 %v3499, 1e-05
        %v3510 = vrsqrt.pop %v3508
        %v3511 = vmul.f32 %v3510, %v3508
        %v3512 = vmul.f32 %v3511, %v3510
        %v3513 = vmul.f32 0.5, %v3512
        %v3514 = vsub.f32 1.5, %v3513
        %v3515 = vmul.f32 %v3510, %v3514
        %vm3516 = vweird.f32 %v3508
        %vm3517 = vweird.f32 %v3510
        %vm3518 = vmor %vm3516, %vm3517
        %v3519 = vsel %vm3518, %v3510, %v3515
        %v3520 = vrsqrt.pop %v3509
        %v3521 = vmul.f32 %v3520, %v3509
        %v3522 = vmul.f32 %v3521, %v3520
        %v3523 = vmul.f32 0.5, %v3522
        %v3524 = vsub.f32 1.5, %v3523
        %v3525 = vmul.f32 %v3520, %v3524
        %vm3526 = vweird.f32 %v3509
        %vm3527 = vweird.f32 %v3520
        %vm3528 = vmor %vm3526, %vm3527
        %v3529 = vsel %vm3528, %v3520, %v3525
        %v3530 = vmul.f32 %v3500, %v3519
        %v3531 = vmul.f32 %v3501, %v3519
        %v3532 = vmul.f32 %v3502, %v3519
        %v3533 = vmul.f32 %v3503, %v3519
        %v3534 = vmul.f32 %v3504, %v3529
        %v3535 = vmul.f32 %v3505, %v3529
        %v3536 = vmul.f32 %v3506, %v3529
        %v3537 = vmul.f32 %v3507, %v3529
        %v3539 = vperm.slane %v3456, 0
        %v3540 = vperm.slane %v3456, 1
        %v3541 = vperm.slane %v3456, 2
        %v3542 = vperm.slane %v3456, 3
        %v3547 = vmul.f32 %v3530, %v3539
        %v3548 = vmul.f32 %v3531, %v3540
        %v3549 = vmul.f32 %v3532, %v3541
        %v3550 = vmul.f32 %v3533, %v3542
        %v3551 = vmul.f32 %v3534, %v3539
        %v3552 = vmul.f32 %v3535, %v3540
        %v3553 = vmul.f32 %v3536, %v3541
        %v3554 = vmul.f32 %v3537, %v3542
        %v3555 = vld [vmem:[#allocation8] sm:$0xf]
        %v3556 = vadd.f32 %v3060, %v3116
        %v3557 = vadd.f32 %v3556, %v3172
        %v3558 = vadd.f32 %v3557, %v3228
        %3559 = vadd.xlane.f32.xlu0 %v3558
        %v3560 = vpop.xlane.xlu0 %3559
        %v3561 = vadd.f32 %v3062, %v3118
        %v3562 = vadd.f32 %v3561, %v3174
        %v3563 = vadd.f32 %v3562, %v3230
        %3564 = vadd.xlane.f32.xlu0 %v3563
        %v3565 = vpop.xlane.xlu0 %3564
        %v3566 = vmul.f32 %v3560, %v3473
        %v3567 = vmul.f32 %v3565, %v3473
        %v3568 = vmul.f32 %v3060, %v3060
        %v3569 = vmul.f32 %v3116, %v3116
        %v3570 = vmul.f32 %v3172, %v3172
        %v3571 = vmul.f32 %v3228, %v3228
        %v3572 = vmul.f32 %v3062, %v3062
        %v3573 = vmul.f32 %v3118, %v3118
        %v3574 = vmul.f32 %v3174, %v3174
        %v3575 = vmul.f32 %v3230, %v3230
        %v3576 = vadd.f32 %v3568, %v3569
        %v3577 = vadd.f32 %v3576, %v3570
        %v3578 = vadd.f32 %v3577, %v3571
        %3579 = vadd.xlane.f32.xlu0 %v3578
        %v3580 = vpop.xlane.xlu0 %3579
        %v3581 = vadd.f32 %v3572, %v3573
        %v3582 = vadd.f32 %v3581, %v3574
        %v3583 = vadd.f32 %v3582, %v3575
        %3584 = vadd.xlane.f32.xlu0 %v3583
        %v3585 = vpop.xlane.xlu0 %3584
        %v3586 = vmul.f32 %v3580, %v3473
        %v3587 = vmul.f32 %v3585, %v3473
        %v3588 = vmul.f32 %v3566, %v3566
        %v3589 = vmul.f32 %v3567, %v3567
        %v3590 = vsub.f32 %v3586, %v3588
        %v3591 = vsub.f32 %v3587, %v3589
        %v3592 = vsub.f32 %v3060, %v3566
        %v3593 = vsub.f32 %v3116, %v3566
        %v3594 = vsub.f32 %v3172, %v3566
        %v3595 = vsub.f32 %v3228, %v3566
        %v3596 = vsub.f32 %v3062, %v3567
        %v3597 = vsub.f32 %v3118, %v3567
        %v3598 = vsub.f32 %v3174, %v3567
        %v3599 = vsub.f32 %v3230, %v3567
        %v3600 = vadd.f32 %v3590, 1e-05
        %v3601 = vadd.f32 %v3591, 1e-05
        %v3602 = vrsqrt.pop %v3600
        %v3603 = vmul.f32 %v3602, %v3600
        %v3604 = vmul.f32 %v3603, %v3602
        %v3605 = vmul.f32 0.5, %v3604
        %v3606 = vsub.f32 1.5, %v3605
        %v3607 = vmul.f32 %v3602, %v3606
        %vm3608 = vweird.f32 %v3600
        %vm3609 = vweird.f32 %v3602
        %vm3610 = vmor %vm3608, %vm3609
        %v3611 = vsel %vm3610, %v3602, %v3607
        %v3612 = vrsqrt.pop %v3601
        %v3613 = vmul.f32 %v3612, %v3601
        %v3614 = vmul.f32 %v3613, %v3612
        %v3615 = vmul.f32 0.5, %v3614
        %v3616 = vsub.f32 1.5, %v3615
        %v3617 = vmul.f32 %v3612, %v3616
        %vm3618 = vweird.f32 %v3601
        %vm3619 = vweird.f32 %v3612
        %vm3620 = vmor %vm3618, %vm3619
        %v3621 = vsel %vm3620, %v3612, %v3617
        %v3622 = vmul.f32 %v3592, %v3611
        %v3623 = vmul.f32 %v3593, %v3611
        %v3624 = vmul.f32 %v3594, %v3611
        %v3625 = vmul.f32 %v3595, %v3611
        %v3626 = vmul.f32 %v3596, %v3621
        %v3627 = vmul.f32 %v3597, %v3621
        %v3628 = vmul.f32 %v3598, %v3621
        %v3629 = vmul.f32 %v3599, %v3621
        %v3631 = vperm.slane %v3555, 0
        %v3632 = vperm.slane %v3555, 1
        %v3633 = vperm.slane %v3555, 2
        %v3634 = vperm.slane %v3555, 3
        %v3639 = vmul.f32 %v3622, %v3631
        %v3640 = vmul.f32 %v3623, %v3632
        %v3641 = vmul.f32 %v3624, %v3633
        %v3642 = vmul.f32 %v3625, %v3634
        %v3643 = vmul.f32 %v3626, %v3631
        %v3644 = vmul.f32 %v3627, %v3632
        %v3645 = vmul.f32 %v3628, %v3633
        %v3646 = vmul.f32 %v3629, %v3634
        %v3647 = vld [vmem:[#allocation10] sm:$0xff]
        %v3648 = vld [vmem:[#allocation10 + $0x8] sm:$0xff]
        %v3649 = vld [vmem:[#allocation11] sm:$0xff]
        %v3650 = vld [vmem:[#allocation11 + $0x8] sm:$0xff]
        %3653 = vrot.lane.b32.xlu0 %v3547, 64
        %v3654 = vpop.permute.xlu0 %3653
        %3655 = vrot.lane.b32.xlu0 %v3551, 64
        %v3656 = vpop.permute.xlu0 %3655
        %v3659 = vmul.f32 %v3547, %v3647
        %v3660 = vmul.f32 %v3551, %v3648
        %v3661 = vmul.f32 %v3654, %v3649
        %v3662 = vmul.f32 %v3656, %v3650
        %v3663 = vadd.f32 %v3659, %v3661
        %v3664 = vadd.f32 %v3660, %v3662
        %v3665 = vpack.c.bf16 %v3663, %v3663
        %v3666 = vpack.c.bf16 %v3664, %v3664
        %3667 = vst [vmem:[%s447] sm:$0xf] %v3665
        %3668 = vst [vmem:[%s447 + $0x4] sm:$0xf] %v3666
        %3671 = vrot.lane.b32.xlu0 %v3639, 64
        %v3672 = vpop.permute.xlu0 %3671
        %3673 = vrot.lane.b32.xlu0 %v3643, 64
        %v3674 = vpop.permute.xlu0 %3673
        %v3677 = vmul.f32 %v3639, %v3647
        %v3678 = vmul.f32 %v3643, %v3648
        %v3679 = vmul.f32 %v3672, %v3649
        %v3680 = vmul.f32 %v3674, %v3650
        %v3681 = vadd.f32 %v3677, %v3679
        %v3682 = vadd.f32 %v3678, %v3680
        %v3683 = vpack.c.bf16 %v3681, %v3681
        %v3684 = vpack.c.bf16 %v3682, %v3682
        %3685 = vst [vmem:[%s454] sm:$0xf] %v3683
        %3686 = vst [vmem:[%s454 + $0x4] sm:$0xf] %v3684
        %v3687 = vpack.c.bf16 %v3284, %v3284
        %v3688 = vpack.c.bf16 %v3286, %v3286
        %3689 = vst [vmem:[%s461] sm:$0xf] %v3687
        %3690 = vst [vmem:[%s461 + $0x4] sm:$0xf] %v3688
        %3693 = vrot.lane.b32.xlu0 %v3548, 64
        %v3694 = vpop.permute.xlu0 %3693
        %3695 = vrot.lane.b32.xlu0 %v3552, 64
        %v3696 = vpop.permute.xlu0 %3695
        %v3699 = vmul.f32 %v3548, %v3647
        %v3700 = vmul.f32 %v3552, %v3648
        %v3701 = vmul.f32 %v3694, %v3649
        %v3702 = vmul.f32 %v3696, %v3650
        %v3703 = vadd.f32 %v3699, %v3701
        %v3704 = vadd.f32 %v3700, %v3702
        %v3705 = vpack.c.bf16 %v3703, %v3703
        %v3706 = vpack.c.bf16 %v3704, %v3704
        %s3707 = scalar_lea.vmem %s447, 8 [#allocation13]
        %3708 = vst [vmem:[%s3707] sm:$0xf] %v3705
        %3709 = vst [vmem:[%s3707 + $0x4] sm:$0xf] %v3706
        %3712 = vrot.lane.b32.xlu0 %v3640, 64
        %v3713 = vpop.permute.xlu0 %3712
        %3714 = vrot.lane.b32.xlu0 %v3644, 64
        %v3715 = vpop.permute.xlu0 %3714
        %v3718 = vmul.f32 %v3640, %v3647
        %v3719 = vmul.f32 %v3644, %v3648
        %v3720 = vmul.f32 %v3713, %v3649
        %v3721 = vmul.f32 %v3715, %v3650
        %v3722 = vadd.f32 %v3718, %v3720
        %v3723 = vadd.f32 %v3719, %v3721
        %v3724 = vpack.c.bf16 %v3722, %v3722
        %v3725 = vpack.c.bf16 %v3723, %v3723
        %s3726 = scalar_lea.vmem %s454, 8 [#allocation14]
        %3727 = vst [vmem:[%s3726] sm:$0xf] %v3724
        %3728 = vst [vmem:[%s3726 + $0x4] sm:$0xf] %v3725
        %v3729 = vpack.c.bf16 %v3340, %v3340
        %v3730 = vpack.c.bf16 %v3342, %v3342
        %s3731 = scalar_lea.vmem %s461, 8 [#allocation16]
        %3732 = vst [vmem:[%s3731] sm:$0xf] %v3729
        %3733 = vst [vmem:[%s3731 + $0x4] sm:$0xf] %v3730
        %3736 = vrot.lane.b32.xlu0 %v3549, 64
        %v3737 = vpop.permute.xlu0 %3736
        %3738 = vrot.lane.b32.xlu0 %v3553, 64
        %v3739 = vpop.permute.xlu0 %3738
        %v3742 = vmul.f32 %v3549, %v3647
        %v3743 = vmul.f32 %v3553, %v3648
        %v3744 = vmul.f32 %v3737, %v3649
        %v3745 = vmul.f32 %v3739, %v3650
        %v3746 = vadd.f32 %v3742, %v3744
        %v3747 = vadd.f32 %v3743, %v3745
        %v3748 = vpack.c.bf16 %v3746, %v3746
        %v3749 = vpack.c.bf16 %v3747, %v3747
        %s3750 = scalar_lea.vmem %s447, 16 [#allocation13]
        %3751 = vst [vmem:[%s3750] sm:$0xf] %v3748
        %3752 = vst [vmem:[%s3750 + $0x4] sm:$0xf] %v3749
        %3755 = vrot.lane.b32.xlu0 %v3641, 64
        %v3756 = vpop.permute.xlu0 %3755
        %3757 = vrot.lane.b32.xlu0 %v3645, 64
        %v3758 = vpop.permute.xlu0 %3757
        %v3761 = vmul.f32 %v3641, %v3647
        %v3762 = vmul.f32 %v3645, %v3648
        %v3763 = vmul.f32 %v3756, %v3649
        %v3764 = vmul.f32 %v3758, %v3650
        %v3765 = vadd.f32 %v3761, %v3763
        %v3766 = vadd.f32 %v3762, %v3764
        %v3767 = vpack.c.bf16 %v3765, %v3765
        %v3768 = vpack.c.bf16 %v3766, %v3766
        %s3769 = scalar_lea.vmem %s454, 16 [#allocation14]
        %3770 = vst [vmem:[%s3769] sm:$0xf] %v3767
        %3771 = vst [vmem:[%s3769 + $0x4] sm:$0xf] %v3768
        %v3772 = vpack.c.bf16 %v3396, %v3396
        %v3773 = vpack.c.bf16 %v3398, %v3398
        %s3774 = scalar_lea.vmem %s461, 16 [#allocation16]
        %3775 = vst [vmem:[%s3774] sm:$0xf] %v3772
        %3776 = vst [vmem:[%s3774 + $0x4] sm:$0xf] %v3773
        %3779 = vrot.lane.b32.xlu0 %v3550, 64
        %v3780 = vpop.permute.xlu0 %3779
        %3781 = vrot.lane.b32.xlu0 %v3554, 64
        %v3782 = vpop.permute.xlu0 %3781
        %v3785 = vmul.f32 %v3550, %v3647
        %v3786 = vmul.f32 %v3554, %v3648
        %v3787 = vmul.f32 %v3780, %v3649
        %v3788 = vmul.f32 %v3782, %v3650
        %v3789 = vadd.f32 %v3785, %v3787
        %v3790 = vadd.f32 %v3786, %v3788
        %v3791 = vpack.c.bf16 %v3789, %v3789
        %v3792 = vpack.c.bf16 %v3790, %v3790
        %s3793 = scalar_lea.vmem %s447, 24 [#allocation13]
        %3794 = vst [vmem:[%s3793] sm:$0xf] %v3791
        %3795 = vst [vmem:[%s3793 + $0x4] sm:$0xf] %v3792
        %3798 = vrot.lane.b32.xlu0 %v3642, 64
        %v3799 = vpop.permute.xlu0 %3798
        %3800 = vrot.lane.b32.xlu0 %v3646, 64
        %v3801 = vpop.permute.xlu0 %3800
        %v3804 = vmul.f32 %v3642, %v3647
        %v3805 = vmul.f32 %v3646, %v3648
        %v3806 = vmul.f32 %v3799, %v3649
        %v3807 = vmul.f32 %v3801, %v3650
        %v3808 = vadd.f32 %v3804, %v3806
        %v3809 = vadd.f32 %v3805, %v3807
        %v3810 = vpack.c.bf16 %v3808, %v3808
        %v3811 = vpack.c.bf16 %v3809, %v3809
        %s3812 = scalar_lea.vmem %s454, 24 [#allocation14]
        %3813 = vst [vmem:[%s3812] sm:$0xf] %v3810
        %3814 = vst [vmem:[%s3812 + $0x4] sm:$0xf] %v3811
        %v3815 = vpack.c.bf16 %v3452, %v3452
        %v3816 = vpack.c.bf16 %v3454, %v3454
        %s3817 = scalar_lea.vmem %s461, 24 [#allocation16]
        %3818 = vst [vmem:[%s3817] sm:$0xf] %v3815
        %3819 = vst [vmem:[%s3817 + $0x4] sm:$0xf] %v3816
        %s3820 = sand.u32 %s197, 1
        %s3821 = scalar_lea.sflag [#allocation4], %s3820
        %s3822 = sand.u32 %s197, 1
        %s3823 = smul.addr %s3822, 32
        %s3824 = scalar_lea.vmem [#allocation13], %s3823
        %s3825 = sand.u32 %s32, 1
        %s3826 = scalar_lea.sflag [#allocation15], %s3825
        %s3827 = sand.u32 %s225, 1
        %s3828 = smul.addr %s3827, 32
        %s3829 = scalar_lea.vmem [#allocation14], %s3828
        %s3830 = sand.u32 %s32, 1
        %s3831 = scalar_lea.sflag [#allocation15], %s3830
        %s3832 = sand.u32 %s253, 1
        %s3833 = smul.addr %s3832, 32
        %s3834 = scalar_lea.vmem [#allocation16], %s3833
        // Predicated region
        $region69: #{tpu_custom_call.1} parent=43 // pred_check
          %p3835 = pneg %p207
        $region70: #{tpu_custom_call.1} parent=43 // pred_check_branch
          %3837 = sbr.rel (%p3835) target = $region72
        $region71: #{tpu_custom_call.1} parent=43 // pred_region
          %s3838 = smul.u32 2, %s37
          %3840 = vsyncadd %s3821, 0
          %s3841 = smul.addr %s36, 8
          %s3842 = sadd.s32 %s3838, %s3841
          %s3843 = smul.addr %s3842, 4
          %s3844 = scalar_lea.hbm %s6, %s3843
          %s3845 = sshll.u32 %s3824, 4
          %s3846 = int_to_ptr.vmem [resolvable:$true] %s3845
          %s3847 = sshll.u32 %s3844, 4
          %s3848 = int_to_ptr.hbm [resolvable:$true] %s3847
          %3853 = dma.vmem_to_hbm [thread:$0]  %s3846, 512, %s3848, %s3821, 64, 64, 4
        $region72: #{tpu_custom_call.1} parent=43 // pred_fallthru
          _
        // Predicated region
        $region73: #{tpu_custom_call.1} parent=43 // pred_check
          %p3854 = pneg %p235
        $region74: #{tpu_custom_call.1} parent=43 // pred_check_branch
          %3856 = sbr.rel (%p3854) target = $region76
        $region75: #{tpu_custom_call.1} parent=43 // pred_region
          %s3857 = smul.u32 2, %s37
          %3859 = vsyncadd %s3826, 0
          %s3860 = smul.addr %s36, 8
          %s3861 = sadd.s32 %s3857, %s3860
          %s3862 = smul.addr %s3861, 4
          %s3863 = scalar_lea.hbm %s7, %s3862
          %s3864 = sshll.u32 %s3829, 4
          %s3865 = int_to_ptr.vmem [resolvable:$true] %s3864
          %s3866 = sshll.u32 %s3863, 4
          %s3867 = int_to_ptr.hbm [resolvable:$true] %s3866
          %3872 = dma.vmem_to_hbm [thread:$0]  %s3865, 512, %s3867, %s3826, 64, 64, 4
        $region76: #{tpu_custom_call.1} parent=43 // pred_fallthru
          _
        // Predicated region
        $region77: #{tpu_custom_call.1} parent=43 // pred_check
          %p3873 = pneg %p263
        $region78: #{tpu_custom_call.1} parent=43 // pred_check_branch
          %3875 = sbr.rel (%p3873) target = $region80
        $region79: #{tpu_custom_call.1} parent=43 // pred_region
          %s3876 = smul.u32 2, %s37
          %3878 = vsyncadd %s3831, 0
          %s3879 = smul.addr %s36, 8
          %s3880 = sadd.s32 %s3876, %s3879
          %s3881 = smul.addr %s3880, 4
          %s3882 = scalar_lea.hbm %s8, %s3881
          %s3883 = sshll.u32 %s3834, 4
          %s3884 = int_to_ptr.vmem [resolvable:$true] %s3883
          %s3885 = sshll.u32 %s3882, 4
          %s3886 = int_to_ptr.hbm [resolvable:$true] %s3885
          %3891 = dma.vmem_to_hbm [thread:$0]  %s3884, 512, %s3886, %s3831, 64, 64, 4
        $region80: #{tpu_custom_call.1} parent=43 // pred_fallthru
          _
      $region44: #{tpu_custom_call.1} parent=5 // pred_fallthru
        _
      %p3892 = scmp.le.s32.totalorder 2, %s27
      // Predicated region
      $region81: #{tpu_custom_call.1} parent=5 // pred_check
        %p3893 = pneg %p3892
      $region82: #{tpu_custom_call.1} parent=5 // pred_check_branch
        %3895 = sbr.rel (%p3893) target = $region84
      $region83: #{tpu_custom_call.1} parent=5 // pred_region
        %s3896 = ssub.s32 %s27, 2
        // Predicated region
        $region85: #{tpu_custom_call.1} parent=83 // pred_check
          %p3897 = pneg %p213
        $region86: #{tpu_custom_call.1} parent=83 // pred_check_branch
          %3899 = sbr.rel (%p3897) target = $region88
        $region87: #{tpu_custom_call.1} parent=83 // pred_region
          %s3900 = sand.u32 %s198, 1
          %s3901 = scalar_lea.sflag [#allocation4], %s3900
          %s3902 = sand.u32 %s198, 1
          %s3903 = smul.addr %s3902, 32
          %s3904 = scalar_lea.vmem [#allocation13], %s3903
          %3906 = dma.done %s3901, 512
        $region88: #{tpu_custom_call.1} parent=83 // pred_fallthru
          _
        // Predicated region
        $region89: #{tpu_custom_call.1} parent=83 // pred_check
          %p3907 = pneg %p241
        $region90: #{tpu_custom_call.1} parent=83 // pred_check_branch
          %3909 = sbr.rel (%p3907) target = $region92
        $region91: #{tpu_custom_call.1} parent=83 // pred_region
          %s3910 = sand.u32 %s33, 1
          %s3911 = scalar_lea.sflag [#allocation15], %s3910
          %s3912 = sand.u32 %s226, 1
          %s3913 = smul.addr %s3912, 32
          %s3914 = scalar_lea.vmem [#allocation14], %s3913
          %3916 = dma.done %s3911, 512
        $region92: #{tpu_custom_call.1} parent=83 // pred_fallthru
          _
        // Predicated region
        $region93: #{tpu_custom_call.1} parent=83 // pred_check
          %p3917 = pneg %p269
        $region94: #{tpu_custom_call.1} parent=83 // pred_check_branch
          %3919 = sbr.rel (%p3917) target = $region96
        $region95: #{tpu_custom_call.1} parent=83 // pred_region
          %s3920 = sand.u32 %s33, 1
          %s3921 = scalar_lea.sflag [#allocation15], %s3920
          %s3922 = sand.u32 %s254, 1
          %s3923 = smul.addr %s3922, 32
          %s3924 = scalar_lea.vmem [#allocation16], %s3923
          %3926 = dma.done %s3921, 512
        $region96: #{tpu_custom_call.1} parent=83 // pred_fallthru
          _
      $region84: #{tpu_custom_call.1} parent=5 // pred_fallthru
        _
    $region6: #{tpu_custom_call.1} parent=1 // loop_footer
      %s31 = sadd.s32 1, %s27
    $region7: #{tpu_custom_call.1} parent=1 // loop_footer_branch
      %26 = sbr.rel target = $region3
    $region8: #{tpu_custom_call.1} parent=1 // loop_exit
      _
    %3927 = vsyncpa [#allocation3], 1
    %s3928 = scalar_lea.sflag [#allocation3], 1
    %3929 = vsyncpa %s3928, 1
    %3930 = vsyncpa [#allocation6], 1
    %3931 = vsyncpa [#allocation9], 1
    %3932 = vsyncpa [#allocation12], 1
    %3933 = vsyncpa [#allocation4], 1
    %s3934 = scalar_lea.sflag [#allocation4], 1
    %3935 = vsyncpa %s3934, 1
    %3936 = vsyncpa [#allocation15], 1
    %s3937 = scalar_lea.sflag [#allocation15], 1
    %3938 = vsyncpa %s3937, 1

</llo_original>
